<compile_context>
chip_gen: v7x
topology: tpu7x:2x2x1
jax: 0.10.0
libtpu: 0.0.40
codegen_flags: <defaults>
</compile_context>

<pallas_src>
import functools

import jax
import jax.numpy as jnp
from jax.experimental import pallas as pl
from jax.experimental.pallas import tpu as pltpu


# ------------------------------ Fused forward kernel ------------------------------ #
def _make_fused_kernel(*, T, Bp, H, V, num_layers, num_dirs):
    TB = T * Bp
    G4 = 4 * H

    def kernel(*refs):
        # ---- unpack refs: inputs..., output, scratch ----
        ids_ref, emb_ref = refs[0], refs[1]
        idx = 2
        layers = []
        for _l in range(num_layers):
            wih_cat_ref = refs[idx]                                  # (Din, nd*4H) bf16
            b_cat_ref = refs[idx + 1]                                # (1, nd*4H) f32
            whh_refs = [refs[idx + 2 + d] for d in range(num_dirs)]  # (H, 4H) bf16
            idx += 2 + num_dirs
            layers.append((wih_cat_ref, b_cat_ref, whh_refs))
        fcw_ref, fcb_ref = refs[idx], refs[idx + 1]
        out_ref = refs[idx + 2]
        y_scr = refs[idx + 3] if num_layers > 1 else None            # (TB, nd*H) f32

        # ---- embedding lookup as a one-hot matmul (gather-free, MXU-friendly) ----
        # TODO(synk): at realistic vocab sizes replace with a row-gather (Element
        # BlockSpec / scalar-prefetch) instead of keeping the whole table in VMEM.
        ids = ids_ref[...]                                           # (TB, 1) int32
        onehot = jnp.where(
            ids == jax.lax.broadcasted_iota(jnp.int32, (TB, V), 1),
            1.0, 0.0).astype(jnp.bfloat16)                           # (TB, V)
        x = jnp.dot(onehot, emb_ref[...],
                    preferred_element_type=jnp.float32).astype(jnp.bfloat16)  # (TB, E)

        h_final = []
        for layer in range(num_layers):
            wih_cat_ref, b_cat_ref, whh_refs = layers[layer]
            last_layer = (layer + 1 == num_layers)

            # -- hoisted, direction-fused input projection: ONE big matmul per layer --
            gates_in = b_cat_ref[...] + jnp.dot(
                x, wih_cat_ref[...],
                preferred_element_type=jnp.float32)                  # (TB, nd*4H) f32

            # -- serial recurrence, fully unrolled over the (small, static) T --
            h_final = []
            for d in range(num_dirs):
                whh = whh_refs[d][...]                               # (H, 4H) bf16
                g_in = gates_in[:, d * G4:(d + 1) * G4]              # (TB, 4H)
                h = jnp.zeros((Bp, H), jnp.float32)
                c = jnp.zeros((Bp, H), jnp.float32)
                for step in range(T):
                    t = step if d == 0 else T - 1 - step             # reversed index
                    row = t * Bp                                     # sublane-aligned
                    gates = g_in[row:row + Bp, :] + jnp.dot(
                        h.astype(jnp.bfloat16), whh,
                        preferred_element_type=jnp.float32)          # (Bp, 4H)
                    # prepped gate order [i, f, o, g]: one contiguous sigmoid slice
                    # (3H lanes) + one contiguous tanh slice (H lanes)
                    sig = jax.nn.sigmoid(gates[:, :3 * H])
                    g_g = jnp.tanh(gates[:, 3 * H:])
                    i_g = sig[:, 0 * H:1 * H]
                    f_g = sig[:, 1 * H:2 * H]
                    o_g = sig[:, 2 * H:3 * H]
                    c = f_g * c + i_g * g_g
                    h = o_g * jnp.tanh(c)
                    if not last_layer:                 # last layer's stores are dead
                        y_scr[row:row + Bp, d * H:(d + 1) * H] = h
                h_final.append(h)                                    # final hidden
            # TODO(synk): inter-layer LSTM dropout omitted (identity in eval mode).
            if not last_layer:
                x = y_scr[...].astype(jnp.bfloat16)                  # (TB, nd*H)

        # ---- FC head: lane-concat final hiddens, single (Bp, nd*H)@(nd*H, C) matmul ----
        h_cat = jnp.concatenate(h_final, axis=1).astype(jnp.bfloat16)
        out_ref[...] = fcb_ref[...] + jnp.dot(h_cat, fcw_ref[...],
                                              preferred_element_type=jnp.float32)

    return kernel


# --------------------------------- Forward wrapper --------------------------------- #
def seq_classifier_forward(batch_ids, params, *, hidden_size, num_layers, bidirectional):
    """Mirrors SeqClassifier.forward (eval mode). Returns (B, num_class) logits."""
    B, T = batch_ids.shape
    H = hidden_size
    V, _E = params["embeddings"].shape
    C = params["fc_w_t"].shape[1]
    num_dirs = 2 if bidirectional else 1
    Bp = ((B + 7) // 8) * 8                 # pad batch to the f32 sublane count

    # time-major flattened ids: row = t*Bp + b (cheap int32 transpose/pad, XLA glue)
    ids_tm = jnp.transpose(batch_ids).astype(jnp.int32)              # (T, B)
    if Bp != B:
        ids_tm = jnp.pad(ids_tm, ((0, 0), (0, Bp - B)))              # pad rows = token 0
    ids_tm = ids_tm.reshape(T * Bp, 1)

    args = [ids_tm, params["embeddings"]]
    for layer in range(num_layers):
        lp = params["lstm"][layer]
        args += [lp["w_ih_cat"], lp["b_cat"]] + list(lp["w_hh_t"])
    args += [params["fc_w_t"], params["fc_b"]]

    kernel = _make_fused_kernel(T=T, Bp=Bp, H=H, V=V,
                                num_layers=num_layers, num_dirs=num_dirs)

    scratch = ([pltpu.VMEM((T * Bp, num_dirs * H), jnp.float32)]
               if num_layers > 1 else [])

    out = pl.pallas_call(
        kernel,
        out_shape=jax.ShapeDtypeStruct((Bp, C), jnp.float32),
        in_specs=[pl.BlockSpec(memory_space=pltpu.MemorySpace.VMEM)] * len(args),
        out_specs=pl.BlockSpec(memory_space=pltpu.MemorySpace.VMEM),
        scratch_shapes=scratch,
        compiler_params=pltpu.CompilerParams(vmem_limit_bytes=32 * 1024 * 1024),
    )(*args)
    return out[:B]


# ------------------------------------ Param init ------------------------------------ #
def init_params(key, *, vocab, embed_dim, hidden_size, num_layers, bidirectional,
                num_class):
    """PyTorch-layout weights, prepped into the fused-kernel layout: gate rows
    permuted [i,f,g,o] -> [i,f,o,g], W_ih^T / combined biases column-concatenated
    across directions, all matmul operands cast to bf16 (biases stay f32)."""
    H = hidden_size
    num_dirs = 2 if bidirectional else 1
    k = 1.0 / jnp.sqrt(jnp.float32(H))
    keys = jax.random.split(key, 4)

    def perm_gates(w):   # gate-blocked rows (4H, ...): [i, f, g, o] -> [i, f, o, g]
        return jnp.concatenate(
            [w[0:H], w[H:2 * H], w[3 * H:4 * H], w[2 * H:3 * H]], axis=0)

    params = {}
    # pretrained-style embedding table; stored bf16 for MXU-native matmuls
    params["embeddings"] = jax.random.normal(
        keys[0], (vocab, embed_dim), jnp.float32).astype(jnp.bfloat16)

    def make_dir(dkey, din):
        ks = jax.random.split(dkey, 4)
        w_ih = jax.random.uniform(ks[0], (4 * H, din), jnp.float32, -k, k)
        w_hh = jax.random.uniform(ks[1], (4 * H, H), jnp.float32, -k, k)
        b_ih = jax.random.uniform(ks[2], (4 * H,), jnp.float32, -k, k)
        b_hh = jax.random.uniform(ks[3], (4 * H,), jnp.float32, -k, k)
        return {
            "w_ih_t": perm_gates(w_ih).T.astype(jnp.bfloat16),           # (Din, 4H)
            "w_hh_t": perm_gates(w_hh).T.astype(jnp.bfloat16),           # (H, 4H)
            "b": perm_gates((b_ih + b_hh).reshape(4 * H, 1)).reshape(1, 4 * H),
        }

    lstm_keys = jax.random.split(keys[1], num_layers * num_dirs)
    params["lstm"] = []
    for layer in range(num_layers):
        din = embed_dim if layer == 0 else num_dirs * H
        dirs = [make_dir(lstm_keys[layer * num_dirs + d], din) for d in range(num_dirs)]
        params["lstm"].append({
            "w_ih_cat": jnp.concatenate([d_["w_ih_t"] for d_ in dirs], axis=1),
            "b_cat": jnp.concatenate([d_["b"] for d_ in dirs], axis=1),   # (1, nd*4H)
            "w_hh_t": [d_["w_hh_t"] for d_ in dirs],                      # per-dir (H,4H)
        })

    enc_out = num_dirs * H
    kf = 1.0 / jnp.sqrt(jnp.float32(enc_out))
    fc_w = jax.random.uniform(keys[2], (num_class, enc_out), jnp.float32, -kf, kf)
    fc_b = jax.random.uniform(keys[3], (num_class,), jnp.float32, -kf, kf)
    params["fc_w_t"] = fc_w.T.astype(jnp.bfloat16)            # (enc_out, C)
    params["fc_b"] = fc_b.reshape(1, num_class)               # (1, C) f32
    return params


# --------------------------- Pure-JAX reference (same math) ------------------------- #
def reference_forward(batch_ids, params, *, hidden_size, num_layers, bidirectional):
    """Pure-JAX mirror of the kernel math (same prepped bf16 weights, f32 accumulate)."""
    H = hidden_size
    nd = 2 if bidirectional else 1
    B, T = batch_ids.shape
    x = jnp.take(params["embeddings"], batch_ids, axis=0)             # (B, T, E) bf16
    h_fin = []
    for layer in range(num_layers):
        lp = params["lstm"][layer]
        xf = x.reshape(B * T, x.shape[-1])
        gates_in = lp["b_cat"] + jnp.dot(xf, lp["w_ih_cat"],
                                         preferred_element_type=jnp.float32)
        gates_in = gates_in.reshape(B, T, nd * 4 * H)
        outs, h_fin = [], []
        for d in range(nd):
            whh = lp["w_hh_t"][d]
            g = gates_in[:, :, d * 4 * H:(d + 1) * 4 * H]
            h = jnp.zeros((B, H), jnp.float32)
            c = jnp.zeros((B, H), jnp.float32)
            ys = [None] * T
            order = range(T) if d == 0 else range(T - 1, -1, -1)
            for t in order:
                gates = g[:, t, :] + jnp.dot(h.astype(jnp.bfloat16), whh,
                                             preferred_element_type=jnp.float32)
                sig = jax.nn.sigmoid(gates[:, :3 * H])
                g_g = jnp.tanh(gates[:, 3 * H:])
                c = sig[:, H:2 * H] * c + sig[:, :H] * g_g
                h = sig[:, 2 * H:3 * H] * jnp.tanh(c)
                ys[t] = h
            outs.append(jnp.stack(ys, axis=1))
            h_fin.append(h)
        x = jnp.concatenate(outs, axis=-1).astype(jnp.bfloat16)
    h_cat = jnp.concatenate(h_fin, axis=1).astype(jnp.bfloat16)
    return params["fc_b"] + jnp.dot(h_cat, params["fc_w_t"],
                                    preferred_element_type=jnp.float32)


# --------------------------------------- Main --------------------------------------- #
if __name__ == "__main__":
    VOCAB = 32
    EMBED_DIM = 32
    HIDDEN = 32
    NUM_LAYERS = 2
    BIDIRECTIONAL = True
    NUM_CLASS = 8
    BATCH = 2
    SEQ = 8

    key = jax.random.PRNGKey(0)
    pkey, dkey = jax.random.split(key)
    params = init_params(
        pkey, vocab=VOCAB, embed_dim=EMBED_DIM, hidden_size=HIDDEN,
        num_layers=NUM_LAYERS, bidirectional=BIDIRECTIONAL, num_class=NUM_CLASS,
    )
    batch_ids = jax.random.randint(dkey, (BATCH, SEQ), 0, VOCAB, jnp.int32)

    fwd = jax.jit(functools.partial(
        seq_classifier_forward,
        hidden_size=HIDDEN, num_layers=NUM_LAYERS, bidirectional=BIDIRECTIONAL,
    ))
    pred = jax.block_until_ready(fwd(batch_ids, params))
    assert pred.shape == (BATCH, NUM_CLASS), pred.shape
    assert bool(jnp.all(jnp.isfinite(pred)))

    ref = reference_forward(batch_ids, params, hidden_size=HIDDEN,
                            num_layers=NUM_LAYERS, bidirectional=BIDIRECTIONAL)
    assert bool(jnp.allclose(pred, ref, rtol=2e-2, atol=2e-2)), (pred, ref)
    print("KERNEL_OK")
</pallas_src>

<mosaic_0001>
module attributes {stable_mosaic.version = 11 : i64} {
  func.func @kernel(%arg0: memref<64x1xi32, #tpu.memory_space<vmem>>, %arg1: memref<32x32xbf16, #tpu.memory_space<vmem>>, %arg2: memref<32x256xbf16, #tpu.memory_space<vmem>>, %arg3: memref<1x256xf32, #tpu.memory_space<vmem>>, %arg4: memref<32x128xbf16, #tpu.memory_space<vmem>>, %arg5: memref<32x128xbf16, #tpu.memory_space<vmem>>, %arg6: memref<64x256xbf16, #tpu.memory_space<vmem>>, %arg7: memref<1x256xf32, #tpu.memory_space<vmem>>, %arg8: memref<32x128xbf16, #tpu.memory_space<vmem>>, %arg9: memref<32x128xbf16, #tpu.memory_space<vmem>>, %arg10: memref<64x8xbf16, #tpu.memory_space<vmem>>, %arg11: memref<1x8xf32, #tpu.memory_space<vmem>>, %arg12: memref<8x8xf32, #tpu.memory_space<vmem>>, %arg13: memref<64x64xf32, #tpu.memory_space<vmem>>) attributes {dimension_semantics = [], scalar_prefetch = 0 : i64, scratch_operands = 1 : i64, tpu.core_type = #tpu.core_type<tc>} {
    %c0 = arith.constant 0 : index
    %c0_0 = arith.constant 0 : index
    %0 = vector.load %arg0[%c0, %c0_0] : memref<64x1xi32, #tpu.memory_space<vmem>>, vector<64x1xi32>
    %1 = tpu.iota {dimensions = array<i32: 1>} : vector<64x32xi32>
    %2 = vector.broadcast %0 : vector<64x1xi32> to vector<64x32xi32>
    %3 = arith.cmpi eq, %2, %1 : vector<64x32xi32>
    %cst = arith.constant 1.000000e+00 : f32
    %cst_1 = arith.constant 0.000000e+00 : f32
    %4 = vector.broadcast %cst : f32 to vector<64x32xf32>
    %5 = vector.broadcast %cst_1 : f32 to vector<64x32xf32>
    %6 = arith.select %3, %4, %5 : vector<64x32xi1>, vector<64x32xf32>
    %7 = arith.truncf %6 : vector<64x32xf32> to vector<64x32xbf16>
    %c0_2 = arith.constant 0 : index
    %c0_3 = arith.constant 0 : index
    %8 = vector.load %arg1[%c0_2, %c0_3] : memref<32x32xbf16, #tpu.memory_space<vmem>>, vector<32x32xbf16>
    %cst_4 = arith.constant dense<0.000000e+00> : vector<64x32xf32>
    %9 = tpu.matmul %7, %8, %cst_4 {dimension_numbers = #tpu.dot_dimension_numbers<[1], [0], [0], [1], [0, 0, 1, 1], [], []>} : vector<64x32xbf16>, vector<32x32xbf16>, vector<64x32xf32> -> vector<64x32xf32>
    %10 = arith.truncf %9 : vector<64x32xf32> to vector<64x32xbf16>
    %c0_5 = arith.constant 0 : index
    %c0_6 = arith.constant 0 : index
    %11 = vector.load %arg3[%c0_5, %c0_6] : memref<1x256xf32, #tpu.memory_space<vmem>>, vector<1x256xf32>
    %c0_7 = arith.constant 0 : index
    %c0_8 = arith.constant 0 : index
    %12 = vector.load %arg2[%c0_7, %c0_8] : memref<32x256xbf16, #tpu.memory_space<vmem>>, vector<32x256xbf16>
    %cst_9 = arith.constant dense<0.000000e+00> : vector<64x256xf32>
    %13 = tpu.matmul %10, %12, %cst_9 {dimension_numbers = #tpu.dot_dimension_numbers<[1], [0], [0], [1], [0, 0, 1, 1], [], []>} : vector<64x32xbf16>, vector<32x256xbf16>, vector<64x256xf32> -> vector<64x256xf32>
    %14 = vector.broadcast %11 : vector<1x256xf32> to vector<64x256xf32>
    %15 = arith.addf %14, %13 : vector<64x256xf32>
    %c0_10 = arith.constant 0 : index
    %c0_11 = arith.constant 0 : index
    %16 = vector.load %arg4[%c0_10, %c0_11] : memref<32x128xbf16, #tpu.memory_space<vmem>>, vector<32x128xbf16>
    %17 = vector.extract_strided_slice %15 {offsets = [0, 0], sizes = [64, 128], strides = [1, 1]} : vector<64x256xf32> to vector<64x128xf32>
    %cst_12 = arith.constant 0.000000e+00 : f32
    %18 = vector.broadcast %cst_12 : f32 to vector<8x32xf32>
    %cst_13 = arith.constant 0.000000e+00 : f32
    %19 = vector.broadcast %cst_13 : f32 to vector<8x32xf32>
    %20 = vector.extract_strided_slice %17 {offsets = [0, 0], sizes = [8, 128], strides = [1, 1]} : vector<64x128xf32> to vector<8x128xf32>
    %21 = arith.truncf %18 : vector<8x32xf32> to vector<8x32xbf16>
    %cst_14 = arith.constant dense<0.000000e+00> : vector<8x128xf32>
    %22 = tpu.matmul %21, %16, %cst_14 {dimension_numbers = #tpu.dot_dimension_numbers<[1], [0], [0], [1], [0, 0, 1, 1], [], []>} : vector<8x32xbf16>, vector<32x128xbf16>, vector<8x128xf32> -> vector<8x128xf32>
    %23 = arith.addf %20, %22 : vector<8x128xf32>
    %24 = vector.extract_strided_slice %23 {offsets = [0, 0], sizes = [8, 96], strides = [1, 1]} : vector<8x128xf32> to vector<8x96xf32>
    %25 = arith.negf %24 : vector<8x96xf32>
    %26 = math.exp %25 : vector<8x96xf32>
    %cst_15 = arith.constant 1.000000e+00 : f32
    %27 = vector.broadcast %cst_15 : f32 to vector<8x96xf32>
    %28 = arith.addf %27, %26 : vector<8x96xf32>
    %29 = arith.divf %27, %28 : vector<8x96xf32>
    %30 = vector.extract_strided_slice %23 {offsets = [0, 96], sizes = [8, 32], strides = [1, 1]} : vector<8x128xf32> to vector<8x32xf32>
    %31 = math.tanh %30 : vector<8x32xf32>
    %32 = vector.extract_strided_slice %29 {offsets = [0, 0], sizes = [8, 32], strides = [1, 1]} : vector<8x96xf32> to vector<8x32xf32>
    %33 = vector.extract_strided_slice %29 {offsets = [0, 32], sizes = [8, 32], strides = [1, 1]} : vector<8x96xf32> to vector<8x32xf32>
    %34 = vector.extract_strided_slice %29 {offsets = [0, 64], sizes = [8, 32], strides = [1, 1]} : vector<8x96xf32> to vector<8x32xf32>
    %35 = arith.mulf %33, %19 : vector<8x32xf32>
    %36 = arith.mulf %32, %31 : vector<8x32xf32>
    %37 = arith.addf %35, %36 : vector<8x32xf32>
    %38 = math.tanh %37 : vector<8x32xf32>
    %39 = arith.mulf %34, %38 : vector<8x32xf32>
    %c0_16 = arith.constant 0 : index
    %c0_17 = arith.constant 0 : index
    %40 = vector.load %arg13[%c0_16, %c0_17] : memref<64x64xf32, #tpu.memory_space<vmem>>, vector<8x32xf32>
    tpu.vector_store %arg13[%c0_16, %c0_17], %39 {strides = array<i32>} : memref<64x64xf32, #tpu.memory_space<vmem>>, vector<8x32xf32>,
    %41 = vector.extract_strided_slice %17 {offsets = [8, 0], sizes = [8, 128], strides = [1, 1]} : vector<64x128xf32> to vector<8x128xf32>
    %42 = arith.truncf %39 : vector<8x32xf32> to vector<8x32xbf16>
    %cst_18 = arith.constant dense<0.000000e+00> : vector<8x128xf32>
    %43 = tpu.matmul %42, %16, %cst_18 {dimension_numbers = #tpu.dot_dimension_numbers<[1], [0], [0], [1], [0, 0, 1, 1], [], []>} : vector<8x32xbf16>, vector<32x128xbf16>, vector<8x128xf32> -> vector<8x128xf32>
    %44 = arith.addf %41, %43 : vector<8x128xf32>
    %45 = vector.extract_strided_slice %44 {offsets = [0, 0], sizes = [8, 96], strides = [1, 1]} : vector<8x128xf32> to vector<8x96xf32>
    %46 = arith.negf %45 : vector<8x96xf32>
    %47 = math.exp %46 : vector<8x96xf32>
    %cst_19 = arith.constant 1.000000e+00 : f32
    %48 = vector.broadcast %cst_19 : f32 to vector<8x96xf32>
    %49 = arith.addf %48, %47 : vector<8x96xf32>
    %50 = arith.divf %48, %49 : vector<8x96xf32>
    %51 = vector.extract_strided_slice %44 {offsets = [0, 96], sizes = [8, 32], strides = [1, 1]} : vector<8x128xf32> to vector<8x32xf32>
    %52 = math.tanh %51 : vector<8x32xf32>
    %53 = vector.extract_strided_slice %50 {offsets = [0, 0], sizes = [8, 32], strides = [1, 1]} : vector<8x96xf32> to vector<8x32xf32>
    %54 = vector.extract_strided_slice %50 {offsets = [0, 32], sizes = [8, 32], strides = [1, 1]} : vector<8x96xf32> to vector<8x32xf32>
    %55 = vector.extract_strided_slice %50 {offsets = [0, 64], sizes = [8, 32], strides = [1, 1]} : vector<8x96xf32> to vector<8x32xf32>
    %56 = arith.mulf %54, %37 : vector<8x32xf32>
    %57 = arith.mulf %53, %52 : vector<8x32xf32>
    %58 = arith.addf %56, %57 : vector<8x32xf32>
    %59 = math.tanh %58 : vector<8x32xf32>
    %60 = arith.mulf %55, %59 : vector<8x32xf32>
    %c8 = arith.constant 8 : index
    %c0_20 = arith.constant 0 : index
    %61 = vector.load %arg13[%c8, %c0_20] : memref<64x64xf32, #tpu.memory_space<vmem>>, vector<8x32xf32>
    tpu.vector_store %arg13[%c8, %c0_20], %60 {strides = array<i32>} : memref<64x64xf32, #tpu.memory_space<vmem>>, vector<8x32xf32>,
    %62 = vector.extract_strided_slice %17 {offsets = [16, 0], sizes = [8, 128], strides = [1, 1]} : vector<64x128xf32> to vector<8x128xf32>
    %63 = arith.truncf %60 : vector<8x32xf32> to vector<8x32xbf16>
    %cst_21 = arith.constant dense<0.000000e+00> : vector<8x128xf32>
    %64 = tpu.matmul %63, %16, %cst_21 {dimension_numbers = #tpu.dot_dimension_numbers<[1], [0], [0], [1], [0, 0, 1, 1], [], []>} : vector<8x32xbf16>, vector<32x128xbf16>, vector<8x128xf32> -> vector<8x128xf32>
    %65 = arith.addf %62, %64 : vector<8x128xf32>
    %66 = vector.extract_strided_slice %65 {offsets = [0, 0], sizes = [8, 96], strides = [1, 1]} : vector<8x128xf32> to vector<8x96xf32>
    %67 = arith.negf %66 : vector<8x96xf32>
    %68 = math.exp %67 : vector<8x96xf32>
    %cst_22 = arith.constant 1.000000e+00 : f32
    %69 = vector.broadcast %cst_22 : f32 to vector<8x96xf32>
    %70 = arith.addf %69, %68 : vector<8x96xf32>
    %71 = arith.divf %69, %70 : vector<8x96xf32>
    %72 = vector.extract_strided_slice %65 {offsets = [0, 96], sizes = [8, 32], strides = [1, 1]} : vector<8x128xf32> to vector<8x32xf32>
    %73 = math.tanh %72 : vector<8x32xf32>
    %74 = vector.extract_strided_slice %71 {offsets = [0, 0], sizes = [8, 32], strides = [1, 1]} : vector<8x96xf32> to vector<8x32xf32>
    %75 = vector.extract_strided_slice %71 {offsets = [0, 32], sizes = [8, 32], strides = [1, 1]} : vector<8x96xf32> to vector<8x32xf32>
    %76 = vector.extract_strided_slice %71 {offsets = [0, 64], sizes = [8, 32], strides = [1, 1]} : vector<8x96xf32> to vector<8x32xf32>
    %77 = arith.mulf %75, %58 : vector<8x32xf32>
    %78 = arith.mulf %74, %73 : vector<8x32xf32>
    %79 = arith.addf %77, %78 : vector<8x32xf32>
    %80 = math.tanh %79 : vector<8x32xf32>
    %81 = arith.mulf %76, %80 : vector<8x32xf32>
    %c16 = arith.constant 16 : index
    %c0_23 = arith.constant 0 : index
    %82 = vector.load %arg13[%c16, %c0_23] : memref<64x64xf32, #tpu.memory_space<vmem>>, vector<8x32xf32>
    tpu.vector_store %arg13[%c16, %c0_23], %81 {strides = array<i32>} : memref<64x64xf32, #tpu.memory_space<vmem>>, vector<8x32xf32>,
    %83 = vector.extract_strided_slice %17 {offsets = [24, 0], sizes = [8, 128], strides = [1, 1]} : vector<64x128xf32> to vector<8x128xf32>
    %84 = arith.truncf %81 : vector<8x32xf32> to vector<8x32xbf16>
    %cst_24 = arith.constant dense<0.000000e+00> : vector<8x128xf32>
    %85 = tpu.matmul %84, %16, %cst_24 {dimension_numbers = #tpu.dot_dimension_numbers<[1], [0], [0], [1], [0, 0, 1, 1], [], []>} : vector<8x32xbf16>, vector<32x128xbf16>, vector<8x128xf32> -> vector<8x128xf32>
    %86 = arith.addf %83, %85 : vector<8x128xf32>
    %87 = vector.extract_strided_slice %86 {offsets = [0, 0], sizes = [8, 96], strides = [1, 1]} : vector<8x128xf32> to vector<8x96xf32>
    %88 = arith.negf %87 : vector<8x96xf32>
    %89 = math.exp %88 : vector<8x96xf32>
    %cst_25 = arith.constant 1.000000e+00 : f32
    %90 = vector.broadcast %cst_25 : f32 to vector<8x96xf32>
    %91 = arith.addf %90, %89 : vector<8x96xf32>
    %92 = arith.divf %90, %91 : vector<8x96xf32>
    %93 = vector.extract_strided_slice %86 {offsets = [0, 96], sizes = [8, 32], strides = [1, 1]} : vector<8x128xf32> to vector<8x32xf32>
    %94 = math.tanh %93 : vector<8x32xf32>
    %95 = vector.extract_strided_slice %92 {offsets = [0, 0], sizes = [8, 32], strides = [1, 1]} : vector<8x96xf32> to vector<8x32xf32>
    %96 = vector.extract_strided_slice %92 {offsets = [0, 32], sizes = [8, 32], strides = [1, 1]} : vector<8x96xf32> to vector<8x32xf32>
    %97 = vector.extract_strided_slice %92 {offsets = [0, 64], sizes = [8, 32], strides = [1, 1]} : vector<8x96xf32> to vector<8x32xf32>
    %98 = arith.mulf %96, %79 : vector<8x32xf32>
    %99 = arith.mulf %95, %94 : vector<8x32xf32>
    %100 = arith.addf %98, %99 : vector<8x32xf32>
    %101 = math.tanh %100 : vector<8x32xf32>
    %102 = arith.mulf %97, %101 : vector<8x32xf32>
    %c24 = arith.constant 24 : index
    %c0_26 = arith.constant 0 : index
    %103 = vector.load %arg13[%c24, %c0_26] : memref<64x64xf32, #tpu.memory_space<vmem>>, vector<8x32xf32>
    tpu.vector_store %arg13[%c24, %c0_26], %102 {strides = array<i32>} : memref<64x64xf32, #tpu.memory_space<vmem>>, vector<8x32xf32>,
    %104 = vector.extract_strided_slice %17 {offsets = [32, 0], sizes = [8, 128], strides = [1, 1]} : vector<64x128xf32> to vector<8x128xf32>
    %105 = arith.truncf %102 : vector<8x32xf32> to vector<8x32xbf16>
    %cst_27 = arith.constant dense<0.000000e+00> : vector<8x128xf32>
    %106 = tpu.matmul %105, %16, %cst_27 {dimension_numbers = #tpu.dot_dimension_numbers<[1], [0], [0], [1], [0, 0, 1, 1], [], []>} : vector<8x32xbf16>, vector<32x128xbf16>, vector<8x128xf32> -> vector<8x128xf32>
    %107 = arith.addf %104, %106 : vector<8x128xf32>
    %108 = vector.extract_strided_slice %107 {offsets = [0, 0], sizes = [8, 96], strides = [1, 1]} : vector<8x128xf32> to vector<8x96xf32>
    %109 = arith.negf %108 : vector<8x96xf32>
    %110 = math.exp %109 : vector<8x96xf32>
    %cst_28 = arith.constant 1.000000e+00 : f32
    %111 = vector.broadcast %cst_28 : f32 to vector<8x96xf32>
    %112 = arith.addf %111, %110 : vector<8x96xf32>
    %113 = arith.divf %111, %112 : vector<8x96xf32>
    %114 = vector.extract_strided_slice %107 {offsets = [0, 96], sizes = [8, 32], strides = [1, 1]} : vector<8x128xf32> to vector<8x32xf32>
    %115 = math.tanh %114 : vector<8x32xf32>
    %116 = vector.extract_strided_slice %113 {offsets = [0, 0], sizes = [8, 32], strides = [1, 1]} : vector<8x96xf32> to vector<8x32xf32>
    %117 = vector.extract_strided_slice %113 {offsets = [0, 32], sizes = [8, 32], strides = [1, 1]} : vector<8x96xf32> to vector<8x32xf32>
    %118 = vector.extract_strided_slice %113 {offsets = [0, 64], sizes = [8, 32], strides = [1, 1]} : vector<8x96xf32> to vector<8x32xf32>
    %119 = arith.mulf %117, %100 : vector<8x32xf32>
    %120 = arith.mulf %116, %115 : vector<8x32xf32>
    %121 = arith.addf %119, %120 : vector<8x32xf32>
    %122 = math.tanh %121 : vector<8x32xf32>
    %123 = arith.mulf %118, %122 : vector<8x32xf32>
    %c32 = arith.constant 32 : index
    %c0_29 = arith.constant 0 : index
    %124 = vector.load %arg13[%c32, %c0_29] : memref<64x64xf32, #tpu.memory_space<vmem>>, vector<8x32xf32>
    tpu.vector_store %arg13[%c32, %c0_29], %123 {strides = array<i32>} : memref<64x64xf32, #tpu.memory_space<vmem>>, vector<8x32xf32>,
    %125 = vector.extract_strided_slice %17 {offsets = [40, 0], sizes = [8, 128], strides = [1, 1]} : vector<64x128xf32> to vector<8x128xf32>
    %126 = arith.truncf %123 : vector<8x32xf32> to vector<8x32xbf16>
    %cst_30 = arith.constant dense<0.000000e+00> : vector<8x128xf32>
    %127 = tpu.matmul %126, %16, %cst_30 {dimension_numbers = #tpu.dot_dimension_numbers<[1], [0], [0], [1], [0, 0, 1, 1], [], []>} : vector<8x32xbf16>, vector<32x128xbf16>, vector<8x128xf32> -> vector<8x128xf32>
    %128 = arith.addf %125, %127 : vector<8x128xf32>
    %129 = vector.extract_strided_slice %128 {offsets = [0, 0], sizes = [8, 96], strides = [1, 1]} : vector<8x128xf32> to vector<8x96xf32>
    %130 = arith.negf %129 : vector<8x96xf32>
    %131 = math.exp %130 : vector<8x96xf32>
    %cst_31 = arith.constant 1.000000e+00 : f32
    %132 = vector.broadcast %cst_31 : f32 to vector<8x96xf32>
    %133 = arith.addf %132, %131 : vector<8x96xf32>
    %134 = arith.divf %132, %133 : vector<8x96xf32>
    %135 = vector.extract_strided_slice %128 {offsets = [0, 96], sizes = [8, 32], strides = [1, 1]} : vector<8x128xf32> to vector<8x32xf32>
    %136 = math.tanh %135 : vector<8x32xf32>
    %137 = vector.extract_strided_slice %134 {offsets = [0, 0], sizes = [8, 32], strides = [1, 1]} : vector<8x96xf32> to vector<8x32xf32>
    %138 = vector.extract_strided_slice %134 {offsets = [0, 32], sizes = [8, 32], strides = [1, 1]} : vector<8x96xf32> to vector<8x32xf32>
    %139 = vector.extract_strided_slice %134 {offsets = [0, 64], sizes = [8, 32], strides = [1, 1]} : vector<8x96xf32> to vector<8x32xf32>
    %140 = arith.mulf %138, %121 : vector<8x32xf32>
    %141 = arith.mulf %137, %136 : vector<8x32xf32>
    %142 = arith.addf %140, %141 : vector<8x32xf32>
    %143 = math.tanh %142 : vector<8x32xf32>
    %144 = arith.mulf %139, %143 : vector<8x32xf32>
    %c40 = arith.constant 40 : index
    %c0_32 = arith.constant 0 : index
    %145 = vector.load %arg13[%c40, %c0_32] : memref<64x64xf32, #tpu.memory_space<vmem>>, vector<8x32xf32>
    tpu.vector_store %arg13[%c40, %c0_32], %144 {strides = array<i32>} : memref<64x64xf32, #tpu.memory_space<vmem>>, vector<8x32xf32>,
    %146 = vector.extract_strided_slice %17 {offsets = [48, 0], sizes = [8, 128], strides = [1, 1]} : vector<64x128xf32> to vector<8x128xf32>
    %147 = arith.truncf %144 : vector<8x32xf32> to vector<8x32xbf16>
    %cst_33 = arith.constant dense<0.000000e+00> : vector<8x128xf32>
    %148 = tpu.matmul %147, %16, %cst_33 {dimension_numbers = #tpu.dot_dimension_numbers<[1], [0], [0], [1], [0, 0, 1, 1], [], []>} : vector<8x32xbf16>, vector<32x128xbf16>, vector<8x128xf32> -> vector<8x128xf32>
    %149 = arith.addf %146, %148 : vector<8x128xf32>
    %150 = vector.extract_strided_slice %149 {offsets = [0, 0], sizes = [8, 96], strides = [1, 1]} : vector<8x128xf32> to vector<8x96xf32>
    %151 = arith.negf %150 : vector<8x96xf32>
    %152 = math.exp %151 : vector<8x96xf32>
    %cst_34 = arith.constant 1.000000e+00 : f32
    %153 = vector.broadcast %cst_34 : f32 to vector<8x96xf32>
    %154 = arith.addf %153, %152 : vector<8x96xf32>
    %155 = arith.divf %153, %154 : vector<8x96xf32>
    %156 = vector.extract_strided_slice %149 {offsets = [0, 96], sizes = [8, 32], strides = [1, 1]} : vector<8x128xf32> to vector<8x32xf32>
    %157 = math.tanh %156 : vector<8x32xf32>
    %158 = vector.extract_strided_slice %155 {offsets = [0, 0], sizes = [8, 32], strides = [1, 1]} : vector<8x96xf32> to vector<8x32xf32>
    %159 = vector.extract_strided_slice %155 {offsets = [0, 32], sizes = [8, 32], strides = [1, 1]} : vector<8x96xf32> to vector<8x32xf32>
    %160 = vector.extract_strided_slice %155 {offsets = [0, 64], sizes = [8, 32], strides = [1, 1]} : vector<8x96xf32> to vector<8x32xf32>
    %161 = arith.mulf %159, %142 : vector<8x32xf32>
    %162 = arith.mulf %158, %157 : vector<8x32xf32>
    %163 = arith.addf %161, %162 : vector<8x32xf32>
    %164 = math.tanh %163 : vector<8x32xf32>
    %165 = arith.mulf %160, %164 : vector<8x32xf32>
    %c48 = arith.constant 48 : index
    %c0_35 = arith.constant 0 : index
    %166 = vector.load %arg13[%c48, %c0_35] : memref<64x64xf32, #tpu.memory_space<vmem>>, vector<8x32xf32>
    tpu.vector_store %arg13[%c48, %c0_35], %165 {strides = array<i32>} : memref<64x64xf32, #tpu.memory_space<vmem>>, vector<8x32xf32>,
    %167 = vector.extract_strided_slice %17 {offsets = [56, 0], sizes = [8, 128], strides = [1, 1]} : vector<64x128xf32> to vector<8x128xf32>
    %168 = arith.truncf %165 : vector<8x32xf32> to vector<8x32xbf16>
    %cst_36 = arith.constant dense<0.000000e+00> : vector<8x128xf32>
    %169 = tpu.matmul %168, %16, %cst_36 {dimension_numbers = #tpu.dot_dimension_numbers<[1], [0], [0], [1], [0, 0, 1, 1], [], []>} : vector<8x32xbf16>, vector<32x128xbf16>, vector<8x128xf32> -> vector<8x128xf32>
    %170 = arith.addf %167, %169 : vector<8x128xf32>
    %171 = vector.extract_strided_slice %170 {offsets = [0, 0], sizes = [8, 96], strides = [1, 1]} : vector<8x128xf32> to vector<8x96xf32>
    %172 = arith.negf %171 : vector<8x96xf32>
    %173 = math.exp %172 : vector<8x96xf32>
    %cst_37 = arith.constant 1.000000e+00 : f32
    %174 = vector.broadcast %cst_37 : f32 to vector<8x96xf32>
    %175 = arith.addf %174, %173 : vector<8x96xf32>
    %176 = arith.divf %174, %175 : vector<8x96xf32>
    %177 = vector.extract_strided_slice %170 {offsets = [0, 96], sizes = [8, 32], strides = [1, 1]} : vector<8x128xf32> to vector<8x32xf32>
    %178 = math.tanh %177 : vector<8x32xf32>
    %179 = vector.extract_strided_slice %176 {offsets = [0, 0], sizes = [8, 32], strides = [1, 1]} : vector<8x96xf32> to vector<8x32xf32>
    %180 = vector.extract_strided_slice %176 {offsets = [0, 32], sizes = [8, 32], strides = [1, 1]} : vector<8x96xf32> to vector<8x32xf32>
    %181 = vector.extract_strided_slice %176 {offsets = [0, 64], sizes = [8, 32], strides = [1, 1]} : vector<8x96xf32> to vector<8x32xf32>
    %182 = arith.mulf %180, %163 : vector<8x32xf32>
    %183 = arith.mulf %179, %178 : vector<8x32xf32>
    %184 = arith.addf %182, %183 : vector<8x32xf32>
    %185 = math.tanh %184 : vector<8x32xf32>
    %186 = arith.mulf %181, %185 : vector<8x32xf32>
    %c56 = arith.constant 56 : index
    %c0_38 = arith.constant 0 : index
    %187 = vector.load %arg13[%c56, %c0_38] : memref<64x64xf32, #tpu.memory_space<vmem>>, vector<8x32xf32>
    tpu.vector_store %arg13[%c56, %c0_38], %186 {strides = array<i32>} : memref<64x64xf32, #tpu.memory_space<vmem>>, vector<8x32xf32>,
    %c0_39 = arith.constant 0 : index
    %c0_40 = arith.constant 0 : index
    %188 = vector.load %arg5[%c0_39, %c0_40] : memref<32x128xbf16, #tpu.memory_space<vmem>>, vector<32x128xbf16>
    %189 = vector.extract_strided_slice %15 {offsets = [0, 128], sizes = [64, 128], strides = [1, 1]} : vector<64x256xf32> to vector<64x128xf32>
    %cst_41 = arith.constant 0.000000e+00 : f32
    %190 = vector.broadcast %cst_41 : f32 to vector<8x32xf32>
    %cst_42 = arith.constant 0.000000e+00 : f32
    %191 = vector.broadcast %cst_42 : f32 to vector<8x32xf32>
    %192 = vector.extract_strided_slice %189 {offsets = [56, 0], sizes = [8, 128], strides = [1, 1]} : vector<64x128xf32> to vector<8x128xf32>
    %193 = arith.truncf %190 : vector<8x32xf32> to vector<8x32xbf16>
    %cst_43 = arith.constant dense<0.000000e+00> : vector<8x128xf32>
    %194 = tpu.matmul %193, %188, %cst_43 {dimension_numbers = #tpu.dot_dimension_numbers<[1], [0], [0], [1], [0, 0, 1, 1], [], []>} : vector<8x32xbf16>, vector<32x128xbf16>, vector<8x128xf32> -> vector<8x128xf32>
    %195 = arith.addf %192, %194 : vector<8x128xf32>
    %196 = vector.extract_strided_slice %195 {offsets = [0, 0], sizes = [8, 96], strides = [1, 1]} : vector<8x128xf32> to vector<8x96xf32>
    %197 = arith.negf %196 : vector<8x96xf32>
    %198 = math.exp %197 : vector<8x96xf32>
    %cst_44 = arith.constant 1.000000e+00 : f32
    %199 = vector.broadcast %cst_44 : f32 to vector<8x96xf32>
    %200 = arith.addf %199, %198 : vector<8x96xf32>
    %201 = arith.divf %199, %200 : vector<8x96xf32>
    %202 = vector.extract_strided_slice %195 {offsets = [0, 96], sizes = [8, 32], strides = [1, 1]} : vector<8x128xf32> to vector<8x32xf32>
    %203 = math.tanh %202 : vector<8x32xf32>
    %204 = vector.extract_strided_slice %201 {offsets = [0, 0], sizes = [8, 32], strides = [1, 1]} : vector<8x96xf32> to vector<8x32xf32>
    %205 = vector.extract_strided_slice %201 {offsets = [0, 32], sizes = [8, 32], strides = [1, 1]} : vector<8x96xf32> to vector<8x32xf32>
    %206 = vector.extract_strided_slice %201 {offsets = [0, 64], sizes = [8, 32], strides = [1, 1]} : vector<8x96xf32> to vector<8x32xf32>
    %207 = arith.mulf %205, %191 : vector<8x32xf32>
    %208 = arith.mulf %204, %203 : vector<8x32xf32>
    %209 = arith.addf %207, %208 : vector<8x32xf32>
    %210 = math.tanh %209 : vector<8x32xf32>
    %211 = arith.mulf %206, %210 : vector<8x32xf32>
    %c56_45 = arith.constant 56 : index
    %c32_46 = arith.constant 32 : index
    %212 = vector.load %arg13[%c56_45, %c32_46] : memref<64x64xf32, #tpu.memory_space<vmem>>, vector<8x32xf32>
    tpu.vector_store %arg13[%c56_45, %c32_46], %211 {strides = array<i32>} : memref<64x64xf32, #tpu.memory_space<vmem>>, vector<8x32xf32>,
    %213 = vector.extract_strided_slice %189 {offsets = [48, 0], sizes = [8, 128], strides = [1, 1]} : vector<64x128xf32> to vector<8x128xf32>
    %214 = arith.truncf %211 : vector<8x32xf32> to vector<8x32xbf16>
    %cst_47 = arith.constant dense<0.000000e+00> : vector<8x128xf32>
    %215 = tpu.matmul %214, %188, %cst_47 {dimension_numbers = #tpu.dot_dimension_numbers<[1], [0], [0], [1], [0, 0, 1, 1], [], []>} : vector<8x32xbf16>, vector<32x128xbf16>, vector<8x128xf32> -> vector<8x128xf32>
    %216 = arith.addf %213, %215 : vector<8x128xf32>
    %217 = vector.extract_strided_slice %216 {offsets = [0, 0], sizes = [8, 96], strides = [1, 1]} : vector<8x128xf32> to vector<8x96xf32>
    %218 = arith.negf %217 : vector<8x96xf32>
    %219 = math.exp %218 : vector<8x96xf32>
    %cst_48 = arith.constant 1.000000e+00 : f32
    %220 = vector.broadcast %cst_48 : f32 to vector<8x96xf32>
    %221 = arith.addf %220, %219 : vector<8x96xf32>
    %222 = arith.divf %220, %221 : vector<8x96xf32>
    %223 = vector.extract_strided_slice %216 {offsets = [0, 96], sizes = [8, 32], strides = [1, 1]} : vector<8x128xf32> to vector<8x32xf32>
    %224 = math.tanh %223 : vector<8x32xf32>
    %225 = vector.extract_strided_slice %222 {offsets = [0, 0], sizes = [8, 32], strides = [1, 1]} : vector<8x96xf32> to vector<8x32xf32>
    %226 = vector.extract_strided_slice %222 {offsets = [0, 32], sizes = [8, 32], strides = [1, 1]} : vector<8x96xf32> to vector<8x32xf32>
    %227 = vector.extract_strided_slice %222 {offsets = [0, 64], sizes = [8, 32], strides = [1, 1]} : vector<8x96xf32> to vector<8x32xf32>
    %228 = arith.mulf %226, %209 : vector<8x32xf32>
    %229 = arith.mulf %225, %224 : vector<8x32xf32>
    %230 = arith.addf %228, %229 : vector<8x32xf32>
    %231 = math.tanh %230 : vector<8x32xf32>
    %232 = arith.mulf %227, %231 : vector<8x32xf32>
    %c48_49 = arith.constant 48 : index
    %c32_50 = arith.constant 32 : index
    %233 = vector.load %arg13[%c48_49, %c32_50] : memref<64x64xf32, #tpu.memory_space<vmem>>, vector<8x32xf32>
    tpu.vector_store %arg13[%c48_49, %c32_50], %232 {strides = array<i32>} : memref<64x64xf32, #tpu.memory_space<vmem>>, vector<8x32xf32>,
    %234 = vector.extract_strided_slice %189 {offsets = [40, 0], sizes = [8, 128], strides = [1, 1]} : vector<64x128xf32> to vector<8x128xf32>
    %235 = arith.truncf %232 : vector<8x32xf32> to vector<8x32xbf16>
    %cst_51 = arith.constant dense<0.000000e+00> : vector<8x128xf32>
    %236 = tpu.matmul %235, %188, %cst_51 {dimension_numbers = #tpu.dot_dimension_numbers<[1], [0], [0], [1], [0, 0, 1, 1], [], []>} : vector<8x32xbf16>, vector<32x128xbf16>, vector<8x128xf32> -> vector<8x128xf32>
    %237 = arith.addf %234, %236 : vector<8x128xf32>
    %238 = vector.extract_strided_slice %237 {offsets = [0, 0], sizes = [8, 96], strides = [1, 1]} : vector<8x128xf32> to vector<8x96xf32>
    %239 = arith.negf %238 : vector<8x96xf32>
    %240 = math.exp %239 : vector<8x96xf32>
    %cst_52 = arith.constant 1.000000e+00 : f32
    %241 = vector.broadcast %cst_52 : f32 to vector<8x96xf32>
    %242 = arith.addf %241, %240 : vector<8x96xf32>
    %243 = arith.divf %241, %242 : vector<8x96xf32>
    %244 = vector.extract_strided_slice %237 {offsets = [0, 96], sizes = [8, 32], strides = [1, 1]} : vector<8x128xf32> to vector<8x32xf32>
    %245 = math.tanh %244 : vector<8x32xf32>
    %246 = vector.extract_strided_slice %243 {offsets = [0, 0], sizes = [8, 32], strides = [1, 1]} : vector<8x96xf32> to vector<8x32xf32>
    %247 = vector.extract_strided_slice %243 {offsets = [0, 32], sizes = [8, 32], strides = [1, 1]} : vector<8x96xf32> to vector<8x32xf32>
    %248 = vector.extract_strided_slice %243 {offsets = [0, 64], sizes = [8, 32], strides = [1, 1]} : vector<8x96xf32> to vector<8x32xf32>
    %249 = arith.mulf %247, %230 : vector<8x32xf32>
    %250 = arith.mulf %246, %245 : vector<8x32xf32>
    %251 = arith.addf %249, %250 : vector<8x32xf32>
    %252 = math.tanh %251 : vector<8x32xf32>
    %253 = arith.mulf %248, %252 : vector<8x32xf32>
    %c40_53 = arith.constant 40 : index
    %c32_54 = arith.constant 32 : index
    %254 = vector.load %arg13[%c40_53, %c32_54] : memref<64x64xf32, #tpu.memory_space<vmem>>, vector<8x32xf32>
    tpu.vector_store %arg13[%c40_53, %c32_54], %253 {strides = array<i32>} : memref<64x64xf32, #tpu.memory_space<vmem>>, vector<8x32xf32>,
    %255 = vector.extract_strided_slice %189 {offsets = [32, 0], sizes = [8, 128], strides = [1, 1]} : vector<64x128xf32> to vector<8x128xf32>
    %256 = arith.truncf %253 : vector<8x32xf32> to vector<8x32xbf16>
    %cst_55 = arith.constant dense<0.000000e+00> : vector<8x128xf32>
    %257 = tpu.matmul %256, %188, %cst_55 {dimension_numbers = #tpu.dot_dimension_numbers<[1], [0], [0], [1], [0, 0, 1, 1], [], []>} : vector<8x32xbf16>, vector<32x128xbf16>, vector<8x128xf32> -> vector<8x128xf32>
    %258 = arith.addf %255, %257 : vector<8x128xf32>
    %259 = vector.extract_strided_slice %258 {offsets = [0, 0], sizes = [8, 96], strides = [1, 1]} : vector<8x128xf32> to vector<8x96xf32>
    %260 = arith.negf %259 : vector<8x96xf32>
    %261 = math.exp %260 : vector<8x96xf32>
    %cst_56 = arith.constant 1.000000e+00 : f32
    %262 = vector.broadcast %cst_56 : f32 to vector<8x96xf32>
    %263 = arith.addf %262, %261 : vector<8x96xf32>
    %264 = arith.divf %262, %263 : vector<8x96xf32>
    %265 = vector.extract_strided_slice %258 {offsets = [0, 96], sizes = [8, 32], strides = [1, 1]} : vector<8x128xf32> to vector<8x32xf32>
    %266 = math.tanh %265 : vector<8x32xf32>
    %267 = vector.extract_strided_slice %264 {offsets = [0, 0], sizes = [8, 32], strides = [1, 1]} : vector<8x96xf32> to vector<8x32xf32>
    %268 = vector.extract_strided_slice %264 {offsets = [0, 32], sizes = [8, 32], strides = [1, 1]} : vector<8x96xf32> to vector<8x32xf32>
    %269 = vector.extract_strided_slice %264 {offsets = [0, 64], sizes = [8, 32], strides = [1, 1]} : vector<8x96xf32> to vector<8x32xf32>
    %270 = arith.mulf %268, %251 : vector<8x32xf32>
    %271 = arith.mulf %267, %266 : vector<8x32xf32>
    %272 = arith.addf %270, %271 : vector<8x32xf32>
    %273 = math.tanh %272 : vector<8x32xf32>
    %274 = arith.mulf %269, %273 : vector<8x32xf32>
    %c32_57 = arith.constant 32 : index
    %c32_58 = arith.constant 32 : index
    %275 = vector.load %arg13[%c32_57, %c32_58] : memref<64x64xf32, #tpu.memory_space<vmem>>, vector<8x32xf32>
    tpu.vector_store %arg13[%c32_57, %c32_58], %274 {strides = array<i32>} : memref<64x64xf32, #tpu.memory_space<vmem>>, vector<8x32xf32>,
    %276 = vector.extract_strided_slice %189 {offsets = [24, 0], sizes = [8, 128], strides = [1, 1]} : vector<64x128xf32> to vector<8x128xf32>
    %277 = arith.truncf %274 : vector<8x32xf32> to vector<8x32xbf16>
    %cst_59 = arith.constant dense<0.000000e+00> : vector<8x128xf32>
    %278 = tpu.matmul %277, %188, %cst_59 {dimension_numbers = #tpu.dot_dimension_numbers<[1], [0], [0], [1], [0, 0, 1, 1], [], []>} : vector<8x32xbf16>, vector<32x128xbf16>, vector<8x128xf32> -> vector<8x128xf32>
    %279 = arith.addf %276, %278 : vector<8x128xf32>
    %280 = vector.extract_strided_slice %279 {offsets = [0, 0], sizes = [8, 96], strides = [1, 1]} : vector<8x128xf32> to vector<8x96xf32>
    %281 = arith.negf %280 : vector<8x96xf32>
    %282 = math.exp %281 : vector<8x96xf32>
    %cst_60 = arith.constant 1.000000e+00 : f32
    %283 = vector.broadcast %cst_60 : f32 to vector<8x96xf32>
    %284 = arith.addf %283, %282 : vector<8x96xf32>
    %285 = arith.divf %283, %284 : vector<8x96xf32>
    %286 = vector.extract_strided_slice %279 {offsets = [0, 96], sizes = [8, 32], strides = [1, 1]} : vector<8x128xf32> to vector<8x32xf32>
    %287 = math.tanh %286 : vector<8x32xf32>
    %288 = vector.extract_strided_slice %285 {offsets = [0, 0], sizes = [8, 32], strides = [1, 1]} : vector<8x96xf32> to vector<8x32xf32>
    %289 = vector.extract_strided_slice %285 {offsets = [0, 32], sizes = [8, 32], strides = [1, 1]} : vector<8x96xf32> to vector<8x32xf32>
    %290 = vector.extract_strided_slice %285 {offsets = [0, 64], sizes = [8, 32], strides = [1, 1]} : vector<8x96xf32> to vector<8x32xf32>
    %291 = arith.mulf %289, %272 : vector<8x32xf32>
    %292 = arith.mulf %288, %287 : vector<8x32xf32>
    %293 = arith.addf %291, %292 : vector<8x32xf32>
    %294 = math.tanh %293 : vector<8x32xf32>
    %295 = arith.mulf %290, %294 : vector<8x32xf32>
    %c24_61 = arith.constant 24 : index
    %c32_62 = arith.constant 32 : index
    %296 = vector.load %arg13[%c24_61, %c32_62] : memref<64x64xf32, #tpu.memory_space<vmem>>, vector<8x32xf32>
    tpu.vector_store %arg13[%c24_61, %c32_62], %295 {strides = array<i32>} : memref<64x64xf32, #tpu.memory_space<vmem>>, vector<8x32xf32>,
    %297 = vector.extract_strided_slice %189 {offsets = [16, 0], sizes = [8, 128], strides = [1, 1]} : vector<64x128xf32> to vector<8x128xf32>
    %298 = arith.truncf %295 : vector<8x32xf32> to vector<8x32xbf16>
    %cst_63 = arith.constant dense<0.000000e+00> : vector<8x128xf32>
    %299 = tpu.matmul %298, %188, %cst_63 {dimension_numbers = #tpu.dot_dimension_numbers<[1], [0], [0], [1], [0, 0, 1, 1], [], []>} : vector<8x32xbf16>, vector<32x128xbf16>, vector<8x128xf32> -> vector<8x128xf32>
    %300 = arith.addf %297, %299 : vector<8x128xf32>
    %301 = vector.extract_strided_slice %300 {offsets = [0, 0], sizes = [8, 96], strides = [1, 1]} : vector<8x128xf32> to vector<8x96xf32>
    %302 = arith.negf %301 : vector<8x96xf32>
    %303 = math.exp %302 : vector<8x96xf32>
    %cst_64 = arith.constant 1.000000e+00 : f32
    %304 = vector.broadcast %cst_64 : f32 to vector<8x96xf32>
    %305 = arith.addf %304, %303 : vector<8x96xf32>
    %306 = arith.divf %304, %305 : vector<8x96xf32>
    %307 = vector.extract_strided_slice %300 {offsets = [0, 96], sizes = [8, 32], strides = [1, 1]} : vector<8x128xf32> to vector<8x32xf32>
    %308 = math.tanh %307 : vector<8x32xf32>
    %309 = vector.extract_strided_slice %306 {offsets = [0, 0], sizes = [8, 32], strides = [1, 1]} : vector<8x96xf32> to vector<8x32xf32>
    %310 = vector.extract_strided_slice %306 {offsets = [0, 32], sizes = [8, 32], strides = [1, 1]} : vector<8x96xf32> to vector<8x32xf32>
    %311 = vector.extract_strided_slice %306 {offsets = [0, 64], sizes = [8, 32], strides = [1, 1]} : vector<8x96xf32> to vector<8x32xf32>
    %312 = arith.mulf %310, %293 : vector<8x32xf32>
    %313 = arith.mulf %309, %308 : vector<8x32xf32>
    %314 = arith.addf %312, %313 : vector<8x32xf32>
    %315 = math.tanh %314 : vector<8x32xf32>
    %316 = arith.mulf %311, %315 : vector<8x32xf32>
    %c16_65 = arith.constant 16 : index
    %c32_66 = arith.constant 32 : index
    %317 = vector.load %arg13[%c16_65, %c32_66] : memref<64x64xf32, #tpu.memory_space<vmem>>, vector<8x32xf32>
    tpu.vector_store %arg13[%c16_65, %c32_66], %316 {strides = array<i32>} : memref<64x64xf32, #tpu.memory_space<vmem>>, vector<8x32xf32>,
    %318 = vector.extract_strided_slice %189 {offsets = [8, 0], sizes = [8, 128], strides = [1, 1]} : vector<64x128xf32> to vector<8x128xf32>
    %319 = arith.truncf %316 : vector<8x32xf32> to vector<8x32xbf16>
    %cst_67 = arith.constant dense<0.000000e+00> : vector<8x128xf32>
    %320 = tpu.matmul %319, %188, %cst_67 {dimension_numbers = #tpu.dot_dimension_numbers<[1], [0], [0], [1], [0, 0, 1, 1], [], []>} : vector<8x32xbf16>, vector<32x128xbf16>, vector<8x128xf32> -> vector<8x128xf32>
    %321 = arith.addf %318, %320 : vector<8x128xf32>
    %322 = vector.extract_strided_slice %321 {offsets = [0, 0], sizes = [8, 96], strides = [1, 1]} : vector<8x128xf32> to vector<8x96xf32>
    %323 = arith.negf %322 : vector<8x96xf32>
    %324 = math.exp %323 : vector<8x96xf32>
    %cst_68 = arith.constant 1.000000e+00 : f32
    %325 = vector.broadcast %cst_68 : f32 to vector<8x96xf32>
    %326 = arith.addf %325, %324 : vector<8x96xf32>
    %327 = arith.divf %325, %326 : vector<8x96xf32>
    %328 = vector.extract_strided_slice %321 {offsets = [0, 96], sizes = [8, 32], strides = [1, 1]} : vector<8x128xf32> to vector<8x32xf32>
    %329 = math.tanh %328 : vector<8x32xf32>
    %330 = vector.extract_strided_slice %327 {offsets = [0, 0], sizes = [8, 32], strides = [1, 1]} : vector<8x96xf32> to vector<8x32xf32>
    %331 = vector.extract_strided_slice %327 {offsets = [0, 32], sizes = [8, 32], strides = [1, 1]} : vector<8x96xf32> to vector<8x32xf32>
    %332 = vector.extract_strided_slice %327 {offsets = [0, 64], sizes = [8, 32], strides = [1, 1]} : vector<8x96xf32> to vector<8x32xf32>
    %333 = arith.mulf %331, %314 : vector<8x32xf32>
    %334 = arith.mulf %330, %329 : vector<8x32xf32>
    %335 = arith.addf %333, %334 : vector<8x32xf32>
    %336 = math.tanh %335 : vector<8x32xf32>
    %337 = arith.mulf %332, %336 : vector<8x32xf32>
    %c8_69 = arith.constant 8 : index
    %c32_70 = arith.constant 32 : index
    %338 = vector.load %arg13[%c8_69, %c32_70] : memref<64x64xf32, #tpu.memory_space<vmem>>, vector<8x32xf32>
    tpu.vector_store %arg13[%c8_69, %c32_70], %337 {strides = array<i32>} : memref<64x64xf32, #tpu.memory_space<vmem>>, vector<8x32xf32>,
    %339 = vector.extract_strided_slice %189 {offsets = [0, 0], sizes = [8, 128], strides = [1, 1]} : vector<64x128xf32> to vector<8x128xf32>
    %340 = arith.truncf %337 : vector<8x32xf32> to vector<8x32xbf16>
    %cst_71 = arith.constant dense<0.000000e+00> : vector<8x128xf32>
    %341 = tpu.matmul %340, %188, %cst_71 {dimension_numbers = #tpu.dot_dimension_numbers<[1], [0], [0], [1], [0, 0, 1, 1], [], []>} : vector<8x32xbf16>, vector<32x128xbf16>, vector<8x128xf32> -> vector<8x128xf32>
    %342 = arith.addf %339, %341 : vector<8x128xf32>
    %343 = vector.extract_strided_slice %342 {offsets = [0, 0], sizes = [8, 96], strides = [1, 1]} : vector<8x128xf32> to vector<8x96xf32>
    %344 = arith.negf %343 : vector<8x96xf32>
    %345 = math.exp %344 : vector<8x96xf32>
    %cst_72 = arith.constant 1.000000e+00 : f32
    %346 = vector.broadcast %cst_72 : f32 to vector<8x96xf32>
    %347 = arith.addf %346, %345 : vector<8x96xf32>
    %348 = arith.divf %346, %347 : vector<8x96xf32>
    %349 = vector.extract_strided_slice %342 {offsets = [0, 96], sizes = [8, 32], strides = [1, 1]} : vector<8x128xf32> to vector<8x32xf32>
    %350 = math.tanh %349 : vector<8x32xf32>
    %351 = vector.extract_strided_slice %348 {offsets = [0, 0], sizes = [8, 32], strides = [1, 1]} : vector<8x96xf32> to vector<8x32xf32>
    %352 = vector.extract_strided_slice %348 {offsets = [0, 32], sizes = [8, 32], strides = [1, 1]} : vector<8x96xf32> to vector<8x32xf32>
    %353 = vector.extract_strided_slice %348 {offsets = [0, 64], sizes = [8, 32], strides = [1, 1]} : vector<8x96xf32> to vector<8x32xf32>
    %354 = arith.mulf %352, %335 : vector<8x32xf32>
    %355 = arith.mulf %351, %350 : vector<8x32xf32>
    %356 = arith.addf %354, %355 : vector<8x32xf32>
    %357 = math.tanh %356 : vector<8x32xf32>
    %358 = arith.mulf %353, %357 : vector<8x32xf32>
    %c0_73 = arith.constant 0 : index
    %c32_74 = arith.constant 32 : index
    %359 = vector.load %arg13[%c0_73, %c32_74] : memref<64x64xf32, #tpu.memory_space<vmem>>, vector<8x32xf32>
    tpu.vector_store %arg13[%c0_73, %c32_74], %358 {strides = array<i32>} : memref<64x64xf32, #tpu.memory_space<vmem>>, vector<8x32xf32>,
    %c0_75 = arith.constant 0 : index
    %c0_76 = arith.constant 0 : index
    %360 = vector.load %arg13[%c0_75, %c0_76] : memref<64x64xf32, #tpu.memory_space<vmem>>, vector<64x64xf32>
    %361 = arith.truncf %360 : vector<64x64xf32> to vector<64x64xbf16>
    %c0_77 = arith.constant 0 : index
    %c0_78 = arith.constant 0 : index
    %362 = vector.load %arg7[%c0_77, %c0_78] : memref<1x256xf32, #tpu.memory_space<vmem>>, vector<1x256xf32>
    %c0_79 = arith.constant 0 : index
    %c0_80 = arith.constant 0 : index
    %363 = vector.load %arg6[%c0_79, %c0_80] : memref<64x256xbf16, #tpu.memory_space<vmem>>, vector<64x256xbf16>
    %cst_81 = arith.constant dense<0.000000e+00> : vector<64x256xf32>
    %364 = tpu.matmul %361, %363, %cst_81 {dimension_numbers = #tpu.dot_dimension_numbers<[1], [0], [0], [1], [0, 0, 1, 1], [], []>} : vector<64x64xbf16>, vector<64x256xbf16>, vector<64x256xf32> -> vector<64x256xf32>
    %365 = vector.broadcast %362 : vector<1x256xf32> to vector<64x256xf32>
    %366 = arith.addf %365, %364 : vector<64x256xf32>
    %c0_82 = arith.constant 0 : index
    %c0_83 = arith.constant 0 : index
    %367 = vector.load %arg8[%c0_82, %c0_83] : memref<32x128xbf16, #tpu.memory_space<vmem>>, vector<32x128xbf16>
    %368 = vector.extract_strided_slice %366 {offsets = [0, 0], sizes = [64, 128], strides = [1, 1]} : vector<64x256xf32> to vector<64x128xf32>
    %cst_84 = arith.constant 0.000000e+00 : f32
    %369 = vector.broadcast %cst_84 : f32 to vector<8x32xf32>
    %cst_85 = arith.constant 0.000000e+00 : f32
    %370 = vector.broadcast %cst_85 : f32 to vector<8x32xf32>
    %371 = vector.extract_strided_slice %368 {offsets = [0, 0], sizes = [8, 128], strides = [1, 1]} : vector<64x128xf32> to vector<8x128xf32>
    %372 = arith.truncf %369 : vector<8x32xf32> to vector<8x32xbf16>
    %cst_86 = arith.constant dense<0.000000e+00> : vector<8x128xf32>
    %373 = tpu.matmul %372, %367, %cst_86 {dimension_numbers = #tpu.dot_dimension_numbers<[1], [0], [0], [1], [0, 0, 1, 1], [], []>} : vector<8x32xbf16>, vector<32x128xbf16>, vector<8x128xf32> -> vector<8x128xf32>
    %374 = arith.addf %371, %373 : vector<8x128xf32>
    %375 = vector.extract_strided_slice %374 {offsets = [0, 0], sizes = [8, 96], strides = [1, 1]} : vector<8x128xf32> to vector<8x96xf32>
    %376 = arith.negf %375 : vector<8x96xf32>
    %377 = math.exp %376 : vector<8x96xf32>
    %cst_87 = arith.constant 1.000000e+00 : f32
    %378 = vector.broadcast %cst_87 : f32 to vector<8x96xf32>
    %379 = arith.addf %378, %377 : vector<8x96xf32>
    %380 = arith.divf %378, %379 : vector<8x96xf32>
    %381 = vector.extract_strided_slice %374 {offsets = [0, 96], sizes = [8, 32], strides = [1, 1]} : vector<8x128xf32> to vector<8x32xf32>
    %382 = math.tanh %381 : vector<8x32xf32>
    %383 = vector.extract_strided_slice %380 {offsets = [0, 0], sizes = [8, 32], strides = [1, 1]} : vector<8x96xf32> to vector<8x32xf32>
    %384 = vector.extract_strided_slice %380 {offsets = [0, 32], sizes = [8, 32], strides = [1, 1]} : vector<8x96xf32> to vector<8x32xf32>
    %385 = vector.extract_strided_slice %380 {offsets = [0, 64], sizes = [8, 32], strides = [1, 1]} : vector<8x96xf32> to vector<8x32xf32>
    %386 = arith.mulf %384, %370 : vector<8x32xf32>
    %387 = arith.mulf %383, %382 : vector<8x32xf32>
    %388 = arith.addf %386, %387 : vector<8x32xf32>
    %389 = math.tanh %388 : vector<8x32xf32>
    %390 = arith.mulf %385, %389 : vector<8x32xf32>
    %391 = vector.extract_strided_slice %368 {offsets = [8, 0], sizes = [8, 128], strides = [1, 1]} : vector<64x128xf32> to vector<8x128xf32>
    %392 = arith.truncf %390 : vector<8x32xf32> to vector<8x32xbf16>
    %cst_88 = arith.constant dense<0.000000e+00> : vector<8x128xf32>
    %393 = tpu.matmul %392, %367, %cst_88 {dimension_numbers = #tpu.dot_dimension_numbers<[1], [0], [0], [1], [0, 0, 1, 1], [], []>} : vector<8x32xbf16>, vector<32x128xbf16>, vector<8x128xf32> -> vector<8x128xf32>
    %394 = arith.addf %391, %393 : vector<8x128xf32>
    %395 = vector.extract_strided_slice %394 {offsets = [0, 0], sizes = [8, 96], strides = [1, 1]} : vector<8x128xf32> to vector<8x96xf32>
    %396 = arith.negf %395 : vector<8x96xf32>
    %397 = math.exp %396 : vector<8x96xf32>
    %cst_89 = arith.constant 1.000000e+00 : f32
    %398 = vector.broadcast %cst_89 : f32 to vector<8x96xf32>
    %399 = arith.addf %398, %397 : vector<8x96xf32>
    %400 = arith.divf %398, %399 : vector<8x96xf32>
    %401 = vector.extract_strided_slice %394 {offsets = [0, 96], sizes = [8, 32], strides = [1, 1]} : vector<8x128xf32> to vector<8x32xf32>
    %402 = math.tanh %401 : vector<8x32xf32>
    %403 = vector.extract_strided_slice %400 {offsets = [0, 0], sizes = [8, 32], strides = [1, 1]} : vector<8x96xf32> to vector<8x32xf32>
    %404 = vector.extract_strided_slice %400 {offsets = [0, 32], sizes = [8, 32], strides = [1, 1]} : vector<8x96xf32> to vector<8x32xf32>
    %405 = vector.extract_strided_slice %400 {offsets = [0, 64], sizes = [8, 32], strides = [1, 1]} : vector<8x96xf32> to vector<8x32xf32>
    %406 = arith.mulf %404, %388 : vector<8x32xf32>
    %407 = arith.mulf %403, %402 : vector<8x32xf32>
    %408 = arith.addf %406, %407 : vector<8x32xf32>
    %409 = math.tanh %408 : vector<8x32xf32>
    %410 = arith.mulf %405, %409 : vector<8x32xf32>
    %411 = vector.extract_strided_slice %368 {offsets = [16, 0], sizes = [8, 128], strides = [1, 1]} : vector<64x128xf32> to vector<8x128xf32>
    %412 = arith.truncf %410 : vector<8x32xf32> to vector<8x32xbf16>
    %cst_90 = arith.constant dense<0.000000e+00> : vector<8x128xf32>
    %413 = tpu.matmul %412, %367, %cst_90 {dimension_numbers = #tpu.dot_dimension_numbers<[1], [0], [0], [1], [0, 0, 1, 1], [], []>} : vector<8x32xbf16>, vector<32x128xbf16>, vector<8x128xf32> -> vector<8x128xf32>
    %414 = arith.addf %411, %413 : vector<8x128xf32>
    %415 = vector.extract_strided_slice %414 {offsets = [0, 0], sizes = [8, 96], strides = [1, 1]} : vector<8x128xf32> to vector<8x96xf32>
    %416 = arith.negf %415 : vector<8x96xf32>
    %417 = math.exp %416 : vector<8x96xf32>
    %cst_91 = arith.constant 1.000000e+00 : f32
    %418 = vector.broadcast %cst_91 : f32 to vector<8x96xf32>
    %419 = arith.addf %418, %417 : vector<8x96xf32>
    %420 = arith.divf %418, %419 : vector<8x96xf32>
    %421 = vector.extract_strided_slice %414 {offsets = [0, 96], sizes = [8, 32], strides = [1, 1]} : vector<8x128xf32> to vector<8x32xf32>
    %422 = math.tanh %421 : vector<8x32xf32>
    %423 = vector.extract_strided_slice %420 {offsets = [0, 0], sizes = [8, 32], strides = [1, 1]} : vector<8x96xf32> to vector<8x32xf32>
    %424 = vector.extract_strided_slice %420 {offsets = [0, 32], sizes = [8, 32], strides = [1, 1]} : vector<8x96xf32> to vector<8x32xf32>
    %425 = vector.extract_strided_slice %420 {offsets = [0, 64], sizes = [8, 32], strides = [1, 1]} : vector<8x96xf32> to vector<8x32xf32>
    %426 = arith.mulf %424, %408 : vector<8x32xf32>
    %427 = arith.mulf %423, %422 : vector<8x32xf32>
    %428 = arith.addf %426, %427 : vector<8x32xf32>
    %429 = math.tanh %428 : vector<8x32xf32>
    %430 = arith.mulf %425, %429 : vector<8x32xf32>
    %431 = vector.extract_strided_slice %368 {offsets = [24, 0], sizes = [8, 128], strides = [1, 1]} : vector<64x128xf32> to vector<8x128xf32>
    %432 = arith.truncf %430 : vector<8x32xf32> to vector<8x32xbf16>
    %cst_92 = arith.constant dense<0.000000e+00> : vector<8x128xf32>
    %433 = tpu.matmul %432, %367, %cst_92 {dimension_numbers = #tpu.dot_dimension_numbers<[1], [0], [0], [1], [0, 0, 1, 1], [], []>} : vector<8x32xbf16>, vector<32x128xbf16>, vector<8x128xf32> -> vector<8x128xf32>
    %434 = arith.addf %431, %433 : vector<8x128xf32>
    %435 = vector.extract_strided_slice %434 {offsets = [0, 0], sizes = [8, 96], strides = [1, 1]} : vector<8x128xf32> to vector<8x96xf32>
    %436 = arith.negf %435 : vector<8x96xf32>
    %437 = math.exp %436 : vector<8x96xf32>
    %cst_93 = arith.constant 1.000000e+00 : f32
    %438 = vector.broadcast %cst_93 : f32 to vector<8x96xf32>
    %439 = arith.addf %438, %437 : vector<8x96xf32>
    %440 = arith.divf %438, %439 : vector<8x96xf32>
    %441 = vector.extract_strided_slice %434 {offsets = [0, 96], sizes = [8, 32], strides = [1, 1]} : vector<8x128xf32> to vector<8x32xf32>
    %442 = math.tanh %441 : vector<8x32xf32>
    %443 = vector.extract_strided_slice %440 {offsets = [0, 0], sizes = [8, 32], strides = [1, 1]} : vector<8x96xf32> to vector<8x32xf32>
    %444 = vector.extract_strided_slice %440 {offsets = [0, 32], sizes = [8, 32], strides = [1, 1]} : vector<8x96xf32> to vector<8x32xf32>
    %445 = vector.extract_strided_slice %440 {offsets = [0, 64], sizes = [8, 32], strides = [1, 1]} : vector<8x96xf32> to vector<8x32xf32>
    %446 = arith.mulf %444, %428 : vector<8x32xf32>
    %447 = arith.mulf %443, %442 : vector<8x32xf32>
    %448 = arith.addf %446, %447 : vector<8x32xf32>
    %449 = math.tanh %448 : vector<8x32xf32>
    %450 = arith.mulf %445, %449 : vector<8x32xf32>
    %451 = vector.extract_strided_slice %368 {offsets = [32, 0], sizes = [8, 128], strides = [1, 1]} : vector<64x128xf32> to vector<8x128xf32>
    %452 = arith.truncf %450 : vector<8x32xf32> to vector<8x32xbf16>
    %cst_94 = arith.constant dense<0.000000e+00> : vector<8x128xf32>
    %453 = tpu.matmul %452, %367, %cst_94 {dimension_numbers = #tpu.dot_dimension_numbers<[1], [0], [0], [1], [0, 0, 1, 1], [], []>} : vector<8x32xbf16>, vector<32x128xbf16>, vector<8x128xf32> -> vector<8x128xf32>
    %454 = arith.addf %451, %453 : vector<8x128xf32>
    %455 = vector.extract_strided_slice %454 {offsets = [0, 0], sizes = [8, 96], strides = [1, 1]} : vector<8x128xf32> to vector<8x96xf32>
    %456 = arith.negf %455 : vector<8x96xf32>
    %457 = math.exp %456 : vector<8x96xf32>
    %cst_95 = arith.constant 1.000000e+00 : f32
    %458 = vector.broadcast %cst_95 : f32 to vector<8x96xf32>
    %459 = arith.addf %458, %457 : vector<8x96xf32>
    %460 = arith.divf %458, %459 : vector<8x96xf32>
    %461 = vector.extract_strided_slice %454 {offsets = [0, 96], sizes = [8, 32], strides = [1, 1]} : vector<8x128xf32> to vector<8x32xf32>
    %462 = math.tanh %461 : vector<8x32xf32>
    %463 = vector.extract_strided_slice %460 {offsets = [0, 0], sizes = [8, 32], strides = [1, 1]} : vector<8x96xf32> to vector<8x32xf32>
    %464 = vector.extract_strided_slice %460 {offsets = [0, 32], sizes = [8, 32], strides = [1, 1]} : vector<8x96xf32> to vector<8x32xf32>
    %465 = vector.extract_strided_slice %460 {offsets = [0, 64], sizes = [8, 32], strides = [1, 1]} : vector<8x96xf32> to vector<8x32xf32>
    %466 = arith.mulf %464, %448 : vector<8x32xf32>
    %467 = arith.mulf %463, %462 : vector<8x32xf32>
    %468 = arith.addf %466, %467 : vector<8x32xf32>
    %469 = math.tanh %468 : vector<8x32xf32>
    %470 = arith.mulf %465, %469 : vector<8x32xf32>
    %471 = vector.extract_strided_slice %368 {offsets = [40, 0], sizes = [8, 128], strides = [1, 1]} : vector<64x128xf32> to vector<8x128xf32>
    %472 = arith.truncf %470 : vector<8x32xf32> to vector<8x32xbf16>
    %cst_96 = arith.constant dense<0.000000e+00> : vector<8x128xf32>
    %473 = tpu.matmul %472, %367, %cst_96 {dimension_numbers = #tpu.dot_dimension_numbers<[1], [0], [0], [1], [0, 0, 1, 1], [], []>} : vector<8x32xbf16>, vector<32x128xbf16>, vector<8x128xf32> -> vector<8x128xf32>
    %474 = arith.addf %471, %473 : vector<8x128xf32>
    %475 = vector.extract_strided_slice %474 {offsets = [0, 0], sizes = [8, 96], strides = [1, 1]} : vector<8x128xf32> to vector<8x96xf32>
    %476 = arith.negf %475 : vector<8x96xf32>
    %477 = math.exp %476 : vector<8x96xf32>
    %cst_97 = arith.constant 1.000000e+00 : f32
    %478 = vector.broadcast %cst_97 : f32 to vector<8x96xf32>
    %479 = arith.addf %478, %477 : vector<8x96xf32>
    %480 = arith.divf %478, %479 : vector<8x96xf32>
    %481 = vector.extract_strided_slice %474 {offsets = [0, 96], sizes = [8, 32], strides = [1, 1]} : vector<8x128xf32> to vector<8x32xf32>
    %482 = math.tanh %481 : vector<8x32xf32>
    %483 = vector.extract_strided_slice %480 {offsets = [0, 0], sizes = [8, 32], strides = [1, 1]} : vector<8x96xf32> to vector<8x32xf32>
    %484 = vector.extract_strided_slice %480 {offsets = [0, 32], sizes = [8, 32], strides = [1, 1]} : vector<8x96xf32> to vector<8x32xf32>
    %485 = vector.extract_strided_slice %480 {offsets = [0, 64], sizes = [8, 32], strides = [1, 1]} : vector<8x96xf32> to vector<8x32xf32>
    %486 = arith.mulf %484, %468 : vector<8x32xf32>
    %487 = arith.mulf %483, %482 : vector<8x32xf32>
    %488 = arith.addf %486, %487 : vector<8x32xf32>
    %489 = math.tanh %488 : vector<8x32xf32>
    %490 = arith.mulf %485, %489 : vector<8x32xf32>
    %491 = vector.extract_strided_slice %368 {offsets = [48, 0], sizes = [8, 128], strides = [1, 1]} : vector<64x128xf32> to vector<8x128xf32>
    %492 = arith.truncf %490 : vector<8x32xf32> to vector<8x32xbf16>
    %cst_98 = arith.constant dense<0.000000e+00> : vector<8x128xf32>
    %493 = tpu.matmul %492, %367, %cst_98 {dimension_numbers = #tpu.dot_dimension_numbers<[1], [0], [0], [1], [0, 0, 1, 1], [], []>} : vector<8x32xbf16>, vector<32x128xbf16>, vector<8x128xf32> -> vector<8x128xf32>
    %494 = arith.addf %491, %493 : vector<8x128xf32>
    %495 = vector.extract_strided_slice %494 {offsets = [0, 0], sizes = [8, 96], strides = [1, 1]} : vector<8x128xf32> to vector<8x96xf32>
    %496 = arith.negf %495 : vector<8x96xf32>
    %497 = math.exp %496 : vector<8x96xf32>
    %cst_99 = arith.constant 1.000000e+00 : f32
    %498 = vector.broadcast %cst_99 : f32 to vector<8x96xf32>
    %499 = arith.addf %498, %497 : vector<8x96xf32>
    %500 = arith.divf %498, %499 : vector<8x96xf32>
    %501 = vector.extract_strided_slice %494 {offsets = [0, 96], sizes = [8, 32], strides = [1, 1]} : vector<8x128xf32> to vector<8x32xf32>
    %502 = math.tanh %501 : vector<8x32xf32>
    %503 = vector.extract_strided_slice %500 {offsets = [0, 0], sizes = [8, 32], strides = [1, 1]} : vector<8x96xf32> to vector<8x32xf32>
    %504 = vector.extract_strided_slice %500 {offsets = [0, 32], sizes = [8, 32], strides = [1, 1]} : vector<8x96xf32> to vector<8x32xf32>
    %505 = vector.extract_strided_slice %500 {offsets = [0, 64], sizes = [8, 32], strides = [1, 1]} : vector<8x96xf32> to vector<8x32xf32>
    %506 = arith.mulf %504, %488 : vector<8x32xf32>
    %507 = arith.mulf %503, %502 : vector<8x32xf32>
    %508 = arith.addf %506, %507 : vector<8x32xf32>
    %509 = math.tanh %508 : vector<8x32xf32>
    %510 = arith.mulf %505, %509 : vector<8x32xf32>
    %511 = vector.extract_strided_slice %368 {offsets = [56, 0], sizes = [8, 128], strides = [1, 1]} : vector<64x128xf32> to vector<8x128xf32>
    %512 = arith.truncf %510 : vector<8x32xf32> to vector<8x32xbf16>
    %cst_100 = arith.constant dense<0.000000e+00> : vector<8x128xf32>
    %513 = tpu.matmul %512, %367, %cst_100 {dimension_numbers = #tpu.dot_dimension_numbers<[1], [0], [0], [1], [0, 0, 1, 1], [], []>} : vector<8x32xbf16>, vector<32x128xbf16>, vector<8x128xf32> -> vector<8x128xf32>
    %514 = arith.addf %511, %513 : vector<8x128xf32>
    %515 = vector.extract_strided_slice %514 {offsets = [0, 0], sizes = [8, 96], strides = [1, 1]} : vector<8x128xf32> to vector<8x96xf32>
    %516 = arith.negf %515 : vector<8x96xf32>
    %517 = math.exp %516 : vector<8x96xf32>
    %cst_101 = arith.constant 1.000000e+00 : f32
    %518 = vector.broadcast %cst_101 : f32 to vector<8x96xf32>
    %519 = arith.addf %518, %517 : vector<8x96xf32>
    %520 = arith.divf %518, %519 : vector<8x96xf32>
    %521 = vector.extract_strided_slice %514 {offsets = [0, 96], sizes = [8, 32], strides = [1, 1]} : vector<8x128xf32> to vector<8x32xf32>
    %522 = math.tanh %521 : vector<8x32xf32>
    %523 = vector.extract_strided_slice %520 {offsets = [0, 0], sizes = [8, 32], strides = [1, 1]} : vector<8x96xf32> to vector<8x32xf32>
    %524 = vector.extract_strided_slice %520 {offsets = [0, 32], sizes = [8, 32], strides = [1, 1]} : vector<8x96xf32> to vector<8x32xf32>
    %525 = vector.extract_strided_slice %520 {offsets = [0, 64], sizes = [8, 32], strides = [1, 1]} : vector<8x96xf32> to vector<8x32xf32>
    %526 = arith.mulf %524, %508 : vector<8x32xf32>
    %527 = arith.mulf %523, %522 : vector<8x32xf32>
    %528 = arith.addf %526, %527 : vector<8x32xf32>
    %529 = math.tanh %528 : vector<8x32xf32>
    %530 = arith.mulf %525, %529 : vector<8x32xf32>
    %c0_102 = arith.constant 0 : index
    %c0_103 = arith.constant 0 : index
    %531 = vector.load %arg9[%c0_102, %c0_103] : memref<32x128xbf16, #tpu.memory_space<vmem>>, vector<32x128xbf16>
    %532 = vector.extract_strided_slice %366 {offsets = [0, 128], sizes = [64, 128], strides = [1, 1]} : vector<64x256xf32> to vector<64x128xf32>
    %cst_104 = arith.constant 0.000000e+00 : f32
    %533 = vector.broadcast %cst_104 : f32 to vector<8x32xf32>
    %cst_105 = arith.constant 0.000000e+00 : f32
    %534 = vector.broadcast %cst_105 : f32 to vector<8x32xf32>
    %535 = vector.extract_strided_slice %532 {offsets = [56, 0], sizes = [8, 128], strides = [1, 1]} : vector<64x128xf32> to vector<8x128xf32>
    %536 = arith.truncf %533 : vector<8x32xf32> to vector<8x32xbf16>
    %cst_106 = arith.constant dense<0.000000e+00> : vector<8x128xf32>
    %537 = tpu.matmul %536, %531, %cst_106 {dimension_numbers = #tpu.dot_dimension_numbers<[1], [0], [0], [1], [0, 0, 1, 1], [], []>} : vector<8x32xbf16>, vector<32x128xbf16>, vector<8x128xf32> -> vector<8x128xf32>
    %538 = arith.addf %535, %537 : vector<8x128xf32>
    %539 = vector.extract_strided_slice %538 {offsets = [0, 0], sizes = [8, 96], strides = [1, 1]} : vector<8x128xf32> to vector<8x96xf32>
    %540 = arith.negf %539 : vector<8x96xf32>
    %541 = math.exp %540 : vector<8x96xf32>
    %cst_107 = arith.constant 1.000000e+00 : f32
    %542 = vector.broadcast %cst_107 : f32 to vector<8x96xf32>
    %543 = arith.addf %542, %541 : vector<8x96xf32>
    %544 = arith.divf %542, %543 : vector<8x96xf32>
    %545 = vector.extract_strided_slice %538 {offsets = [0, 96], sizes = [8, 32], strides = [1, 1]} : vector<8x128xf32> to vector<8x32xf32>
    %546 = math.tanh %545 : vector<8x32xf32>
    %547 = vector.extract_strided_slice %544 {offsets = [0, 0], sizes = [8, 32], strides = [1, 1]} : vector<8x96xf32> to vector<8x32xf32>
    %548 = vector.extract_strided_slice %544 {offsets = [0, 32], sizes = [8, 32], strides = [1, 1]} : vector<8x96xf32> to vector<8x32xf32>
    %549 = vector.extract_strided_slice %544 {offsets = [0, 64], sizes = [8, 32], strides = [1, 1]} : vector<8x96xf32> to vector<8x32xf32>
    %550 = arith.mulf %548, %534 : vector<8x32xf32>
    %551 = arith.mulf %547, %546 : vector<8x32xf32>
    %552 = arith.addf %550, %551 : vector<8x32xf32>
    %553 = math.tanh %552 : vector<8x32xf32>
    %554 = arith.mulf %549, %553 : vector<8x32xf32>
    %555 = vector.extract_strided_slice %532 {offsets = [48, 0], sizes = [8, 128], strides = [1, 1]} : vector<64x128xf32> to vector<8x128xf32>
    %556 = arith.truncf %554 : vector<8x32xf32> to vector<8x32xbf16>
    %cst_108 = arith.constant dense<0.000000e+00> : vector<8x128xf32>
    %557 = tpu.matmul %556, %531, %cst_108 {dimension_numbers = #tpu.dot_dimension_numbers<[1], [0], [0], [1], [0, 0, 1, 1], [], []>} : vector<8x32xbf16>, vector<32x128xbf16>, vector<8x128xf32> -> vector<8x128xf32>
    %558 = arith.addf %555, %557 : vector<8x128xf32>
    %559 = vector.extract_strided_slice %558 {offsets = [0, 0], sizes = [8, 96], strides = [1, 1]} : vector<8x128xf32> to vector<8x96xf32>
    %560 = arith.negf %559 : vector<8x96xf32>
    %561 = math.exp %560 : vector<8x96xf32>
    %cst_109 = arith.constant 1.000000e+00 : f32
    %562 = vector.broadcast %cst_109 : f32 to vector<8x96xf32>
    %563 = arith.addf %562, %561 : vector<8x96xf32>
    %564 = arith.divf %562, %563 : vector<8x96xf32>
    %565 = vector.extract_strided_slice %558 {offsets = [0, 96], sizes = [8, 32], strides = [1, 1]} : vector<8x128xf32> to vector<8x32xf32>
    %566 = math.tanh %565 : vector<8x32xf32>
    %567 = vector.extract_strided_slice %564 {offsets = [0, 0], sizes = [8, 32], strides = [1, 1]} : vector<8x96xf32> to vector<8x32xf32>
    %568 = vector.extract_strided_slice %564 {offsets = [0, 32], sizes = [8, 32], strides = [1, 1]} : vector<8x96xf32> to vector<8x32xf32>
    %569 = vector.extract_strided_slice %564 {offsets = [0, 64], sizes = [8, 32], strides = [1, 1]} : vector<8x96xf32> to vector<8x32xf32>
    %570 = arith.mulf %568, %552 : vector<8x32xf32>
    %571 = arith.mulf %567, %566 : vector<8x32xf32>
    %572 = arith.addf %570, %571 : vector<8x32xf32>
    %573 = math.tanh %572 : vector<8x32xf32>
    %574 = arith.mulf %569, %573 : vector<8x32xf32>
    %575 = vector.extract_strided_slice %532 {offsets = [40, 0], sizes = [8, 128], strides = [1, 1]} : vector<64x128xf32> to vector<8x128xf32>
    %576 = arith.truncf %574 : vector<8x32xf32> to vector<8x32xbf16>
    %cst_110 = arith.constant dense<0.000000e+00> : vector<8x128xf32>
    %577 = tpu.matmul %576, %531, %cst_110 {dimension_numbers = #tpu.dot_dimension_numbers<[1], [0], [0], [1], [0, 0, 1, 1], [], []>} : vector<8x32xbf16>, vector<32x128xbf16>, vector<8x128xf32> -> vector<8x128xf32>
    %578 = arith.addf %575, %577 : vector<8x128xf32>
    %579 = vector.extract_strided_slice %578 {offsets = [0, 0], sizes = [8, 96], strides = [1, 1]} : vector<8x128xf32> to vector<8x96xf32>
    %580 = arith.negf %579 : vector<8x96xf32>
    %581 = math.exp %580 : vector<8x96xf32>
    %cst_111 = arith.constant 1.000000e+00 : f32
    %582 = vector.broadcast %cst_111 : f32 to vector<8x96xf32>
    %583 = arith.addf %582, %581 : vector<8x96xf32>
    %584 = arith.divf %582, %583 : vector<8x96xf32>
    %585 = vector.extract_strided_slice %578 {offsets = [0, 96], sizes = [8, 32], strides = [1, 1]} : vector<8x128xf32> to vector<8x32xf32>
    %586 = math.tanh %585 : vector<8x32xf32>
    %587 = vector.extract_strided_slice %584 {offsets = [0, 0], sizes = [8, 32], strides = [1, 1]} : vector<8x96xf32> to vector<8x32xf32>
    %588 = vector.extract_strided_slice %584 {offsets = [0, 32], sizes = [8, 32], strides = [1, 1]} : vector<8x96xf32> to vector<8x32xf32>
    %589 = vector.extract_strided_slice %584 {offsets = [0, 64], sizes = [8, 32], strides = [1, 1]} : vector<8x96xf32> to vector<8x32xf32>
    %590 = arith.mulf %588, %572 : vector<8x32xf32>
    %591 = arith.mulf %587, %586 : vector<8x32xf32>
    %592 = arith.addf %590, %591 : vector<8x32xf32>
    %593 = math.tanh %592 : vector<8x32xf32>
    %594 = arith.mulf %589, %593 : vector<8x32xf32>
    %595 = vector.extract_strided_slice %532 {offsets = [32, 0], sizes = [8, 128], strides = [1, 1]} : vector<64x128xf32> to vector<8x128xf32>
    %596 = arith.truncf %594 : vector<8x32xf32> to vector<8x32xbf16>
    %cst_112 = arith.constant dense<0.000000e+00> : vector<8x128xf32>
    %597 = tpu.matmul %596, %531, %cst_112 {dimension_numbers = #tpu.dot_dimension_numbers<[1], [0], [0], [1], [0, 0, 1, 1], [], []>} : vector<8x32xbf16>, vector<32x128xbf16>, vector<8x128xf32> -> vector<8x128xf32>
    %598 = arith.addf %595, %597 : vector<8x128xf32>
    %599 = vector.extract_strided_slice %598 {offsets = [0, 0], sizes = [8, 96], strides = [1, 1]} : vector<8x128xf32> to vector<8x96xf32>
    %600 = arith.negf %599 : vector<8x96xf32>
    %601 = math.exp %600 : vector<8x96xf32>
    %cst_113 = arith.constant 1.000000e+00 : f32
    %602 = vector.broadcast %cst_113 : f32 to vector<8x96xf32>
    %603 = arith.addf %602, %601 : vector<8x96xf32>
    %604 = arith.divf %602, %603 : vector<8x96xf32>
    %605 = vector.extract_strided_slice %598 {offsets = [0, 96], sizes = [8, 32], strides = [1, 1]} : vector<8x128xf32> to vector<8x32xf32>
    %606 = math.tanh %605 : vector<8x32xf32>
    %607 = vector.extract_strided_slice %604 {offsets = [0, 0], sizes = [8, 32], strides = [1, 1]} : vector<8x96xf32> to vector<8x32xf32>
    %608 = vector.extract_strided_slice %604 {offsets = [0, 32], sizes = [8, 32], strides = [1, 1]} : vector<8x96xf32> to vector<8x32xf32>
    %609 = vector.extract_strided_slice %604 {offsets = [0, 64], sizes = [8, 32], strides = [1, 1]} : vector<8x96xf32> to vector<8x32xf32>
    %610 = arith.mulf %608, %592 : vector<8x32xf32>
    %611 = arith.mulf %607, %606 : vector<8x32xf32>
    %612 = arith.addf %610, %611 : vector<8x32xf32>
    %613 = math.tanh %612 : vector<8x32xf32>
    %614 = arith.mulf %609, %613 : vector<8x32xf32>
    %615 = vector.extract_strided_slice %532 {offsets = [24, 0], sizes = [8, 128], strides = [1, 1]} : vector<64x128xf32> to vector<8x128xf32>
    %616 = arith.truncf %614 : vector<8x32xf32> to vector<8x32xbf16>
    %cst_114 = arith.constant dense<0.000000e+00> : vector<8x128xf32>
    %617 = tpu.matmul %616, %531, %cst_114 {dimension_numbers = #tpu.dot_dimension_numbers<[1], [0], [0], [1], [0, 0, 1, 1], [], []>} : vector<8x32xbf16>, vector<32x128xbf16>, vector<8x128xf32> -> vector<8x128xf32>
    %618 = arith.addf %615, %617 : vector<8x128xf32>
    %619 = vector.extract_strided_slice %618 {offsets = [0, 0], sizes = [8, 96], strides = [1, 1]} : vector<8x128xf32> to vector<8x96xf32>
    %620 = arith.negf %619 : vector<8x96xf32>
    %621 = math.exp %620 : vector<8x96xf32>
    %cst_115 = arith.constant 1.000000e+00 : f32
    %622 = vector.broadcast %cst_115 : f32 to vector<8x96xf32>
    %623 = arith.addf %622, %621 : vector<8x96xf32>
    %624 = arith.divf %622, %623 : vector<8x96xf32>
    %625 = vector.extract_strided_slice %618 {offsets = [0, 96], sizes = [8, 32], strides = [1, 1]} : vector<8x128xf32> to vector<8x32xf32>
    %626 = math.tanh %625 : vector<8x32xf32>
    %627 = vector.extract_strided_slice %624 {offsets = [0, 0], sizes = [8, 32], strides = [1, 1]} : vector<8x96xf32> to vector<8x32xf32>
    %628 = vector.extract_strided_slice %624 {offsets = [0, 32], sizes = [8, 32], strides = [1, 1]} : vector<8x96xf32> to vector<8x32xf32>
    %629 = vector.extract_strided_slice %624 {offsets = [0, 64], sizes = [8, 32], strides = [1, 1]} : vector<8x96xf32> to vector<8x32xf32>
    %630 = arith.mulf %628, %612 : vector<8x32xf32>
    %631 = arith.mulf %627, %626 : vector<8x32xf32>
    %632 = arith.addf %630, %631 : vector<8x32xf32>
    %633 = math.tanh %632 : vector<8x32xf32>
    %634 = arith.mulf %629, %633 : vector<8x32xf32>
    %635 = vector.extract_strided_slice %532 {offsets = [16, 0], sizes = [8, 128], strides = [1, 1]} : vector<64x128xf32> to vector<8x128xf32>
    %636 = arith.truncf %634 : vector<8x32xf32> to vector<8x32xbf16>
    %cst_116 = arith.constant dense<0.000000e+00> : vector<8x128xf32>
    %637 = tpu.matmul %636, %531, %cst_116 {dimension_numbers = #tpu.dot_dimension_numbers<[1], [0], [0], [1], [0, 0, 1, 1], [], []>} : vector<8x32xbf16>, vector<32x128xbf16>, vector<8x128xf32> -> vector<8x128xf32>
    %638 = arith.addf %635, %637 : vector<8x128xf32>
    %639 = vector.extract_strided_slice %638 {offsets = [0, 0], sizes = [8, 96], strides = [1, 1]} : vector<8x128xf32> to vector<8x96xf32>
    %640 = arith.negf %639 : vector<8x96xf32>
    %641 = math.exp %640 : vector<8x96xf32>
    %cst_117 = arith.constant 1.000000e+00 : f32
    %642 = vector.broadcast %cst_117 : f32 to vector<8x96xf32>
    %643 = arith.addf %642, %641 : vector<8x96xf32>
    %644 = arith.divf %642, %643 : vector<8x96xf32>
    %645 = vector.extract_strided_slice %638 {offsets = [0, 96], sizes = [8, 32], strides = [1, 1]} : vector<8x128xf32> to vector<8x32xf32>
    %646 = math.tanh %645 : vector<8x32xf32>
    %647 = vector.extract_strided_slice %644 {offsets = [0, 0], sizes = [8, 32], strides = [1, 1]} : vector<8x96xf32> to vector<8x32xf32>
    %648 = vector.extract_strided_slice %644 {offsets = [0, 32], sizes = [8, 32], strides = [1, 1]} : vector<8x96xf32> to vector<8x32xf32>
    %649 = vector.extract_strided_slice %644 {offsets = [0, 64], sizes = [8, 32], strides = [1, 1]} : vector<8x96xf32> to vector<8x32xf32>
    %650 = arith.mulf %648, %632 : vector<8x32xf32>
    %651 = arith.mulf %647, %646 : vector<8x32xf32>
    %652 = arith.addf %650, %651 : vector<8x32xf32>
    %653 = math.tanh %652 : vector<8x32xf32>
    %654 = arith.mulf %649, %653 : vector<8x32xf32>
    %655 = vector.extract_strided_slice %532 {offsets = [8, 0], sizes = [8, 128], strides = [1, 1]} : vector<64x128xf32> to vector<8x128xf32>
    %656 = arith.truncf %654 : vector<8x32xf32> to vector<8x32xbf16>
    %cst_118 = arith.constant dense<0.000000e+00> : vector<8x128xf32>
    %657 = tpu.matmul %656, %531, %cst_118 {dimension_numbers = #tpu.dot_dimension_numbers<[1], [0], [0], [1], [0, 0, 1, 1], [], []>} : vector<8x32xbf16>, vector<32x128xbf16>, vector<8x128xf32> -> vector<8x128xf32>
    %658 = arith.addf %655, %657 : vector<8x128xf32>
    %659 = vector.extract_strided_slice %658 {offsets = [0, 0], sizes = [8, 96], strides = [1, 1]} : vector<8x128xf32> to vector<8x96xf32>
    %660 = arith.negf %659 : vector<8x96xf32>
    %661 = math.exp %660 : vector<8x96xf32>
    %cst_119 = arith.constant 1.000000e+00 : f32
    %662 = vector.broadcast %cst_119 : f32 to vector<8x96xf32>
    %663 = arith.addf %662, %661 : vector<8x96xf32>
    %664 = arith.divf %662, %663 : vector<8x96xf32>
    %665 = vector.extract_strided_slice %658 {offsets = [0, 96], sizes = [8, 32], strides = [1, 1]} : vector<8x128xf32> to vector<8x32xf32>
    %666 = math.tanh %665 : vector<8x32xf32>
    %667 = vector.extract_strided_slice %664 {offsets = [0, 0], sizes = [8, 32], strides = [1, 1]} : vector<8x96xf32> to vector<8x32xf32>
    %668 = vector.extract_strided_slice %664 {offsets = [0, 32], sizes = [8, 32], strides = [1, 1]} : vector<8x96xf32> to vector<8x32xf32>
    %669 = vector.extract_strided_slice %664 {offsets = [0, 64], sizes = [8, 32], strides = [1, 1]} : vector<8x96xf32> to vector<8x32xf32>
    %670 = arith.mulf %668, %652 : vector<8x32xf32>
    %671 = arith.mulf %667, %666 : vector<8x32xf32>
    %672 = arith.addf %670, %671 : vector<8x32xf32>
    %673 = math.tanh %672 : vector<8x32xf32>
    %674 = arith.mulf %669, %673 : vector<8x32xf32>
    %675 = vector.extract_strided_slice %532 {offsets = [0, 0], sizes = [8, 128], strides = [1, 1]} : vector<64x128xf32> to vector<8x128xf32>
    %676 = arith.truncf %674 : vector<8x32xf32> to vector<8x32xbf16>
    %cst_120 = arith.constant dense<0.000000e+00> : vector<8x128xf32>
    %677 = tpu.matmul %676, %531, %cst_120 {dimension_numbers = #tpu.dot_dimension_numbers<[1], [0], [0], [1], [0, 0, 1, 1], [], []>} : vector<8x32xbf16>, vector<32x128xbf16>, vector<8x128xf32> -> vector<8x128xf32>
    %678 = arith.addf %675, %677 : vector<8x128xf32>
    %679 = vector.extract_strided_slice %678 {offsets = [0, 0], sizes = [8, 96], strides = [1, 1]} : vector<8x128xf32> to vector<8x96xf32>
    %680 = arith.negf %679 : vector<8x96xf32>
    %681 = math.exp %680 : vector<8x96xf32>
    %cst_121 = arith.constant 1.000000e+00 : f32
    %682 = vector.broadcast %cst_121 : f32 to vector<8x96xf32>
    %683 = arith.addf %682, %681 : vector<8x96xf32>
    %684 = arith.divf %682, %683 : vector<8x96xf32>
    %685 = vector.extract_strided_slice %678 {offsets = [0, 96], sizes = [8, 32], strides = [1, 1]} : vector<8x128xf32> to vector<8x32xf32>
    %686 = math.tanh %685 : vector<8x32xf32>
    %687 = vector.extract_strided_slice %684 {offsets = [0, 0], sizes = [8, 32], strides = [1, 1]} : vector<8x96xf32> to vector<8x32xf32>
    %688 = vector.extract_strided_slice %684 {offsets = [0, 32], sizes = [8, 32], strides = [1, 1]} : vector<8x96xf32> to vector<8x32xf32>
    %689 = vector.extract_strided_slice %684 {offsets = [0, 64], sizes = [8, 32], strides = [1, 1]} : vector<8x96xf32> to vector<8x32xf32>
    %690 = arith.mulf %688, %672 : vector<8x32xf32>
    %691 = arith.mulf %687, %686 : vector<8x32xf32>
    %692 = arith.addf %690, %691 : vector<8x32xf32>
    %693 = math.tanh %692 : vector<8x32xf32>
    %694 = arith.mulf %689, %693 : vector<8x32xf32>
    %695 = tpu.concatenate %530, %694 in 1 : vector<8x32xf32>, vector<8x32xf32> -> vector<8x64xf32>
    %696 = arith.truncf %695 : vector<8x64xf32> to vector<8x64xbf16>
    %c0_122 = arith.constant 0 : index
    %c0_123 = arith.constant 0 : index
    %697 = vector.load %arg11[%c0_122, %c0_123] : memref<1x8xf32, #tpu.memory_space<vmem>>, vector<1x8xf32>
    %c0_124 = arith.constant 0 : index
    %c0_125 = arith.constant 0 : index
    %698 = vector.load %arg10[%c0_124, %c0_125] : memref<64x8xbf16, #tpu.memory_space<vmem>>, vector<64x8xbf16>
    %cst_126 = arith.constant dense<0.000000e+00> : vector<8x8xf32>
    %699 = tpu.matmul %696, %698, %cst_126 {dimension_numbers = #tpu.dot_dimension_numbers<[1], [0], [0], [1], [0, 0, 1, 1], [], []>} : vector<8x64xbf16>, vector<64x8xbf16>, vector<8x8xf32> -> vector<8x8xf32>
    %700 = vector.broadcast %697 : vector<1x8xf32> to vector<8x8xf32>
    %701 = arith.addf %700, %699 : vector<8x8xf32>
    %c0_127 = arith.constant 0 : index
    %c0_128 = arith.constant 0 : index
    %702 = vector.load %arg12[%c0_127, %c0_128] : memref<8x8xf32, #tpu.memory_space<vmem>>, vector<8x8xf32>
    tpu.vector_store %arg12[%c0_127, %c0_128], %701 {strides = array<i32>} : memref<8x8xf32, #tpu.memory_space<vmem>>, vector<8x8xf32>,
    return
  }
}

</mosaic_0001>

<llo_original>
// kernel: seq_classifier_forward.1
$region0: #{seq_classifier_forward.1}
  #allocation0 [shape = 'u32[]', space=smem, size = 0x4, offset = 0x4, fixed_abs, tag = 'smem constant byte address 0x4 - core index']
  #allocation1 [shape = 'u32[144,128]{1,0:T(1,128)}', space=vmem, size = 0x12000, scoped, tag = 'internal scratch']
  #allocation2 [shape = 'f32[64,64]{1,0:T(8,128)}', space=vmem, size = 0x8000, scoped, tag = 'scratch operand']
  %s0 = inlined_call_operand.vmem [shape: s32[64,1], index: 0, kind: input, shape index: {}]
  %s1 = inlined_call_operand.vmem [shape: bf16[32,32], index: 1, kind: input, shape index: {}]
  %s2 = inlined_call_operand.vmem [shape: bf16[32,256], index: 2, kind: input, shape index: {}]
  %s3 = inlined_call_operand.hbm [shape: f32[1,256], index: 3, kind: input, shape index: {}]
  %s4 = inlined_call_operand.vmem [shape: bf16[32,128], index: 4, kind: input, shape index: {}]
  %s5 = inlined_call_operand.vmem [shape: bf16[32,128], index: 5, kind: input, shape index: {}]
  %s6 = inlined_call_operand.vmem [shape: bf16[64,256], index: 6, kind: input, shape index: {}]
  %s7 = inlined_call_operand.hbm [shape: f32[1,256], index: 7, kind: input, shape index: {}]
  %s8 = inlined_call_operand.vmem [shape: bf16[32,128], index: 8, kind: input, shape index: {}]
  %s9 = inlined_call_operand.vmem [shape: bf16[32,128], index: 9, kind: input, shape index: {}]
  %s10 = inlined_call_operand.vmem [shape: bf16[64,8], index: 10, kind: input, shape index: {}]
  %s11 = inlined_call_operand.hbm [shape: f32[1,8], index: 11, kind: input, shape index: {}]
  %s12 = inlined_call_operand.vmem [shape: f32[8,8], index: 12, kind: output, shape index: {}]
  %s13 = sld [smem:[#allocation0]]
  $region70: #{seq_classifier_forward.1} parent=0
    _
  %s15 = ssub.s32 1, %s13
  %s16 = scalar_select 0, %s15, %s13
  $region1: #{seq_classifier_forward.1} parent=0
    #allocation3 [shape = 'u8[1024]{0}', space=vmem, size = 0x400, scoped, tag = 'input window, operand 3, single buffered']
    #allocation4 [shape = 's32[1]{0}', space=sflag, size = 0x4, scoped, tag = 'scoped memory for seq_classifier_forward.1']
    #allocation5 [shape = 'u8[1024]{0}', space=vmem, size = 0x400, scoped, tag = 'input window, operand 7, single buffered']
    #allocation6 [shape = 's32[1]{0}', space=sflag, size = 0x4, scoped, tag = 'scoped memory for seq_classifier_forward.1']
    #allocation7 [shape = 'u8[512]{0}', space=vmem, size = 0x400, scoped, tag = 'input window, operand 11, single buffered']
    %17 = vsyncpa [#allocation4], 0
    %18 = vsyncpa [#allocation6], 0
    // Predicated region
    $region2: #{seq_classifier_forward.1} parent=1 // pred_check
      _
    $region3: #{seq_classifier_forward.1} parent=1 // pred_check_branch
      %20 = sbr.rel (0) target = $region5
    $region4: #{seq_classifier_forward.1} parent=1 // pred_region
      _
    $region5: #{seq_classifier_forward.1} parent=1 // pred_fallthru
      _
    // Predicated region
    $region6: #{seq_classifier_forward.1} parent=1 // pred_check
      _
    $region7: #{seq_classifier_forward.1} parent=1 // pred_check_branch
      %22 = sbr.rel (0) target = $region9
    $region8: #{seq_classifier_forward.1} parent=1 // pred_region
      _
    $region9: #{seq_classifier_forward.1} parent=1 // pred_fallthru
      _
    // Predicated region
    $region10: #{seq_classifier_forward.1} parent=1 // pred_check
      _
    $region11: #{seq_classifier_forward.1} parent=1 // pred_check_branch
      %24 = sbr.rel (0) target = $region13
    $region12: #{seq_classifier_forward.1} parent=1 // pred_region
      _
    $region13: #{seq_classifier_forward.1} parent=1 // pred_fallthru
      _
    // Predicated region
    $region14: #{seq_classifier_forward.1} parent=1 // pred_check
      _
    $region15: #{seq_classifier_forward.1} parent=1 // pred_check_branch
      %26 = sbr.rel (0) target = $region17
    $region16: #{seq_classifier_forward.1} parent=1 // pred_region
      %s28 = ssub.s32 32, 32
      %29 = vsyncadd [#allocation4], %s28
      %s31 = sshll.u32 [#allocation3], 4
      %s32 = int_to_ptr.vmem [resolvable:$true] %s31
      %34 = dma.hbm_to_vmem [thread:$0]  %s3, 32, %s32, [#allocation4]
    $region17: #{seq_classifier_forward.1} parent=1 // pred_fallthru
      _
    // Predicated region
    $region18: #{seq_classifier_forward.1} parent=1 // pred_check
      _
    $region19: #{seq_classifier_forward.1} parent=1 // pred_check_branch
      %36 = sbr.rel (0) target = $region21
    $region20: #{seq_classifier_forward.1} parent=1 // pred_region
      _
    $region21: #{seq_classifier_forward.1} parent=1 // pred_fallthru
      _
    // Predicated region
    $region22: #{seq_classifier_forward.1} parent=1 // pred_check
      _
    $region23: #{seq_classifier_forward.1} parent=1 // pred_check_branch
      %38 = sbr.rel (0) target = $region25
    $region24: #{seq_classifier_forward.1} parent=1 // pred_region
      _
    $region25: #{seq_classifier_forward.1} parent=1 // pred_fallthru
      _
    // Predicated region
    $region26: #{seq_classifier_forward.1} parent=1 // pred_check
      _
    $region27: #{seq_classifier_forward.1} parent=1 // pred_check_branch
      %40 = sbr.rel (0) target = $region29
    $region28: #{seq_classifier_forward.1} parent=1 // pred_region
      _
    $region29: #{seq_classifier_forward.1} parent=1 // pred_fallthru
      _
    // Predicated region
    $region30: #{seq_classifier_forward.1} parent=1 // pred_check
      _
    $region31: #{seq_classifier_forward.1} parent=1 // pred_check_branch
      %42 = sbr.rel (0) target = $region33
    $region32: #{seq_classifier_forward.1} parent=1 // pred_region
      %s44 = ssub.s32 32, 32
      %45 = vsyncadd [#allocation6], %s44
      %s47 = sshll.u32 [#allocation5], 4
      %s48 = int_to_ptr.vmem [resolvable:$true] %s47
      %50 = dma.hbm_to_vmem [thread:$0]  %s7, 32, %s48, [#allocation6]
    $region33: #{seq_classifier_forward.1} parent=1 // pred_fallthru
      _
    // Predicated region
    $region34: #{seq_classifier_forward.1} parent=1 // pred_check
      _
    $region35: #{seq_classifier_forward.1} parent=1 // pred_check_branch
      %52 = sbr.rel (0) target = $region37
    $region36: #{seq_classifier_forward.1} parent=1 // pred_region
      _
    $region37: #{seq_classifier_forward.1} parent=1 // pred_fallthru
      _
    // Predicated region
    $region38: #{seq_classifier_forward.1} parent=1 // pred_check
      _
    $region39: #{seq_classifier_forward.1} parent=1 // pred_check_branch
      %54 = sbr.rel (0) target = $region41
    $region40: #{seq_classifier_forward.1} parent=1 // pred_region
      _
    $region41: #{seq_classifier_forward.1} parent=1 // pred_fallthru
      _
    // Predicated region
    $region42: #{seq_classifier_forward.1} parent=1 // pred_check
      _
    $region43: #{seq_classifier_forward.1} parent=1 // pred_check_branch
      %56 = sbr.rel (0) target = $region45
    $region44: #{seq_classifier_forward.1} parent=1 // pred_region
      _
    $region45: #{seq_classifier_forward.1} parent=1 // pred_fallthru
      _
    // Predicated region
    $region46: #{seq_classifier_forward.1} parent=1 // pred_check
      _
    $region47: #{seq_classifier_forward.1} parent=1 // pred_check_branch
      %58 = sbr.rel (0) target = $region49
    $region48: #{seq_classifier_forward.1} parent=1 // pred_region
      %s60 = ssub.s32 16, 16
      %61 = vsyncadd [#allocation6], %s60
      %s63 = sshll.u32 [#allocation7], 4
      %s64 = int_to_ptr.vmem [resolvable:$true] %s63
      %66 = dma.hbm_to_vmem [thread:$0]  %s11, 16, %s64, [#allocation6]
    $region49: #{seq_classifier_forward.1} parent=1 // pred_fallthru
      _
    // Predicated region
    $region50: #{seq_classifier_forward.1} parent=1 // pred_check
      _
    $region51: #{seq_classifier_forward.1} parent=1 // pred_check_branch
      %68 = sbr.rel (0) target = $region53
    $region52: #{seq_classifier_forward.1} parent=1 // pred_region
      %69 = dma.done [#allocation4], 32
    $region53: #{seq_classifier_forward.1} parent=1 // pred_fallthru
      _
    // Predicated region
    $region54: #{seq_classifier_forward.1} parent=1 // pred_check
      _
    $region55: #{seq_classifier_forward.1} parent=1 // pred_check_branch
      %71 = sbr.rel (0) target = $region57
    $region56: #{seq_classifier_forward.1} parent=1 // pred_region
      %72 = dma.done [#allocation6], 32
    $region57: #{seq_classifier_forward.1} parent=1 // pred_fallthru
      _
    // Predicated region
    $region58: #{seq_classifier_forward.1} parent=1 // pred_check
      _
    $region59: #{seq_classifier_forward.1} parent=1 // pred_check_branch
      %74 = sbr.rel (0) target = $region61
    $region60: #{seq_classifier_forward.1} parent=1 // pred_region
      %75 = dma.done [#allocation6], 16
    $region61: #{seq_classifier_forward.1} parent=1 // pred_fallthru
      _
    %v77 = vld [vmem:[%s0] sm:$0xff]
    %v78 = vld [vmem:[%s0 + $0x8] sm:$0xff]
    %v79 = vld [vmem:[%s0 + $0x10] sm:$0xff]
    %v80 = vld [vmem:[%s0 + $0x18] sm:$0xff]
    %v81 = vld [vmem:[%s0 + $0x20] sm:$0xff]
    %v82 = vld [vmem:[%s0 + $0x28] sm:$0xff]
    %v83 = vld [vmem:[%s0 + $0x30] sm:$0xff]
    %v84 = vld [vmem:[%s0 + $0x38] sm:$0xff]
    %v85 = vlaneseq
    %v86 = vand.u32 %v85, 127
    %87 = vset.pattern.permute.xlu0 0
    %88 = vperm.xlu0 %87, %v77
    %v89 = vpop.permute.xlu0 %88
    %90 = vset.pattern.permute.xlu0 0
    %91 = vperm.xlu0 %90, %v78
    %v92 = vpop.permute.xlu0 %91
    %93 = vset.pattern.permute.xlu0 0
    %94 = vperm.xlu0 %93, %v79
    %v95 = vpop.permute.xlu0 %94
    %96 = vset.pattern.permute.xlu0 0
    %97 = vperm.xlu0 %96, %v80
    %v98 = vpop.permute.xlu0 %97
    %99 = vset.pattern.permute.xlu0 0
    %100 = vperm.xlu0 %99, %v81
    %v101 = vpop.permute.xlu0 %100
    %102 = vset.pattern.permute.xlu0 0
    %103 = vperm.xlu0 %102, %v82
    %v104 = vpop.permute.xlu0 %103
    %105 = vset.pattern.permute.xlu0 0
    %106 = vperm.xlu0 %105, %v83
    %v107 = vpop.permute.xlu0 %106
    %108 = vset.pattern.permute.xlu0 0
    %109 = vperm.xlu0 %108, %v84
    %v110 = vpop.permute.xlu0 %109
    %vm111 = vcmp.eq.s32.totalorder %v89, %v86
    %vm112 = vcmp.eq.s32.totalorder %v92, %v86
    %vm113 = vcmp.eq.s32.totalorder %v95, %v86
    %vm114 = vcmp.eq.s32.totalorder %v98, %v86
    %vm115 = vcmp.eq.s32.totalorder %v101, %v86
    %vm116 = vcmp.eq.s32.totalorder %v104, %v86
    %vm117 = vcmp.eq.s32.totalorder %v107, %v86
    %vm118 = vcmp.eq.s32.totalorder %v110, %v86
    %v119 = vsel %vm111, 1.0, 0.0
    %v120 = vsel %vm112, 1.0, 0.0
    %v121 = vsel %vm113, 1.0, 0.0
    %v122 = vsel %vm114, 1.0, 0.0
    %v123 = vsel %vm115, 1.0, 0.0
    %v124 = vsel %vm116, 1.0, 0.0
    %v125 = vsel %vm117, 1.0, 0.0
    %v126 = vsel %vm118, 1.0, 0.0
    %v127 = vpack.c.bf16 %v120, %v119
    %v128 = vpack.c.bf16 %v122, %v121
    %v129 = vpack.c.bf16 %v124, %v123
    %v130 = vpack.c.bf16 %v126, %v125
    %v131 = vld [vmem:[%s1] sm:$0xf]
    %v132 = vld [vmem:[%s1 + $0x4] sm:$0xf]
    %v133 = vld [vmem:[%s1 + $0x8] sm:$0xf]
    %v134 = vld [vmem:[%s1 + $0xc] sm:$0xf]
    %v139 = vunpack.c.l.b16 %v131
    %v140 = vunpack.c.l.b16 %v132
    %v141 = vunpack.c.l.b16 %v133
    %v142 = vunpack.c.l.b16 %v134
    %v143 = vpack.c.b16 %v140, %v139
    %v144 = vpack.c.b16 %v142, %v141
    %vm147 = vcmask 261120
    %v149 = vsel %vm147, %v127, 0
    %v152 = vsel %vm147, %v128, 0
    %v155 = vsel %vm147, %v129, 0
    %v158 = vsel %vm147, %v130, 0
    %160 = vmatprep.subr.bf16.mxu0 0
    %161 = vmatpush1.bf16.msra.mxu0 %v143
    %162 = vmatprep.subr.bf16.mxu0 0
    %163 = vmatpush1.bf16.msra.mxu0 %v144
    %164 = vmatprep.subr.bf16.mxu0 0
    %165 = vmatpush1.bf16.msra.mxu0 0
    %166 = vmatprep.subr.bf16.mxu0 0
    %167 = vmatpush1.bf16.msra.mxu0 0
    %168 = vmatprep.subr.bf16.mxu0 0
    %169 = vmatpush1.bf16.msra.mxu0 0
    %170 = vmatprep.subr.bf16.mxu0 0
    %171 = vmatpush1.bf16.msra.mxu0 0
    %172 = vmatprep.subr.bf16.mxu0 0
    %173 = vmatpush1.bf16.msra.mxu0 0
    %174 = vmatprep.subr.bf16.mxu0 0
    %175 = vmatpush1.bf16.msra.mxu0 0
    %176 = vmatprep.subr.bf16.mxu0 0
    %177 = vmatpush1.bf16.msra.mxu0 0
    %178 = vmatprep.subr.bf16.mxu0 0
    %179 = vmatpush1.bf16.msra.mxu0 0
    %180 = vmatprep.subr.bf16.mxu0 0
    %181 = vmatpush1.bf16.msra.mxu0 0
    %182 = vmatprep.subr.bf16.mxu0 0
    %183 = vmatpush1.bf16.msra.mxu0 0
    %184 = vmatprep.subr.bf16.mxu0 0
    %185 = vmatpush1.bf16.msra.mxu0 0
    %186 = vmatprep.subr.bf16.mxu0 0
    %187 = vmatpush1.bf16.msra.mxu0 0
    %188 = vmatprep.subr.bf16.mxu0 0
    %189 = vmatpush1.bf16.msra.mxu0 0
    %190 = vmatprep.subr.bf16.mxu0 0
    %191 = vmatpush1.bf16.msra.mxu0 0
    %192 = vmatprep.mubr.bf16.mxu0 0
    %193 = vmatmul.mubr.bf16.gmra.mrb[0].mxu0 %v149
    %v194 = vpop.f32.mrb[0].mxu0
    %v195 = vadd.f32 0.0, %v194
    %v196 = vpop.f32.mrb[0].mxu0
    %v197 = vpop.f32.mrb[0].mxu0
    %v198 = vadd.f32 0.0, %v197
    %v199 = vpop.f32.mrb[0].mxu0
    %200 = vmatprep.mubr.bf16.mxu0 0
    %201 = vmatmul.mubr.bf16.gmra.mrb[0].mxu0 %v152
    %v202 = vpop.f32.mrb[0].mxu0
    %v203 = vadd.f32 0.0, %v202
    %v204 = vpop.f32.mrb[0].mxu0
    %v205 = vpop.f32.mrb[0].mxu0
    %v206 = vadd.f32 0.0, %v205
    %v207 = vpop.f32.mrb[0].mxu0
    %208 = vmatprep.mubr.bf16.mxu0 0
    %209 = vmatmul.mubr.bf16.gmra.mrb[0].mxu0 %v155
    %v210 = vpop.f32.mrb[0].mxu0
    %v211 = vadd.f32 0.0, %v210
    %v212 = vpop.f32.mrb[0].mxu0
    %v213 = vpop.f32.mrb[0].mxu0
    %v214 = vadd.f32 0.0, %v213
    %v215 = vpop.f32.mrb[0].mxu0
    %216 = vmatprep.mubr.bf16.mxu0 0
    %217 = vmatmul.mubr.bf16.gmra.mrb[0].mxu0 %v158
    %v218 = vpop.f32.mrb[0].mxu0
    %v219 = vadd.f32 0.0, %v218
    %v220 = vpop.f32.mrb[0].mxu0
    %v221 = vpop.f32.mrb[0].mxu0
    %v222 = vadd.f32 0.0, %v221
    %v223 = vpop.f32.mrb[0].mxu0
    %224 = vdwg.mxu0
    %v225 = vpack.c.bf16 %v198, %v195
    %v226 = vpack.c.bf16 %v206, %v203
    %v227 = vpack.c.bf16 %v214, %v211
    %v228 = vpack.c.bf16 %v222, %v219
    %v229 = vld [vmem:[#allocation3] sm:$0x3]
    %v230 = vld [vmem:[%s2] sm:$0xff]
    %v231 = vld [vmem:[%s2 + $0x8] sm:$0xff]
    %v232 = vld [vmem:[%s2 + $0x10] sm:$0xff]
    %v233 = vld [vmem:[%s2 + $0x18] sm:$0xff]
    %v238 = vunpack.c.l.b16 %v230
    %v239 = vunpack.c.h.b16 %v230
    %v240 = vunpack.c.l.b16 %v231
    %v241 = vunpack.c.h.b16 %v231
    %v242 = vunpack.c.l.b16 %v232
    %v243 = vunpack.c.h.b16 %v232
    %v244 = vunpack.c.l.b16 %v233
    %v245 = vunpack.c.h.b16 %v233
    %v246 = vpack.c.b16 %v240, %v238
    %v247 = vpack.c.b16 %v241, %v239
    %v248 = vpack.c.b16 %v244, %v242
    %v249 = vpack.c.b16 %v245, %v243
    %v255 = vsel %vm147, %v225, 0
    %v258 = vsel %vm147, %v226, 0
    %v261 = vsel %vm147, %v227, 0
    %v264 = vsel %vm147, %v228, 0
    %266 = vmatprep.subr.bf16.mxu0 %v247
    %267 = vmatpush1.bf16.msra.mxu0 %v246
    %268 = vmatprep.subr.bf16.mxu0 %v249
    %269 = vmatpush1.bf16.msra.mxu0 %v248
    %270 = vmatprep.subr.bf16.mxu0 0
    %271 = vmatpush1.bf16.msra.mxu0 0
    %272 = vmatprep.subr.bf16.mxu0 0
    %273 = vmatpush1.bf16.msra.mxu0 0
    %274 = vmatprep.subr.bf16.mxu0 0
    %275 = vmatpush1.bf16.msra.mxu0 0
    %276 = vmatprep.subr.bf16.mxu0 0
    %277 = vmatpush1.bf16.msra.mxu0 0
    %278 = vmatprep.subr.bf16.mxu0 0
    %279 = vmatpush1.bf16.msra.mxu0 0
    %280 = vmatprep.subr.bf16.mxu0 0
    %281 = vmatpush1.bf16.msra.mxu0 0
    %282 = vmatprep.subr.bf16.mxu0 0
    %283 = vmatpush1.bf16.msra.mxu0 0
    %284 = vmatprep.subr.bf16.mxu0 0
    %285 = vmatpush1.bf16.msra.mxu0 0
    %286 = vmatprep.subr.bf16.mxu0 0
    %287 = vmatpush1.bf16.msra.mxu0 0
    %288 = vmatprep.subr.bf16.mxu0 0
    %289 = vmatpush1.bf16.msra.mxu0 0
    %290 = vmatprep.subr.bf16.mxu0 0
    %291 = vmatpush1.bf16.msra.mxu0 0
    %292 = vmatprep.subr.bf16.mxu0 0
    %293 = vmatpush1.bf16.msra.mxu0 0
    %294 = vmatprep.subr.bf16.mxu0 0
    %295 = vmatpush1.bf16.msra.mxu0 0
    %296 = vmatprep.subr.bf16.mxu0 0
    %297 = vmatpush1.bf16.msra.mxu0 0
    %298 = vmatprep.mubr.bf16.mxu0 0
    %299 = vmatmul.mubr.bf16.gmra.mrb[0].mxu0 %v255
    %v300 = vpop.f32.mrb[0].mxu0
    %v301 = vadd.f32 0.0, %v300
    %v302 = vpop.f32.mrb[0].mxu0
    %v303 = vadd.f32 0.0, %v302
    %v304 = vpop.f32.mrb[0].mxu0
    %v305 = vadd.f32 0.0, %v304
    %v306 = vpop.f32.mrb[0].mxu0
    %v307 = vadd.f32 0.0, %v306
    %308 = vmatprep.mubr.bf16.mxu0 0
    %309 = vmatmul.mubr.bf16.gmra.mrb[0].mxu0 %v258
    %v310 = vpop.f32.mrb[0].mxu0
    %v311 = vadd.f32 0.0, %v310
    %v312 = vpop.f32.mrb[0].mxu0
    %v313 = vadd.f32 0.0, %v312
    %v314 = vpop.f32.mrb[0].mxu0
    %v315 = vadd.f32 0.0, %v314
    %v316 = vpop.f32.mrb[0].mxu0
    %v317 = vadd.f32 0.0, %v316
    %318 = vmatprep.mubr.bf16.mxu0 0
    %319 = vmatmul.mubr.bf16.gmra.mrb[0].mxu0 %v261
    %v320 = vpop.f32.mrb[0].mxu0
    %v321 = vadd.f32 0.0, %v320
    %v322 = vpop.f32.mrb[0].mxu0
    %v323 = vadd.f32 0.0, %v322
    %v324 = vpop.f32.mrb[0].mxu0
    %v325 = vadd.f32 0.0, %v324
    %v326 = vpop.f32.mrb[0].mxu0
    %v327 = vadd.f32 0.0, %v326
    %328 = vmatprep.mubr.bf16.mxu0 0
    %329 = vmatmul.mubr.bf16.gmra.mrb[0].mxu0 %v264
    %v330 = vpop.f32.mrb[0].mxu0
    %v331 = vadd.f32 0.0, %v330
    %v332 = vpop.f32.mrb[0].mxu0
    %v333 = vadd.f32 0.0, %v332
    %v334 = vpop.f32.mrb[0].mxu0
    %v335 = vadd.f32 0.0, %v334
    %v336 = vpop.f32.mrb[0].mxu0
    %v337 = vadd.f32 0.0, %v336
    %338 = vdwg.mxu0
    %v340 = vlaneseq
    %v341 = vshrl.u32 %v340, 7
    %v342 = vsub.s32 0, %v341
    %v343 = vrot.slane %v229, %v342
    %v344 = vlaneseq
    %v345 = vshrl.u32 %v344, 7
    %v346 = vsub.s32 1, %v345
    %v347 = vrot.slane %v229, %v346
    %v350 = vadd.f32 %v343, %v301
    %v351 = vadd.f32 %v347, %v303
    %v352 = vadd.f32 %v343, %v305
    %v353 = vadd.f32 %v347, %v307
    %v354 = vadd.f32 %v343, %v311
    %v355 = vadd.f32 %v347, %v313
    %v356 = vadd.f32 %v343, %v315
    %v357 = vadd.f32 %v347, %v317
    %v358 = vadd.f32 %v343, %v321
    %v359 = vadd.f32 %v347, %v323
    %v360 = vadd.f32 %v343, %v325
    %v361 = vadd.f32 %v347, %v327
    %v362 = vadd.f32 %v343, %v331
    %v363 = vadd.f32 %v347, %v333
    %v364 = vadd.f32 %v343, %v335
    %v365 = vadd.f32 %v347, %v337
    %v366 = vld [vmem:[%s4] sm:$0xf]
    %v367 = vld [vmem:[%s4 + $0x4] sm:$0xf]
    %v368 = vld [vmem:[%s4 + $0x8] sm:$0xf]
    %v369 = vld [vmem:[%s4 + $0xc] sm:$0xf]
    %v374 = vunpack.c.l.b16 %v366
    %v375 = vunpack.c.l.b16 %v367
    %v376 = vunpack.c.l.b16 %v368
    %v377 = vunpack.c.l.b16 %v369
    %v378 = vpack.c.b16 %v375, %v374
    %v379 = vpack.c.b16 %v377, %v376
    %v383 = vsel %vm147, 0, 0
    %385 = vmatprep.subr.bf16.mxu0 0
    %386 = vmatpush1.bf16.msra.mxu0 %v378
    %387 = vmatprep.subr.bf16.mxu0 0
    %388 = vmatpush1.bf16.msra.mxu0 %v379
    %389 = vmatprep.subr.bf16.mxu0 0
    %390 = vmatpush1.bf16.msra.mxu0 0
    %391 = vmatprep.subr.bf16.mxu0 0
    %392 = vmatpush1.bf16.msra.mxu0 0
    %393 = vmatprep.subr.bf16.mxu0 0
    %394 = vmatpush1.bf16.msra.mxu0 0
    %395 = vmatprep.subr.bf16.mxu0 0
    %396 = vmatpush1.bf16.msra.mxu0 0
    %397 = vmatprep.subr.bf16.mxu0 0
    %398 = vmatpush1.bf16.msra.mxu0 0
    %399 = vmatprep.subr.bf16.mxu0 0
    %400 = vmatpush1.bf16.msra.mxu0 0
    %401 = vmatprep.subr.bf16.mxu0 0
    %402 = vmatpush1.bf16.msra.mxu0 0
    %403 = vmatprep.subr.bf16.mxu0 0
    %404 = vmatpush1.bf16.msra.mxu0 0
    %405 = vmatprep.subr.bf16.mxu0 0
    %406 = vmatpush1.bf16.msra.mxu0 0
    %407 = vmatprep.subr.bf16.mxu0 0
    %408 = vmatpush1.bf16.msra.mxu0 0
    %409 = vmatprep.subr.bf16.mxu0 0
    %410 = vmatpush1.bf16.msra.mxu0 0
    %411 = vmatprep.subr.bf16.mxu0 0
    %412 = vmatpush1.bf16.msra.mxu0 0
    %413 = vmatprep.subr.bf16.mxu0 0
    %414 = vmatpush1.bf16.msra.mxu0 0
    %415 = vmatprep.subr.bf16.mxu0 0
    %416 = vmatpush1.bf16.msra.mxu0 0
    %417 = vmatprep.mubr.bf16.mxu0 0
    %418 = vmatmul.mubr.bf16.gmra.mrb[0].mxu0 %v383
    %v419 = vpop.f32.mrb[0].mxu0
    %v420 = vadd.f32 0.0, %v419
    %v421 = vpop.f32.mrb[0].mxu0
    %v422 = vpop.f32.mrb[0].mxu0
    %v423 = vpop.f32.mrb[0].mxu0
    %424 = vdwg.mxu0
    %v425 = vadd.f32 %v350, %v420
    %v426 = vxor.u32 %v425, 2147483648
    %v427 = vmul.f32 %v426, 1.442695
    %v428 = vpow.pop %v427
    %v429 = vadd.f32 %v428, 1.0
    %v430 = vrcp.pop %v429
    %v431 = vmul.f32 1.0, %v430
    %v432 = vtanh.pop %v425
    %v433 = vmul.f32 %v431, 0.0
    %435 = vrot.lane.b32.xlu0 %v432, 32
    %v436 = vpop.permute.xlu0 %435
    %v438 = vmul.f32 %v431, %v436
    %440 = vrot.lane.b32.xlu0 %v438, 32
    %v441 = vpop.permute.xlu0 %440
    %v443 = vadd.f32 %v433, %v441
    %v444 = vtanh.pop %v443
    %446 = vrot.lane.b32.xlu0 %v444, 32
    %v447 = vpop.permute.xlu0 %446
    %v449 = vmul.f32 %v431, %v447
    %451 = vrot.lane.b32.xlu0 %v449, 64
    %v452 = vpop.permute.xlu0 %451
    %454 = vst.msk [vmem:[#allocation2] sm:$0xff] %vm147, %v452
    %v455 = vpack.c.bf16 %v449, %v449
    %457 = vrot.lane.b32.xlu0 %v455, 64
    %v458 = vpop.permute.xlu0 %457
    %v460 = vsel %vm147, %v458, 0
    %462 = vmatprep.subr.bf16.mxu0 0
    %463 = vmatpush1.bf16.msra.mxu0 %v378
    %464 = vmatprep.subr.bf16.mxu0 0
    %465 = vmatpush1.bf16.msra.mxu0 %v379
    %466 = vmatprep.subr.bf16.mxu0 0
    %467 = vmatpush1.bf16.msra.mxu0 0
    %468 = vmatprep.subr.bf16.mxu0 0
    %469 = vmatpush1.bf16.msra.mxu0 0
    %470 = vmatprep.subr.bf16.mxu0 0
    %471 = vmatpush1.bf16.msra.mxu0 0
    %472 = vmatprep.subr.bf16.mxu0 0
    %473 = vmatpush1.bf16.msra.mxu0 0
    %474 = vmatprep.subr.bf16.mxu0 0
    %475 = vmatpush1.bf16.msra.mxu0 0
    %476 = vmatprep.subr.bf16.mxu0 0
    %477 = vmatpush1.bf16.msra.mxu0 0
    %478 = vmatprep.subr.bf16.mxu0 0
    %479 = vmatpush1.bf16.msra.mxu0 0
    %480 = vmatprep.subr.bf16.mxu0 0
    %481 = vmatpush1.bf16.msra.mxu0 0
    %482 = vmatprep.subr.bf16.mxu0 0
    %483 = vmatpush1.bf16.msra.mxu0 0
    %484 = vmatprep.subr.bf16.mxu0 0
    %485 = vmatpush1.bf16.msra.mxu0 0
    %486 = vmatprep.subr.bf16.mxu0 0
    %487 = vmatpush1.bf16.msra.mxu0 0
    %488 = vmatprep.subr.bf16.mxu0 0
    %489 = vmatpush1.bf16.msra.mxu0 0
    %490 = vmatprep.subr.bf16.mxu0 0
    %491 = vmatpush1.bf16.msra.mxu0 0
    %492 = vmatprep.subr.bf16.mxu0 0
    %493 = vmatpush1.bf16.msra.mxu0 0
    %494 = vmatprep.mubr.bf16.mxu0 0
    %495 = vmatmul.mubr.bf16.gmra.mrb[0].mxu0 %v460
    %v496 = vpop.f32.mrb[0].mxu0
    %v497 = vadd.f32 0.0, %v496
    %v498 = vpop.f32.mrb[0].mxu0
    %v499 = vpop.f32.mrb[0].mxu0
    %v500 = vpop.f32.mrb[0].mxu0
    %501 = vdwg.mxu0
    %v502 = vadd.f32 %v352, %v497
    %v503 = vxor.u32 %v502, 2147483648
    %v504 = vmul.f32 %v503, 1.442695
    %v505 = vpow.pop %v504
    %v506 = vadd.f32 %v505, 1.0
    %v507 = vrcp.pop %v506
    %v508 = vmul.f32 1.0, %v507
    %v509 = vtanh.pop %v502
    %v510 = vmul.f32 %v508, %v443
    %512 = vrot.lane.b32.xlu0 %v509, 32
    %v513 = vpop.permute.xlu0 %512
    %v515 = vmul.f32 %v508, %v513
    %517 = vrot.lane.b32.xlu0 %v515, 32
    %v518 = vpop.permute.xlu0 %517
    %v520 = vadd.f32 %v510, %v518
    %v521 = vtanh.pop %v520
    %523 = vrot.lane.b32.xlu0 %v521, 32
    %v524 = vpop.permute.xlu0 %523
    %v526 = vmul.f32 %v508, %v524
    %528 = vrot.lane.b32.xlu0 %v526, 64
    %v529 = vpop.permute.xlu0 %528
    %531 = vst.msk [vmem:[#allocation2 + $0x8] sm:$0xff] %vm147, %v529
    %v532 = vpack.c.bf16 %v526, %v526
    %534 = vrot.lane.b32.xlu0 %v532, 64
    %v535 = vpop.permute.xlu0 %534
    %v537 = vsel %vm147, %v535, 0
    %539 = vmatprep.subr.bf16.mxu0 0
    %540 = vmatpush1.bf16.msra.mxu0 %v378
    %541 = vmatprep.subr.bf16.mxu0 0
    %542 = vmatpush1.bf16.msra.mxu0 %v379
    %543 = vmatprep.subr.bf16.mxu0 0
    %544 = vmatpush1.bf16.msra.mxu0 0
    %545 = vmatprep.subr.bf16.mxu0 0
    %546 = vmatpush1.bf16.msra.mxu0 0
    %547 = vmatprep.subr.bf16.mxu0 0
    %548 = vmatpush1.bf16.msra.mxu0 0
    %549 = vmatprep.subr.bf16.mxu0 0
    %550 = vmatpush1.bf16.msra.mxu0 0
    %551 = vmatprep.subr.bf16.mxu0 0
    %552 = vmatpush1.bf16.msra.mxu0 0
    %553 = vmatprep.subr.bf16.mxu0 0
    %554 = vmatpush1.bf16.msra.mxu0 0
    %555 = vmatprep.subr.bf16.mxu0 0
    %556 = vmatpush1.bf16.msra.mxu0 0
    %557 = vmatprep.subr.bf16.mxu0 0
    %558 = vmatpush1.bf16.msra.mxu0 0
    %559 = vmatprep.subr.bf16.mxu0 0
    %560 = vmatpush1.bf16.msra.mxu0 0
    %561 = vmatprep.subr.bf16.mxu0 0
    %562 = vmatpush1.bf16.msra.mxu0 0
    %563 = vmatprep.subr.bf16.mxu0 0
    %564 = vmatpush1.bf16.msra.mxu0 0
    %565 = vmatprep.subr.bf16.mxu0 0
    %566 = vmatpush1.bf16.msra.mxu0 0
    %567 = vmatprep.subr.bf16.mxu0 0
    %568 = vmatpush1.bf16.msra.mxu0 0
    %569 = vmatprep.subr.bf16.mxu0 0
    %570 = vmatpush1.bf16.msra.mxu0 0
    %571 = vmatprep.mubr.bf16.mxu0 0
    %572 = vmatmul.mubr.bf16.gmra.mrb[0].mxu0 %v537
    %v573 = vpop.f32.mrb[0].mxu0
    %v574 = vadd.f32 0.0, %v573
    %v575 = vpop.f32.mrb[0].mxu0
    %v576 = vpop.f32.mrb[0].mxu0
    %v577 = vpop.f32.mrb[0].mxu0
    %578 = vdwg.mxu0
    %v579 = vadd.f32 %v354, %v574
    %v580 = vxor.u32 %v579, 2147483648
    %v581 = vmul.f32 %v580, 1.442695
    %v582 = vpow.pop %v581
    %v583 = vadd.f32 %v582, 1.0
    %v584 = vrcp.pop %v583
    %v585 = vmul.f32 1.0, %v584
    %v586 = vtanh.pop %v579
    %v587 = vmul.f32 %v585, %v520
    %589 = vrot.lane.b32.xlu0 %v586, 32
    %v590 = vpop.permute.xlu0 %589
    %v592 = vmul.f32 %v585, %v590
    %594 = vrot.lane.b32.xlu0 %v592, 32
    %v595 = vpop.permute.xlu0 %594
    %v597 = vadd.f32 %v587, %v595
    %v598 = vtanh.pop %v597
    %600 = vrot.lane.b32.xlu0 %v598, 32
    %v601 = vpop.permute.xlu0 %600
    %v603 = vmul.f32 %v585, %v601
    %605 = vrot.lane.b32.xlu0 %v603, 64
    %v606 = vpop.permute.xlu0 %605
    %608 = vst.msk [vmem:[#allocation2 + $0x10] sm:$0xff] %vm147, %v606
    %v609 = vpack.c.bf16 %v603, %v603
    %611 = vrot.lane.b32.xlu0 %v609, 64
    %v612 = vpop.permute.xlu0 %611
    %v614 = vsel %vm147, %v612, 0
    %616 = vmatprep.subr.bf16.mxu0 0
    %617 = vmatpush1.bf16.msra.mxu0 %v378
    %618 = vmatprep.subr.bf16.mxu0 0
    %619 = vmatpush1.bf16.msra.mxu0 %v379
    %620 = vmatprep.subr.bf16.mxu0 0
    %621 = vmatpush1.bf16.msra.mxu0 0
    %622 = vmatprep.subr.bf16.mxu0 0
    %623 = vmatpush1.bf16.msra.mxu0 0
    %624 = vmatprep.subr.bf16.mxu0 0
    %625 = vmatpush1.bf16.msra.mxu0 0
    %626 = vmatprep.subr.bf16.mxu0 0
    %627 = vmatpush1.bf16.msra.mxu0 0
    %628 = vmatprep.subr.bf16.mxu0 0
    %629 = vmatpush1.bf16.msra.mxu0 0
    %630 = vmatprep.subr.bf16.mxu0 0
    %631 = vmatpush1.bf16.msra.mxu0 0
    %632 = vmatprep.subr.bf16.mxu0 0
    %633 = vmatpush1.bf16.msra.mxu0 0
    %634 = vmatprep.subr.bf16.mxu0 0
    %635 = vmatpush1.bf16.msra.mxu0 0
    %636 = vmatprep.subr.bf16.mxu0 0
    %637 = vmatpush1.bf16.msra.mxu0 0
    %638 = vmatprep.subr.bf16.mxu0 0
    %639 = vmatpush1.bf16.msra.mxu0 0
    %640 = vmatprep.subr.bf16.mxu0 0
    %641 = vmatpush1.bf16.msra.mxu0 0
    %642 = vmatprep.subr.bf16.mxu0 0
    %643 = vmatpush1.bf16.msra.mxu0 0
    %644 = vmatprep.subr.bf16.mxu0 0
    %645 = vmatpush1.bf16.msra.mxu0 0
    %646 = vmatprep.subr.bf16.mxu0 0
    %647 = vmatpush1.bf16.msra.mxu0 0
    %648 = vmatprep.mubr.bf16.mxu0 0
    %649 = vmatmul.mubr.bf16.gmra.mrb[0].mxu0 %v614
    %v650 = vpop.f32.mrb[0].mxu0
    %v651 = vadd.f32 0.0, %v650
    %v652 = vpop.f32.mrb[0].mxu0
    %v653 = vpop.f32.mrb[0].mxu0
    %v654 = vpop.f32.mrb[0].mxu0
    %655 = vdwg.mxu0
    %v656 = vadd.f32 %v356, %v651
    %v657 = vxor.u32 %v656, 2147483648
    %v658 = vmul.f32 %v657, 1.442695
    %v659 = vpow.pop %v658
    %v660 = vadd.f32 %v659, 1.0
    %v661 = vrcp.pop %v660
    %v662 = vmul.f32 1.0, %v661
    %v663 = vtanh.pop %v656
    %v664 = vmul.f32 %v662, %v597
    %666 = vrot.lane.b32.xlu0 %v663, 32
    %v667 = vpop.permute.xlu0 %666
    %v669 = vmul.f32 %v662, %v667
    %671 = vrot.lane.b32.xlu0 %v669, 32
    %v672 = vpop.permute.xlu0 %671
    %v674 = vadd.f32 %v664, %v672
    %v675 = vtanh.pop %v674
    %677 = vrot.lane.b32.xlu0 %v675, 32
    %v678 = vpop.permute.xlu0 %677
    %v680 = vmul.f32 %v662, %v678
    %682 = vrot.lane.b32.xlu0 %v680, 64
    %v683 = vpop.permute.xlu0 %682
    %685 = vst.msk [vmem:[#allocation2 + $0x18] sm:$0xff] %vm147, %v683
    %v686 = vpack.c.bf16 %v680, %v680
    %688 = vrot.lane.b32.xlu0 %v686, 64
    %v689 = vpop.permute.xlu0 %688
    %v691 = vsel %vm147, %v689, 0
    %693 = vmatprep.subr.bf16.mxu0 0
    %694 = vmatpush1.bf16.msra.mxu0 %v378
    %695 = vmatprep.subr.bf16.mxu0 0
    %696 = vmatpush1.bf16.msra.mxu0 %v379
    %697 = vmatprep.subr.bf16.mxu0 0
    %698 = vmatpush1.bf16.msra.mxu0 0
    %699 = vmatprep.subr.bf16.mxu0 0
    %700 = vmatpush1.bf16.msra.mxu0 0
    %701 = vmatprep.subr.bf16.mxu0 0
    %702 = vmatpush1.bf16.msra.mxu0 0
    %703 = vmatprep.subr.bf16.mxu0 0
    %704 = vmatpush1.bf16.msra.mxu0 0
    %705 = vmatprep.subr.bf16.mxu0 0
    %706 = vmatpush1.bf16.msra.mxu0 0
    %707 = vmatprep.subr.bf16.mxu0 0
    %708 = vmatpush1.bf16.msra.mxu0 0
    %709 = vmatprep.subr.bf16.mxu0 0
    %710 = vmatpush1.bf16.msra.mxu0 0
    %711 = vmatprep.subr.bf16.mxu0 0
    %712 = vmatpush1.bf16.msra.mxu0 0
    %713 = vmatprep.subr.bf16.mxu0 0
    %714 = vmatpush1.bf16.msra.mxu0 0
    %715 = vmatprep.subr.bf16.mxu0 0
    %716 = vmatpush1.bf16.msra.mxu0 0
    %717 = vmatprep.subr.bf16.mxu0 0
    %718 = vmatpush1.bf16.msra.mxu0 0
    %719 = vmatprep.subr.bf16.mxu0 0
    %720 = vmatpush1.bf16.msra.mxu0 0
    %721 = vmatprep.subr.bf16.mxu0 0
    %722 = vmatpush1.bf16.msra.mxu0 0
    %723 = vmatprep.subr.bf16.mxu0 0
    %724 = vmatpush1.bf16.msra.mxu0 0
    %725 = vmatprep.mubr.bf16.mxu0 0
    %726 = vmatmul.mubr.bf16.gmra.mrb[0].mxu0 %v691
    %v727 = vpop.f32.mrb[0].mxu0
    %v728 = vadd.f32 0.0, %v727
    %v729 = vpop.f32.mrb[0].mxu0
    %v730 = vpop.f32.mrb[0].mxu0
    %v731 = vpop.f32.mrb[0].mxu0
    %732 = vdwg.mxu0
    %v733 = vadd.f32 %v358, %v728
    %v734 = vxor.u32 %v733, 2147483648
    %v735 = vmul.f32 %v734, 1.442695
    %v736 = vpow.pop %v735
    %v737 = vadd.f32 %v736, 1.0
    %v738 = vrcp.pop %v737
    %v739 = vmul.f32 1.0, %v738
    %v740 = vtanh.pop %v733
    %v741 = vmul.f32 %v739, %v674
    %743 = vrot.lane.b32.xlu0 %v740, 32
    %v744 = vpop.permute.xlu0 %743
    %v746 = vmul.f32 %v739, %v744
    %748 = vrot.lane.b32.xlu0 %v746, 32
    %v749 = vpop.permute.xlu0 %748
    %v751 = vadd.f32 %v741, %v749
    %v752 = vtanh.pop %v751
    %754 = vrot.lane.b32.xlu0 %v752, 32
    %v755 = vpop.permute.xlu0 %754
    %v757 = vmul.f32 %v739, %v755
    %759 = vrot.lane.b32.xlu0 %v757, 64
    %v760 = vpop.permute.xlu0 %759
    %762 = vst.msk [vmem:[#allocation2 + $0x20] sm:$0xff] %vm147, %v760
    %v763 = vpack.c.bf16 %v757, %v757
    %765 = vrot.lane.b32.xlu0 %v763, 64
    %v766 = vpop.permute.xlu0 %765
    %v768 = vsel %vm147, %v766, 0
    %770 = vmatprep.subr.bf16.mxu0 0
    %771 = vmatpush1.bf16.msra.mxu0 %v378
    %772 = vmatprep.subr.bf16.mxu0 0
    %773 = vmatpush1.bf16.msra.mxu0 %v379
    %774 = vmatprep.subr.bf16.mxu0 0
    %775 = vmatpush1.bf16.msra.mxu0 0
    %776 = vmatprep.subr.bf16.mxu0 0
    %777 = vmatpush1.bf16.msra.mxu0 0
    %778 = vmatprep.subr.bf16.mxu0 0
    %779 = vmatpush1.bf16.msra.mxu0 0
    %780 = vmatprep.subr.bf16.mxu0 0
    %781 = vmatpush1.bf16.msra.mxu0 0
    %782 = vmatprep.subr.bf16.mxu0 0
    %783 = vmatpush1.bf16.msra.mxu0 0
    %784 = vmatprep.subr.bf16.mxu0 0
    %785 = vmatpush1.bf16.msra.mxu0 0
    %786 = vmatprep.subr.bf16.mxu0 0
    %787 = vmatpush1.bf16.msra.mxu0 0
    %788 = vmatprep.subr.bf16.mxu0 0
    %789 = vmatpush1.bf16.msra.mxu0 0
    %790 = vmatprep.subr.bf16.mxu0 0
    %791 = vmatpush1.bf16.msra.mxu0 0
    %792 = vmatprep.subr.bf16.mxu0 0
    %793 = vmatpush1.bf16.msra.mxu0 0
    %794 = vmatprep.subr.bf16.mxu0 0
    %795 = vmatpush1.bf16.msra.mxu0 0
    %796 = vmatprep.subr.bf16.mxu0 0
    %797 = vmatpush1.bf16.msra.mxu0 0
    %798 = vmatprep.subr.bf16.mxu0 0
    %799 = vmatpush1.bf16.msra.mxu0 0
    %800 = vmatprep.subr.bf16.mxu0 0
    %801 = vmatpush1.bf16.msra.mxu0 0
    %802 = vmatprep.mubr.bf16.mxu0 0
    %803 = vmatmul.mubr.bf16.gmra.mrb[0].mxu0 %v768
    %v804 = vpop.f32.mrb[0].mxu0
    %v805 = vadd.f32 0.0, %v804
    %v806 = vpop.f32.mrb[0].mxu0
    %v807 = vpop.f32.mrb[0].mxu0
    %v808 = vpop.f32.mrb[0].mxu0
    %809 = vdwg.mxu0
    %v810 = vadd.f32 %v360, %v805
    %v811 = vxor.u32 %v810, 2147483648
    %v812 = vmul.f32 %v811, 1.442695
    %v813 = vpow.pop %v812
    %v814 = vadd.f32 %v813, 1.0
    %v815 = vrcp.pop %v814
    %v816 = vmul.f32 1.0, %v815
    %v817 = vtanh.pop %v810
    %v818 = vmul.f32 %v816, %v751
    %820 = vrot.lane.b32.xlu0 %v817, 32
    %v821 = vpop.permute.xlu0 %820
    %v823 = vmul.f32 %v816, %v821
    %825 = vrot.lane.b32.xlu0 %v823, 32
    %v826 = vpop.permute.xlu0 %825
    %v828 = vadd.f32 %v818, %v826
    %v829 = vtanh.pop %v828
    %831 = vrot.lane.b32.xlu0 %v829, 32
    %v832 = vpop.permute.xlu0 %831
    %v834 = vmul.f32 %v816, %v832
    %836 = vrot.lane.b32.xlu0 %v834, 64
    %v837 = vpop.permute.xlu0 %836
    %839 = vst.msk [vmem:[#allocation2 + $0x28] sm:$0xff] %vm147, %v837
    %v840 = vpack.c.bf16 %v834, %v834
    %842 = vrot.lane.b32.xlu0 %v840, 64
    %v843 = vpop.permute.xlu0 %842
    %v845 = vsel %vm147, %v843, 0
    %847 = vmatprep.subr.bf16.mxu0 0
    %848 = vmatpush1.bf16.msra.mxu0 %v378
    %849 = vmatprep.subr.bf16.mxu0 0
    %850 = vmatpush1.bf16.msra.mxu0 %v379
    %851 = vmatprep.subr.bf16.mxu0 0
    %852 = vmatpush1.bf16.msra.mxu0 0
    %853 = vmatprep.subr.bf16.mxu0 0
    %854 = vmatpush1.bf16.msra.mxu0 0
    %855 = vmatprep.subr.bf16.mxu0 0
    %856 = vmatpush1.bf16.msra.mxu0 0
    %857 = vmatprep.subr.bf16.mxu0 0
    %858 = vmatpush1.bf16.msra.mxu0 0
    %859 = vmatprep.subr.bf16.mxu0 0
    %860 = vmatpush1.bf16.msra.mxu0 0
    %861 = vmatprep.subr.bf16.mxu0 0
    %862 = vmatpush1.bf16.msra.mxu0 0
    %863 = vmatprep.subr.bf16.mxu0 0
    %864 = vmatpush1.bf16.msra.mxu0 0
    %865 = vmatprep.subr.bf16.mxu0 0
    %866 = vmatpush1.bf16.msra.mxu0 0
    %867 = vmatprep.subr.bf16.mxu0 0
    %868 = vmatpush1.bf16.msra.mxu0 0
    %869 = vmatprep.subr.bf16.mxu0 0
    %870 = vmatpush1.bf16.msra.mxu0 0
    %871 = vmatprep.subr.bf16.mxu0 0
    %872 = vmatpush1.bf16.msra.mxu0 0
    %873 = vmatprep.subr.bf16.mxu0 0
    %874 = vmatpush1.bf16.msra.mxu0 0
    %875 = vmatprep.subr.bf16.mxu0 0
    %876 = vmatpush1.bf16.msra.mxu0 0
    %877 = vmatprep.subr.bf16.mxu0 0
    %878 = vmatpush1.bf16.msra.mxu0 0
    %879 = vmatprep.mubr.bf16.mxu0 0
    %880 = vmatmul.mubr.bf16.gmra.mrb[0].mxu0 %v845
    %v881 = vpop.f32.mrb[0].mxu0
    %v882 = vadd.f32 0.0, %v881
    %v883 = vpop.f32.mrb[0].mxu0
    %v884 = vpop.f32.mrb[0].mxu0
    %v885 = vpop.f32.mrb[0].mxu0
    %886 = vdwg.mxu0
    %v887 = vadd.f32 %v362, %v882
    %v888 = vxor.u32 %v887, 2147483648
    %v889 = vmul.f32 %v888, 1.442695
    %v890 = vpow.pop %v889
    %v891 = vadd.f32 %v890, 1.0
    %v892 = vrcp.pop %v891
    %v893 = vmul.f32 1.0, %v892
    %v894 = vtanh.pop %v887
    %v895 = vmul.f32 %v893, %v828
    %897 = vrot.lane.b32.xlu0 %v894, 32
    %v898 = vpop.permute.xlu0 %897
    %v900 = vmul.f32 %v893, %v898
    %902 = vrot.lane.b32.xlu0 %v900, 32
    %v903 = vpop.permute.xlu0 %902
    %v905 = vadd.f32 %v895, %v903
    %v906 = vtanh.pop %v905
    %908 = vrot.lane.b32.xlu0 %v906, 32
    %v909 = vpop.permute.xlu0 %908
    %v911 = vmul.f32 %v893, %v909
    %913 = vrot.lane.b32.xlu0 %v911, 64
    %v914 = vpop.permute.xlu0 %913
    %916 = vst.msk [vmem:[#allocation2 + $0x30] sm:$0xff] %vm147, %v914
    %v917 = vpack.c.bf16 %v911, %v911
    %919 = vrot.lane.b32.xlu0 %v917, 64
    %v920 = vpop.permute.xlu0 %919
    %v922 = vsel %vm147, %v920, 0
    %924 = vmatprep.subr.bf16.mxu0 0
    %925 = vmatpush1.bf16.msra.mxu0 %v378
    %926 = vmatprep.subr.bf16.mxu0 0
    %927 = vmatpush1.bf16.msra.mxu0 %v379
    %928 = vmatprep.subr.bf16.mxu0 0
    %929 = vmatpush1.bf16.msra.mxu0 0
    %930 = vmatprep.subr.bf16.mxu0 0
    %931 = vmatpush1.bf16.msra.mxu0 0
    %932 = vmatprep.subr.bf16.mxu0 0
    %933 = vmatpush1.bf16.msra.mxu0 0
    %934 = vmatprep.subr.bf16.mxu0 0
    %935 = vmatpush1.bf16.msra.mxu0 0
    %936 = vmatprep.subr.bf16.mxu0 0
    %937 = vmatpush1.bf16.msra.mxu0 0
    %938 = vmatprep.subr.bf16.mxu0 0
    %939 = vmatpush1.bf16.msra.mxu0 0
    %940 = vmatprep.subr.bf16.mxu0 0
    %941 = vmatpush1.bf16.msra.mxu0 0
    %942 = vmatprep.subr.bf16.mxu0 0
    %943 = vmatpush1.bf16.msra.mxu0 0
    %944 = vmatprep.subr.bf16.mxu0 0
    %945 = vmatpush1.bf16.msra.mxu0 0
    %946 = vmatprep.subr.bf16.mxu0 0
    %947 = vmatpush1.bf16.msra.mxu0 0
    %948 = vmatprep.subr.bf16.mxu0 0
    %949 = vmatpush1.bf16.msra.mxu0 0
    %950 = vmatprep.subr.bf16.mxu0 0
    %951 = vmatpush1.bf16.msra.mxu0 0
    %952 = vmatprep.subr.bf16.mxu0 0
    %953 = vmatpush1.bf16.msra.mxu0 0
    %954 = vmatprep.subr.bf16.mxu0 0
    %955 = vmatpush1.bf16.msra.mxu0 0
    %956 = vmatprep.mubr.bf16.mxu0 0
    %957 = vmatmul.mubr.bf16.gmra.mrb[0].mxu0 %v922
    %v958 = vpop.f32.mrb[0].mxu0
    %v959 = vadd.f32 0.0, %v958
    %v960 = vpop.f32.mrb[0].mxu0
    %v961 = vpop.f32.mrb[0].mxu0
    %v962 = vpop.f32.mrb[0].mxu0
    %963 = vdwg.mxu0
    %v964 = vadd.f32 %v364, %v959
    %v965 = vxor.u32 %v964, 2147483648
    %v966 = vmul.f32 %v965, 1.442695
    %v967 = vpow.pop %v966
    %v968 = vadd.f32 %v967, 1.0
    %v969 = vrcp.pop %v968
    %v970 = vmul.f32 1.0, %v969
    %v971 = vtanh.pop %v964
    %v972 = vmul.f32 %v970, %v905
    %974 = vrot.lane.b32.xlu0 %v971, 32
    %v975 = vpop.permute.xlu0 %974
    %v977 = vmul.f32 %v970, %v975
    %979 = vrot.lane.b32.xlu0 %v977, 32
    %v980 = vpop.permute.xlu0 %979
    %v982 = vadd.f32 %v972, %v980
    %v983 = vtanh.pop %v982
    %985 = vrot.lane.b32.xlu0 %v983, 32
    %v986 = vpop.permute.xlu0 %985
    %v988 = vmul.f32 %v970, %v986
    %990 = vrot.lane.b32.xlu0 %v988, 64
    %v991 = vpop.permute.xlu0 %990
    %993 = vst.msk [vmem:[#allocation2 + $0x38] sm:$0xff] %vm147, %v991
    %v994 = vld [vmem:[%s5] sm:$0xf]
    %v995 = vld [vmem:[%s5 + $0x4] sm:$0xf]
    %v996 = vld [vmem:[%s5 + $0x8] sm:$0xf]
    %v997 = vld [vmem:[%s5 + $0xc] sm:$0xf]
    %v1002 = vunpack.c.l.b16 %v994
    %v1003 = vunpack.c.l.b16 %v995
    %v1004 = vunpack.c.l.b16 %v996
    %v1005 = vunpack.c.l.b16 %v997
    %v1006 = vpack.c.b16 %v1003, %v1002
    %v1007 = vpack.c.b16 %v1005, %v1004
    %1010 = vmatprep.subr.bf16.mxu0 0
    %1011 = vmatpush1.bf16.msra.mxu0 %v1006
    %1012 = vmatprep.subr.bf16.mxu0 0
    %1013 = vmatpush1.bf16.msra.mxu0 %v1007
    %1014 = vmatprep.subr.bf16.mxu0 0
    %1015 = vmatpush1.bf16.msra.mxu0 0
    %1016 = vmatprep.subr.bf16.mxu0 0
    %1017 = vmatpush1.bf16.msra.mxu0 0
    %1018 = vmatprep.subr.bf16.mxu0 0
    %1019 = vmatpush1.bf16.msra.mxu0 0
    %1020 = vmatprep.subr.bf16.mxu0 0
    %1021 = vmatpush1.bf16.msra.mxu0 0
    %1022 = vmatprep.subr.bf16.mxu0 0
    %1023 = vmatpush1.bf16.msra.mxu0 0
    %1024 = vmatprep.subr.bf16.mxu0 0
    %1025 = vmatpush1.bf16.msra.mxu0 0
    %1026 = vmatprep.subr.bf16.mxu0 0
    %1027 = vmatpush1.bf16.msra.mxu0 0
    %1028 = vmatprep.subr.bf16.mxu0 0
    %1029 = vmatpush1.bf16.msra.mxu0 0
    %1030 = vmatprep.subr.bf16.mxu0 0
    %1031 = vmatpush1.bf16.msra.mxu0 0
    %1032 = vmatprep.subr.bf16.mxu0 0
    %1033 = vmatpush1.bf16.msra.mxu0 0
    %1034 = vmatprep.subr.bf16.mxu0 0
    %1035 = vmatpush1.bf16.msra.mxu0 0
    %1036 = vmatprep.subr.bf16.mxu0 0
    %1037 = vmatpush1.bf16.msra.mxu0 0
    %1038 = vmatprep.subr.bf16.mxu0 0
    %1039 = vmatpush1.bf16.msra.mxu0 0
    %1040 = vmatprep.subr.bf16.mxu0 0
    %1041 = vmatpush1.bf16.msra.mxu0 0
    %1042 = vmatprep.mubr.bf16.mxu0 0
    %1043 = vmatmul.mubr.bf16.gmra.mrb[0].mxu0 %v383
    %v1044 = vpop.f32.mrb[0].mxu0
    %v1045 = vadd.f32 0.0, %v1044
    %v1046 = vpop.f32.mrb[0].mxu0
    %v1047 = vpop.f32.mrb[0].mxu0
    %v1048 = vpop.f32.mrb[0].mxu0
    %1049 = vdwg.mxu0
    %v1050 = vadd.f32 %v365, %v1045
    %v1051 = vxor.u32 %v1050, 2147483648
    %v1052 = vmul.f32 %v1051, 1.442695
    %v1053 = vpow.pop %v1052
    %v1054 = vadd.f32 %v1053, 1.0
    %v1055 = vrcp.pop %v1054
    %v1056 = vmul.f32 1.0, %v1055
    %v1057 = vtanh.pop %v1050
    %v1058 = vmul.f32 %v1056, 0.0
    %1060 = vrot.lane.b32.xlu0 %v1057, 32
    %v1061 = vpop.permute.xlu0 %1060
    %v1063 = vmul.f32 %v1056, %v1061
    %1065 = vrot.lane.b32.xlu0 %v1063, 32
    %v1066 = vpop.permute.xlu0 %1065
    %v1068 = vadd.f32 %v1058, %v1066
    %v1069 = vtanh.pop %v1068
    %1071 = vrot.lane.b32.xlu0 %v1069, 32
    %v1072 = vpop.permute.xlu0 %1071
    %v1074 = vmul.f32 %v1056, %v1072
    %1076 = vrot.lane.b32.xlu0 %v1074, 96
    %v1077 = vpop.permute.xlu0 %1076
    %vm1079 = vcmask 523520
    %1080 = vst.msk [vmem:[#allocation2 + $0x38] sm:$0xff] %vm1079, %v1077
    %v1081 = vpack.c.bf16 %v1074, %v1074
    %1083 = vrot.lane.b32.xlu0 %v1081, 64
    %v1084 = vpop.permute.xlu0 %1083
    %v1086 = vsel %vm147, %v1084, 0
    %1088 = vmatprep.subr.bf16.mxu0 0
    %1089 = vmatpush1.bf16.msra.mxu0 %v1006
    %1090 = vmatprep.subr.bf16.mxu0 0
    %1091 = vmatpush1.bf16.msra.mxu0 %v1007
    %1092 = vmatprep.subr.bf16.mxu0 0
    %1093 = vmatpush1.bf16.msra.mxu0 0
    %1094 = vmatprep.subr.bf16.mxu0 0
    %1095 = vmatpush1.bf16.msra.mxu0 0
    %1096 = vmatprep.subr.bf16.mxu0 0
    %1097 = vmatpush1.bf16.msra.mxu0 0
    %1098 = vmatprep.subr.bf16.mxu0 0
    %1099 = vmatpush1.bf16.msra.mxu0 0
    %1100 = vmatprep.subr.bf16.mxu0 0
    %1101 = vmatpush1.bf16.msra.mxu0 0
    %1102 = vmatprep.subr.bf16.mxu0 0
    %1103 = vmatpush1.bf16.msra.mxu0 0
    %1104 = vmatprep.subr.bf16.mxu0 0
    %1105 = vmatpush1.bf16.msra.mxu0 0
    %1106 = vmatprep.subr.bf16.mxu0 0
    %1107 = vmatpush1.bf16.msra.mxu0 0
    %1108 = vmatprep.subr.bf16.mxu0 0
    %1109 = vmatpush1.bf16.msra.mxu0 0
    %1110 = vmatprep.subr.bf16.mxu0 0
    %1111 = vmatpush1.bf16.msra.mxu0 0
    %1112 = vmatprep.subr.bf16.mxu0 0
    %1113 = vmatpush1.bf16.msra.mxu0 0
    %1114 = vmatprep.subr.bf16.mxu0 0
    %1115 = vmatpush1.bf16.msra.mxu0 0
    %1116 = vmatprep.subr.bf16.mxu0 0
    %1117 = vmatpush1.bf16.msra.mxu0 0
    %1118 = vmatprep.subr.bf16.mxu0 0
    %1119 = vmatpush1.bf16.msra.mxu0 0
    %1120 = vmatprep.mubr.bf16.mxu0 0
    %1121 = vmatmul.mubr.bf16.gmra.mrb[0].mxu0 %v1086
    %v1122 = vpop.f32.mrb[0].mxu0
    %v1123 = vadd.f32 0.0, %v1122
    %v1124 = vpop.f32.mrb[0].mxu0
    %v1125 = vpop.f32.mrb[0].mxu0
    %v1126 = vpop.f32.mrb[0].mxu0
    %1127 = vdwg.mxu0
    %v1128 = vadd.f32 %v363, %v1123
    %v1129 = vxor.u32 %v1128, 2147483648
    %v1130 = vmul.f32 %v1129, 1.442695
    %v1131 = vpow.pop %v1130
    %v1132 = vadd.f32 %v1131, 1.0
    %v1133 = vrcp.pop %v1132
    %v1134 = vmul.f32 1.0, %v1133
    %v1135 = vtanh.pop %v1128
    %v1136 = vmul.f32 %v1134, %v1068
    %1138 = vrot.lane.b32.xlu0 %v1135, 32
    %v1139 = vpop.permute.xlu0 %1138
    %v1141 = vmul.f32 %v1134, %v1139
    %1143 = vrot.lane.b32.xlu0 %v1141, 32
    %v1144 = vpop.permute.xlu0 %1143
    %v1146 = vadd.f32 %v1136, %v1144
    %v1147 = vtanh.pop %v1146
    %1149 = vrot.lane.b32.xlu0 %v1147, 32
    %v1150 = vpop.permute.xlu0 %1149
    %v1152 = vmul.f32 %v1134, %v1150
    %1154 = vrot.lane.b32.xlu0 %v1152, 96
    %v1155 = vpop.permute.xlu0 %1154
    %1157 = vst.msk [vmem:[#allocation2 + $0x30] sm:$0xff] %vm1079, %v1155
    %v1158 = vpack.c.bf16 %v1152, %v1152
    %1160 = vrot.lane.b32.xlu0 %v1158, 64
    %v1161 = vpop.permute.xlu0 %1160
    %v1163 = vsel %vm147, %v1161, 0
    %1165 = vmatprep.subr.bf16.mxu0 0
    %1166 = vmatpush1.bf16.msra.mxu0 %v1006
    %1167 = vmatprep.subr.bf16.mxu0 0
    %1168 = vmatpush1.bf16.msra.mxu0 %v1007
    %1169 = vmatprep.subr.bf16.mxu0 0
    %1170 = vmatpush1.bf16.msra.mxu0 0
    %1171 = vmatprep.subr.bf16.mxu0 0
    %1172 = vmatpush1.bf16.msra.mxu0 0
    %1173 = vmatprep.subr.bf16.mxu0 0
    %1174 = vmatpush1.bf16.msra.mxu0 0
    %1175 = vmatprep.subr.bf16.mxu0 0
    %1176 = vmatpush1.bf16.msra.mxu0 0
    %1177 = vmatprep.subr.bf16.mxu0 0
    %1178 = vmatpush1.bf16.msra.mxu0 0
    %1179 = vmatprep.subr.bf16.mxu0 0
    %1180 = vmatpush1.bf16.msra.mxu0 0
    %1181 = vmatprep.subr.bf16.mxu0 0
    %1182 = vmatpush1.bf16.msra.mxu0 0
    %1183 = vmatprep.subr.bf16.mxu0 0
    %1184 = vmatpush1.bf16.msra.mxu0 0
    %1185 = vmatprep.subr.bf16.mxu0 0
    %1186 = vmatpush1.bf16.msra.mxu0 0
    %1187 = vmatprep.subr.bf16.mxu0 0
    %1188 = vmatpush1.bf16.msra.mxu0 0
    %1189 = vmatprep.subr.bf16.mxu0 0
    %1190 = vmatpush1.bf16.msra.mxu0 0
    %1191 = vmatprep.subr.bf16.mxu0 0
    %1192 = vmatpush1.bf16.msra.mxu0 0
    %1193 = vmatprep.subr.bf16.mxu0 0
    %1194 = vmatpush1.bf16.msra.mxu0 0
    %1195 = vmatprep.subr.bf16.mxu0 0
    %1196 = vmatpush1.bf16.msra.mxu0 0
    %1197 = vmatprep.mubr.bf16.mxu0 0
    %1198 = vmatmul.mubr.bf16.gmra.mrb[0].mxu0 %v1163
    %v1199 = vpop.f32.mrb[0].mxu0
    %v1200 = vadd.f32 0.0, %v1199
    %v1201 = vpop.f32.mrb[0].mxu0
    %v1202 = vpop.f32.mrb[0].mxu0
    %v1203 = vpop.f32.mrb[0].mxu0
    %1204 = vdwg.mxu0
    %v1205 = vadd.f32 %v361, %v1200
    %v1206 = vxor.u32 %v1205, 2147483648
    %v1207 = vmul.f32 %v1206, 1.442695
    %v1208 = vpow.pop %v1207
    %v1209 = vadd.f32 %v1208, 1.0
    %v1210 = vrcp.pop %v1209
    %v1211 = vmul.f32 1.0, %v1210
    %v1212 = vtanh.pop %v1205
    %v1213 = vmul.f32 %v1211, %v1146
    %1215 = vrot.lane.b32.xlu0 %v1212, 32
    %v1216 = vpop.permute.xlu0 %1215
    %v1218 = vmul.f32 %v1211, %v1216
    %1220 = vrot.lane.b32.xlu0 %v1218, 32
    %v1221 = vpop.permute.xlu0 %1220
    %v1223 = vadd.f32 %v1213, %v1221
    %v1224 = vtanh.pop %v1223
    %1226 = vrot.lane.b32.xlu0 %v1224, 32
    %v1227 = vpop.permute.xlu0 %1226
    %v1229 = vmul.f32 %v1211, %v1227
    %1231 = vrot.lane.b32.xlu0 %v1229, 96
    %v1232 = vpop.permute.xlu0 %1231
    %1234 = vst.msk [vmem:[#allocation2 + $0x28] sm:$0xff] %vm1079, %v1232
    %v1235 = vpack.c.bf16 %v1229, %v1229
    %1237 = vrot.lane.b32.xlu0 %v1235, 64
    %v1238 = vpop.permute.xlu0 %1237
    %v1240 = vsel %vm147, %v1238, 0
    %1242 = vmatprep.subr.bf16.mxu0 0
    %1243 = vmatpush1.bf16.msra.mxu0 %v1006
    %1244 = vmatprep.subr.bf16.mxu0 0
    %1245 = vmatpush1.bf16.msra.mxu0 %v1007
    %1246 = vmatprep.subr.bf16.mxu0 0
    %1247 = vmatpush1.bf16.msra.mxu0 0
    %1248 = vmatprep.subr.bf16.mxu0 0
    %1249 = vmatpush1.bf16.msra.mxu0 0
    %1250 = vmatprep.subr.bf16.mxu0 0
    %1251 = vmatpush1.bf16.msra.mxu0 0
    %1252 = vmatprep.subr.bf16.mxu0 0
    %1253 = vmatpush1.bf16.msra.mxu0 0
    %1254 = vmatprep.subr.bf16.mxu0 0
    %1255 = vmatpush1.bf16.msra.mxu0 0
    %1256 = vmatprep.subr.bf16.mxu0 0
    %1257 = vmatpush1.bf16.msra.mxu0 0
    %1258 = vmatprep.subr.bf16.mxu0 0
    %1259 = vmatpush1.bf16.msra.mxu0 0
    %1260 = vmatprep.subr.bf16.mxu0 0
    %1261 = vmatpush1.bf16.msra.mxu0 0
    %1262 = vmatprep.subr.bf16.mxu0 0
    %1263 = vmatpush1.bf16.msra.mxu0 0
    %1264 = vmatprep.subr.bf16.mxu0 0
    %1265 = vmatpush1.bf16.msra.mxu0 0
    %1266 = vmatprep.subr.bf16.mxu0 0
    %1267 = vmatpush1.bf16.msra.mxu0 0
    %1268 = vmatprep.subr.bf16.mxu0 0
    %1269 = vmatpush1.bf16.msra.mxu0 0
    %1270 = vmatprep.subr.bf16.mxu0 0
    %1271 = vmatpush1.bf16.msra.mxu0 0
    %1272 = vmatprep.subr.bf16.mxu0 0
    %1273 = vmatpush1.bf16.msra.mxu0 0
    %1274 = vmatprep.mubr.bf16.mxu0 0
    %1275 = vmatmul.mubr.bf16.gmra.mrb[0].mxu0 %v1240
    %v1276 = vpop.f32.mrb[0].mxu0
    %v1277 = vadd.f32 0.0, %v1276
    %v1278 = vpop.f32.mrb[0].mxu0
    %v1279 = vpop.f32.mrb[0].mxu0
    %v1280 = vpop.f32.mrb[0].mxu0
    %1281 = vdwg.mxu0
    %v1282 = vadd.f32 %v359, %v1277
    %v1283 = vxor.u32 %v1282, 2147483648
    %v1284 = vmul.f32 %v1283, 1.442695
    %v1285 = vpow.pop %v1284
    %v1286 = vadd.f32 %v1285, 1.0
    %v1287 = vrcp.pop %v1286
    %v1288 = vmul.f32 1.0, %v1287
    %v1289 = vtanh.pop %v1282
    %v1290 = vmul.f32 %v1288, %v1223
    %1292 = vrot.lane.b32.xlu0 %v1289, 32
    %v1293 = vpop.permute.xlu0 %1292
    %v1295 = vmul.f32 %v1288, %v1293
    %1297 = vrot.lane.b32.xlu0 %v1295, 32
    %v1298 = vpop.permute.xlu0 %1297
    %v1300 = vadd.f32 %v1290, %v1298
    %v1301 = vtanh.pop %v1300
    %1303 = vrot.lane.b32.xlu0 %v1301, 32
    %v1304 = vpop.permute.xlu0 %1303
    %v1306 = vmul.f32 %v1288, %v1304
    %1308 = vrot.lane.b32.xlu0 %v1306, 96
    %v1309 = vpop.permute.xlu0 %1308
    %1311 = vst.msk [vmem:[#allocation2 + $0x20] sm:$0xff] %vm1079, %v1309
    %v1312 = vpack.c.bf16 %v1306, %v1306
    %1314 = vrot.lane.b32.xlu0 %v1312, 64
    %v1315 = vpop.permute.xlu0 %1314
    %v1317 = vsel %vm147, %v1315, 0
    %1319 = vmatprep.subr.bf16.mxu0 0
    %1320 = vmatpush1.bf16.msra.mxu0 %v1006
    %1321 = vmatprep.subr.bf16.mxu0 0
    %1322 = vmatpush1.bf16.msra.mxu0 %v1007
    %1323 = vmatprep.subr.bf16.mxu0 0
    %1324 = vmatpush1.bf16.msra.mxu0 0
    %1325 = vmatprep.subr.bf16.mxu0 0
    %1326 = vmatpush1.bf16.msra.mxu0 0
    %1327 = vmatprep.subr.bf16.mxu0 0
    %1328 = vmatpush1.bf16.msra.mxu0 0
    %1329 = vmatprep.subr.bf16.mxu0 0
    %1330 = vmatpush1.bf16.msra.mxu0 0
    %1331 = vmatprep.subr.bf16.mxu0 0
    %1332 = vmatpush1.bf16.msra.mxu0 0
    %1333 = vmatprep.subr.bf16.mxu0 0
    %1334 = vmatpush1.bf16.msra.mxu0 0
    %1335 = vmatprep.subr.bf16.mxu0 0
    %1336 = vmatpush1.bf16.msra.mxu0 0
    %1337 = vmatprep.subr.bf16.mxu0 0
    %1338 = vmatpush1.bf16.msra.mxu0 0
    %1339 = vmatprep.subr.bf16.mxu0 0
    %1340 = vmatpush1.bf16.msra.mxu0 0
    %1341 = vmatprep.subr.bf16.mxu0 0
    %1342 = vmatpush1.bf16.msra.mxu0 0
    %1343 = vmatprep.subr.bf16.mxu0 0
    %1344 = vmatpush1.bf16.msra.mxu0 0
    %1345 = vmatprep.subr.bf16.mxu0 0
    %1346 = vmatpush1.bf16.msra.mxu0 0
    %1347 = vmatprep.subr.bf16.mxu0 0
    %1348 = vmatpush1.bf16.msra.mxu0 0
    %1349 = vmatprep.subr.bf16.mxu0 0
    %1350 = vmatpush1.bf16.msra.mxu0 0
    %1351 = vmatprep.mubr.bf16.mxu0 0
    %1352 = vmatmul.mubr.bf16.gmra.mrb[0].mxu0 %v1317
    %v1353 = vpop.f32.mrb[0].mxu0
    %v1354 = vadd.f32 0.0, %v1353
    %v1355 = vpop.f32.mrb[0].mxu0
    %v1356 = vpop.f32.mrb[0].mxu0
    %v1357 = vpop.f32.mrb[0].mxu0
    %1358 = vdwg.mxu0
    %v1359 = vadd.f32 %v357, %v1354
    %v1360 = vxor.u32 %v1359, 2147483648
    %v1361 = vmul.f32 %v1360, 1.442695
    %v1362 = vpow.pop %v1361
    %v1363 = vadd.f32 %v1362, 1.0
    %v1364 = vrcp.pop %v1363
    %v1365 = vmul.f32 1.0, %v1364
    %v1366 = vtanh.pop %v1359
    %v1367 = vmul.f32 %v1365, %v1300
    %1369 = vrot.lane.b32.xlu0 %v1366, 32
    %v1370 = vpop.permute.xlu0 %1369
    %v1372 = vmul.f32 %v1365, %v1370
    %1374 = vrot.lane.b32.xlu0 %v1372, 32
    %v1375 = vpop.permute.xlu0 %1374
    %v1377 = vadd.f32 %v1367, %v1375
    %v1378 = vtanh.pop %v1377
    %1380 = vrot.lane.b32.xlu0 %v1378, 32
    %v1381 = vpop.permute.xlu0 %1380
    %v1383 = vmul.f32 %v1365, %v1381
    %1385 = vrot.lane.b32.xlu0 %v1383, 96
    %v1386 = vpop.permute.xlu0 %1385
    %1388 = vst.msk [vmem:[#allocation2 + $0x18] sm:$0xff] %vm1079, %v1386
    %v1389 = vpack.c.bf16 %v1383, %v1383
    %1391 = vrot.lane.b32.xlu0 %v1389, 64
    %v1392 = vpop.permute.xlu0 %1391
    %v1394 = vsel %vm147, %v1392, 0
    %1396 = vmatprep.subr.bf16.mxu0 0
    %1397 = vmatpush1.bf16.msra.mxu0 %v1006
    %1398 = vmatprep.subr.bf16.mxu0 0
    %1399 = vmatpush1.bf16.msra.mxu0 %v1007
    %1400 = vmatprep.subr.bf16.mxu0 0
    %1401 = vmatpush1.bf16.msra.mxu0 0
    %1402 = vmatprep.subr.bf16.mxu0 0
    %1403 = vmatpush1.bf16.msra.mxu0 0
    %1404 = vmatprep.subr.bf16.mxu0 0
    %1405 = vmatpush1.bf16.msra.mxu0 0
    %1406 = vmatprep.subr.bf16.mxu0 0
    %1407 = vmatpush1.bf16.msra.mxu0 0
    %1408 = vmatprep.subr.bf16.mxu0 0
    %1409 = vmatpush1.bf16.msra.mxu0 0
    %1410 = vmatprep.subr.bf16.mxu0 0
    %1411 = vmatpush1.bf16.msra.mxu0 0
    %1412 = vmatprep.subr.bf16.mxu0 0
    %1413 = vmatpush1.bf16.msra.mxu0 0
    %1414 = vmatprep.subr.bf16.mxu0 0
    %1415 = vmatpush1.bf16.msra.mxu0 0
    %1416 = vmatprep.subr.bf16.mxu0 0
    %1417 = vmatpush1.bf16.msra.mxu0 0
    %1418 = vmatprep.subr.bf16.mxu0 0
    %1419 = vmatpush1.bf16.msra.mxu0 0
    %1420 = vmatprep.subr.bf16.mxu0 0
    %1421 = vmatpush1.bf16.msra.mxu0 0
    %1422 = vmatprep.subr.bf16.mxu0 0
    %1423 = vmatpush1.bf16.msra.mxu0 0
    %1424 = vmatprep.subr.bf16.mxu0 0
    %1425 = vmatpush1.bf16.msra.mxu0 0
    %1426 = vmatprep.subr.bf16.mxu0 0
    %1427 = vmatpush1.bf16.msra.mxu0 0
    %1428 = vmatprep.mubr.bf16.mxu0 0
    %1429 = vmatmul.mubr.bf16.gmra.mrb[0].mxu0 %v1394
    %v1430 = vpop.f32.mrb[0].mxu0
    %v1431 = vadd.f32 0.0, %v1430
    %v1432 = vpop.f32.mrb[0].mxu0
    %v1433 = vpop.f32.mrb[0].mxu0
    %v1434 = vpop.f32.mrb[0].mxu0
    %1435 = vdwg.mxu0
    %v1436 = vadd.f32 %v355, %v1431
    %v1437 = vxor.u32 %v1436, 2147483648
    %v1438 = vmul.f32 %v1437, 1.442695
    %v1439 = vpow.pop %v1438
    %v1440 = vadd.f32 %v1439, 1.0
    %v1441 = vrcp.pop %v1440
    %v1442 = vmul.f32 1.0, %v1441
    %v1443 = vtanh.pop %v1436
    %v1444 = vmul.f32 %v1442, %v1377
    %1446 = vrot.lane.b32.xlu0 %v1443, 32
    %v1447 = vpop.permute.xlu0 %1446
    %v1449 = vmul.f32 %v1442, %v1447
    %1451 = vrot.lane.b32.xlu0 %v1449, 32
    %v1452 = vpop.permute.xlu0 %1451
    %v1454 = vadd.f32 %v1444, %v1452
    %v1455 = vtanh.pop %v1454
    %1457 = vrot.lane.b32.xlu0 %v1455, 32
    %v1458 = vpop.permute.xlu0 %1457
    %v1460 = vmul.f32 %v1442, %v1458
    %1462 = vrot.lane.b32.xlu0 %v1460, 96
    %v1463 = vpop.permute.xlu0 %1462
    %1465 = vst.msk [vmem:[#allocation2 + $0x10] sm:$0xff] %vm1079, %v1463
    %v1466 = vpack.c.bf16 %v1460, %v1460
    %1468 = vrot.lane.b32.xlu0 %v1466, 64
    %v1469 = vpop.permute.xlu0 %1468
    %v1471 = vsel %vm147, %v1469, 0
    %1473 = vmatprep.subr.bf16.mxu0 0
    %1474 = vmatpush1.bf16.msra.mxu0 %v1006
    %1475 = vmatprep.subr.bf16.mxu0 0
    %1476 = vmatpush1.bf16.msra.mxu0 %v1007
    %1477 = vmatprep.subr.bf16.mxu0 0
    %1478 = vmatpush1.bf16.msra.mxu0 0
    %1479 = vmatprep.subr.bf16.mxu0 0
    %1480 = vmatpush1.bf16.msra.mxu0 0
    %1481 = vmatprep.subr.bf16.mxu0 0
    %1482 = vmatpush1.bf16.msra.mxu0 0
    %1483 = vmatprep.subr.bf16.mxu0 0
    %1484 = vmatpush1.bf16.msra.mxu0 0
    %1485 = vmatprep.subr.bf16.mxu0 0
    %1486 = vmatpush1.bf16.msra.mxu0 0
    %1487 = vmatprep.subr.bf16.mxu0 0
    %1488 = vmatpush1.bf16.msra.mxu0 0
    %1489 = vmatprep.subr.bf16.mxu0 0
    %1490 = vmatpush1.bf16.msra.mxu0 0
    %1491 = vmatprep.subr.bf16.mxu0 0
    %1492 = vmatpush1.bf16.msra.mxu0 0
    %1493 = vmatprep.subr.bf16.mxu0 0
    %1494 = vmatpush1.bf16.msra.mxu0 0
    %1495 = vmatprep.subr.bf16.mxu0 0
    %1496 = vmatpush1.bf16.msra.mxu0 0
    %1497 = vmatprep.subr.bf16.mxu0 0
    %1498 = vmatpush1.bf16.msra.mxu0 0
    %1499 = vmatprep.subr.bf16.mxu0 0
    %1500 = vmatpush1.bf16.msra.mxu0 0
    %1501 = vmatprep.subr.bf16.mxu0 0
    %1502 = vmatpush1.bf16.msra.mxu0 0
    %1503 = vmatprep.subr.bf16.mxu0 0
    %1504 = vmatpush1.bf16.msra.mxu0 0
    %1505 = vmatprep.mubr.bf16.mxu0 0
    %1506 = vmatmul.mubr.bf16.gmra.mrb[0].mxu0 %v1471
    %v1507 = vpop.f32.mrb[0].mxu0
    %v1508 = vadd.f32 0.0, %v1507
    %v1509 = vpop.f32.mrb[0].mxu0
    %v1510 = vpop.f32.mrb[0].mxu0
    %v1511 = vpop.f32.mrb[0].mxu0
    %1512 = vdwg.mxu0
    %v1513 = vadd.f32 %v353, %v1508
    %v1514 = vxor.u32 %v1513, 2147483648
    %v1515 = vmul.f32 %v1514, 1.442695
    %v1516 = vpow.pop %v1515
    %v1517 = vadd.f32 %v1516, 1.0
    %v1518 = vrcp.pop %v1517
    %v1519 = vmul.f32 1.0, %v1518
    %v1520 = vtanh.pop %v1513
    %v1521 = vmul.f32 %v1519, %v1454
    %1523 = vrot.lane.b32.xlu0 %v1520, 32
    %v1524 = vpop.permute.xlu0 %1523
    %v1526 = vmul.f32 %v1519, %v1524
    %1528 = vrot.lane.b32.xlu0 %v1526, 32
    %v1529 = vpop.permute.xlu0 %1528
    %v1531 = vadd.f32 %v1521, %v1529
    %v1532 = vtanh.pop %v1531
    %1534 = vrot.lane.b32.xlu0 %v1532, 32
    %v1535 = vpop.permute.xlu0 %1534
    %v1537 = vmul.f32 %v1519, %v1535
    %1539 = vrot.lane.b32.xlu0 %v1537, 96
    %v1540 = vpop.permute.xlu0 %1539
    %1542 = vst.msk [vmem:[#allocation2 + $0x8] sm:$0xff] %vm1079, %v1540
    %v1543 = vpack.c.bf16 %v1537, %v1537
    %1545 = vrot.lane.b32.xlu0 %v1543, 64
    %v1546 = vpop.permute.xlu0 %1545
    %v1548 = vsel %vm147, %v1546, 0
    %1550 = vmatprep.subr.bf16.mxu0 0
    %1551 = vmatpush1.bf16.msra.mxu0 %v1006
    %1552 = vmatprep.subr.bf16.mxu0 0
    %1553 = vmatpush1.bf16.msra.mxu0 %v1007
    %1554 = vmatprep.subr.bf16.mxu0 0
    %1555 = vmatpush1.bf16.msra.mxu0 0
    %1556 = vmatprep.subr.bf16.mxu0 0
    %1557 = vmatpush1.bf16.msra.mxu0 0
    %1558 = vmatprep.subr.bf16.mxu0 0
    %1559 = vmatpush1.bf16.msra.mxu0 0
    %1560 = vmatprep.subr.bf16.mxu0 0
    %1561 = vmatpush1.bf16.msra.mxu0 0
    %1562 = vmatprep.subr.bf16.mxu0 0
    %1563 = vmatpush1.bf16.msra.mxu0 0
    %1564 = vmatprep.subr.bf16.mxu0 0
    %1565 = vmatpush1.bf16.msra.mxu0 0
    %1566 = vmatprep.subr.bf16.mxu0 0
    %1567 = vmatpush1.bf16.msra.mxu0 0
    %1568 = vmatprep.subr.bf16.mxu0 0
    %1569 = vmatpush1.bf16.msra.mxu0 0
    %1570 = vmatprep.subr.bf16.mxu0 0
    %1571 = vmatpush1.bf16.msra.mxu0 0
    %1572 = vmatprep.subr.bf16.mxu0 0
    %1573 = vmatpush1.bf16.msra.mxu0 0
    %1574 = vmatprep.subr.bf16.mxu0 0
    %1575 = vmatpush1.bf16.msra.mxu0 0
    %1576 = vmatprep.subr.bf16.mxu0 0
    %1577 = vmatpush1.bf16.msra.mxu0 0
    %1578 = vmatprep.subr.bf16.mxu0 0
    %1579 = vmatpush1.bf16.msra.mxu0 0
    %1580 = vmatprep.subr.bf16.mxu0 0
    %1581 = vmatpush1.bf16.msra.mxu0 0
    %1582 = vmatprep.mubr.bf16.mxu0 0
    %1583 = vmatmul.mubr.bf16.gmra.mrb[0].mxu0 %v1548
    %v1584 = vpop.f32.mrb[0].mxu0
    %v1585 = vadd.f32 0.0, %v1584
    %v1586 = vpop.f32.mrb[0].mxu0
    %v1587 = vpop.f32.mrb[0].mxu0
    %v1588 = vpop.f32.mrb[0].mxu0
    %1589 = vdwg.mxu0
    %v1590 = vadd.f32 %v351, %v1585
    %v1591 = vxor.u32 %v1590, 2147483648
    %v1592 = vmul.f32 %v1591, 1.442695
    %v1593 = vpow.pop %v1592
    %v1594 = vadd.f32 %v1593, 1.0
    %v1595 = vrcp.pop %v1594
    %v1596 = vmul.f32 1.0, %v1595
    %v1597 = vtanh.pop %v1590
    %v1598 = vmul.f32 %v1596, %v1531
    %1600 = vrot.lane.b32.xlu0 %v1597, 32
    %v1601 = vpop.permute.xlu0 %1600
    %v1603 = vmul.f32 %v1596, %v1601
    %1605 = vrot.lane.b32.xlu0 %v1603, 32
    %v1606 = vpop.permute.xlu0 %1605
    %v1608 = vadd.f32 %v1598, %v1606
    %v1609 = vtanh.pop %v1608
    %1611 = vrot.lane.b32.xlu0 %v1609, 32
    %v1612 = vpop.permute.xlu0 %1611
    %v1614 = vmul.f32 %v1596, %v1612
    %1616 = vrot.lane.b32.xlu0 %v1614, 96
    %v1617 = vpop.permute.xlu0 %1616
    %1619 = vst.msk [vmem:[#allocation2] sm:$0xff] %vm1079, %v1617
    %v1620 = vld [vmem:[#allocation2] sm:$0xff]
    %v1621 = vld [vmem:[#allocation2 + $0x8] sm:$0xff]
    %v1622 = vld [vmem:[#allocation2 + $0x10] sm:$0xff]
    %v1623 = vld [vmem:[#allocation2 + $0x18] sm:$0xff]
    %v1624 = vld [vmem:[#allocation2 + $0x20] sm:$0xff]
    %v1625 = vld [vmem:[#allocation2 + $0x28] sm:$0xff]
    %v1626 = vld [vmem:[#allocation2 + $0x30] sm:$0xff]
    %v1627 = vld [vmem:[#allocation2 + $0x38] sm:$0xff]
    %v1628 = vpack.c.bf16 %v1621, %v1620
    %v1629 = vpack.c.bf16 %v1623, %v1622
    %v1630 = vpack.c.bf16 %v1625, %v1624
    %v1631 = vpack.c.bf16 %v1627, %v1626
    %v1632 = vld [vmem:[#allocation5] sm:$0x3]
    %v1633 = vld [vmem:[%s6] sm:$0xff]
    %v1634 = vld [vmem:[%s6 + $0x8] sm:$0xff]
    %v1635 = vld [vmem:[%s6 + $0x10] sm:$0xff]
    %v1636 = vld [vmem:[%s6 + $0x18] sm:$0xff]
    %v1637 = vld [vmem:[%s6 + $0x20] sm:$0xff]
    %v1638 = vld [vmem:[%s6 + $0x28] sm:$0xff]
    %v1639 = vld [vmem:[%s6 + $0x30] sm:$0xff]
    %v1640 = vld [vmem:[%s6 + $0x38] sm:$0xff]
    %v1649 = vunpack.c.l.b16 %v1633
    %v1650 = vunpack.c.h.b16 %v1633
    %v1651 = vunpack.c.l.b16 %v1634
    %v1652 = vunpack.c.h.b16 %v1634
    %v1653 = vunpack.c.l.b16 %v1635
    %v1654 = vunpack.c.h.b16 %v1635
    %v1655 = vunpack.c.l.b16 %v1636
    %v1656 = vunpack.c.h.b16 %v1636
    %v1657 = vunpack.c.l.b16 %v1637
    %v1658 = vunpack.c.h.b16 %v1637
    %v1659 = vunpack.c.l.b16 %v1638
    %v1660 = vunpack.c.h.b16 %v1638
    %v1661 = vunpack.c.l.b16 %v1639
    %v1662 = vunpack.c.h.b16 %v1639
    %v1663 = vunpack.c.l.b16 %v1640
    %v1664 = vunpack.c.h.b16 %v1640
    %v1665 = vpack.c.b16 %v1651, %v1649
    %v1666 = vpack.c.b16 %v1652, %v1650
    %v1667 = vpack.c.b16 %v1655, %v1653
    %v1668 = vpack.c.b16 %v1656, %v1654
    %v1669 = vpack.c.b16 %v1659, %v1657
    %v1670 = vpack.c.b16 %v1660, %v1658
    %v1671 = vpack.c.b16 %v1663, %v1661
    %v1672 = vpack.c.b16 %v1664, %v1662
    %vm1681 = vcmask 523264
    %v1683 = vsel %vm1681, %v1628, 0
    %v1686 = vsel %vm1681, %v1629, 0
    %v1689 = vsel %vm1681, %v1630, 0
    %v1692 = vsel %vm1681, %v1631, 0
    %1694 = vmatprep.subr.bf16.mxu0 %v1666
    %1695 = vmatpush1.bf16.msra.mxu0 %v1665
    %1696 = vmatprep.subr.bf16.mxu0 %v1668
    %1697 = vmatpush1.bf16.msra.mxu0 %v1667
    %1698 = vmatprep.subr.bf16.mxu0 %v1670
    %1699 = vmatpush1.bf16.msra.mxu0 %v1669
    %1700 = vmatprep.subr.bf16.mxu0 %v1672
    %1701 = vmatpush1.bf16.msra.mxu0 %v1671
    %1702 = vmatprep.subr.bf16.mxu0 0
    %1703 = vmatpush1.bf16.msra.mxu0 0
    %1704 = vmatprep.subr.bf16.mxu0 0
    %1705 = vmatpush1.bf16.msra.mxu0 0
    %1706 = vmatprep.subr.bf16.mxu0 0
    %1707 = vmatpush1.bf16.msra.mxu0 0
    %1708 = vmatprep.subr.bf16.mxu0 0
    %1709 = vmatpush1.bf16.msra.mxu0 0
    %1710 = vmatprep.subr.bf16.mxu0 0
    %1711 = vmatpush1.bf16.msra.mxu0 0
    %1712 = vmatprep.subr.bf16.mxu0 0
    %1713 = vmatpush1.bf16.msra.mxu0 0
    %1714 = vmatprep.subr.bf16.mxu0 0
    %1715 = vmatpush1.bf16.msra.mxu0 0
    %1716 = vmatprep.subr.bf16.mxu0 0
    %1717 = vmatpush1.bf16.msra.mxu0 0
    %1718 = vmatprep.subr.bf16.mxu0 0
    %1719 = vmatpush1.bf16.msra.mxu0 0
    %1720 = vmatprep.subr.bf16.mxu0 0
    %1721 = vmatpush1.bf16.msra.mxu0 0
    %1722 = vmatprep.subr.bf16.mxu0 0
    %1723 = vmatpush1.bf16.msra.mxu0 0
    %1724 = vmatprep.subr.bf16.mxu0 0
    %1725 = vmatpush1.bf16.msra.mxu0 0
    %1726 = vmatprep.mubr.bf16.mxu0 0
    %1727 = vmatmul.mubr.bf16.gmra.mrb[0].mxu0 %v1683
    %v1728 = vpop.f32.mrb[0].mxu0
    %v1729 = vadd.f32 0.0, %v1728
    %v1730 = vpop.f32.mrb[0].mxu0
    %v1731 = vadd.f32 0.0, %v1730
    %v1732 = vpop.f32.mrb[0].mxu0
    %v1733 = vadd.f32 0.0, %v1732
    %v1734 = vpop.f32.mrb[0].mxu0
    %v1735 = vadd.f32 0.0, %v1734
    %1736 = vmatprep.mubr.bf16.mxu0 0
    %1737 = vmatmul.mubr.bf16.gmra.mrb[0].mxu0 %v1686
    %v1738 = vpop.f32.mrb[0].mxu0
    %v1739 = vadd.f32 0.0, %v1738
    %v1740 = vpop.f32.mrb[0].mxu0
    %v1741 = vadd.f32 0.0, %v1740
    %v1742 = vpop.f32.mrb[0].mxu0
    %v1743 = vadd.f32 0.0, %v1742
    %v1744 = vpop.f32.mrb[0].mxu0
    %v1745 = vadd.f32 0.0, %v1744
    %1746 = vmatprep.mubr.bf16.mxu0 0
    %1747 = vmatmul.mubr.bf16.gmra.mrb[0].mxu0 %v1689
    %v1748 = vpop.f32.mrb[0].mxu0
    %v1749 = vadd.f32 0.0, %v1748
    %v1750 = vpop.f32.mrb[0].mxu0
    %v1751 = vadd.f32 0.0, %v1750
    %v1752 = vpop.f32.mrb[0].mxu0
    %v1753 = vadd.f32 0.0, %v1752
    %v1754 = vpop.f32.mrb[0].mxu0
    %v1755 = vadd.f32 0.0, %v1754
    %1756 = vmatprep.mubr.bf16.mxu0 0
    %1757 = vmatmul.mubr.bf16.gmra.mrb[0].mxu0 %v1692
    %v1758 = vpop.f32.mrb[0].mxu0
    %v1759 = vadd.f32 0.0, %v1758
    %v1760 = vpop.f32.mrb[0].mxu0
    %v1761 = vadd.f32 0.0, %v1760
    %v1762 = vpop.f32.mrb[0].mxu0
    %v1763 = vadd.f32 0.0, %v1762
    %v1764 = vpop.f32.mrb[0].mxu0
    %v1765 = vadd.f32 0.0, %v1764
    %1766 = vdwg.mxu0
    %v1768 = vlaneseq
    %v1769 = vshrl.u32 %v1768, 7
    %v1770 = vsub.s32 0, %v1769
    %v1771 = vrot.slane %v1632, %v1770
    %v1772 = vlaneseq
    %v1773 = vshrl.u32 %v1772, 7
    %v1774 = vsub.s32 1, %v1773
    %v1775 = vrot.slane %v1632, %v1774
    %v1778 = vadd.f32 %v1771, %v1729
    %v1779 = vadd.f32 %v1775, %v1731
    %v1780 = vadd.f32 %v1771, %v1733
    %v1781 = vadd.f32 %v1775, %v1735
    %v1782 = vadd.f32 %v1771, %v1739
    %v1783 = vadd.f32 %v1775, %v1741
    %v1784 = vadd.f32 %v1771, %v1743
    %v1785 = vadd.f32 %v1775, %v1745
    %v1786 = vadd.f32 %v1771, %v1749
    %v1787 = vadd.f32 %v1775, %v1751
    %v1788 = vadd.f32 %v1771, %v1753
    %v1789 = vadd.f32 %v1775, %v1755
    %v1790 = vadd.f32 %v1771, %v1759
    %v1791 = vadd.f32 %v1775, %v1761
    %v1792 = vadd.f32 %v1771, %v1763
    %v1793 = vadd.f32 %v1775, %v1765
    %v1794 = vld [vmem:[%s8] sm:$0xf]
    %v1795 = vld [vmem:[%s8 + $0x4] sm:$0xf]
    %v1796 = vld [vmem:[%s8 + $0x8] sm:$0xf]
    %v1797 = vld [vmem:[%s8 + $0xc] sm:$0xf]
    %v1802 = vunpack.c.l.b16 %v1794
    %v1803 = vunpack.c.l.b16 %v1795
    %v1804 = vunpack.c.l.b16 %v1796
    %v1805 = vunpack.c.l.b16 %v1797
    %v1806 = vpack.c.b16 %v1803, %v1802
    %v1807 = vpack.c.b16 %v1805, %v1804
    %1810 = vmatprep.subr.bf16.mxu0 0
    %1811 = vmatpush1.bf16.msra.mxu0 %v1806
    %1812 = vmatprep.subr.bf16.mxu0 0
    %1813 = vmatpush1.bf16.msra.mxu0 %v1807
    %1814 = vmatprep.subr.bf16.mxu0 0
    %1815 = vmatpush1.bf16.msra.mxu0 0
    %1816 = vmatprep.subr.bf16.mxu0 0
    %1817 = vmatpush1.bf16.msra.mxu0 0
    %1818 = vmatprep.subr.bf16.mxu0 0
    %1819 = vmatpush1.bf16.msra.mxu0 0
    %1820 = vmatprep.subr.bf16.mxu0 0
    %1821 = vmatpush1.bf16.msra.mxu0 0
    %1822 = vmatprep.subr.bf16.mxu0 0
    %1823 = vmatpush1.bf16.msra.mxu0 0
    %1824 = vmatprep.subr.bf16.mxu0 0
    %1825 = vmatpush1.bf16.msra.mxu0 0
    %1826 = vmatprep.subr.bf16.mxu0 0
    %1827 = vmatpush1.bf16.msra.mxu0 0
    %1828 = vmatprep.subr.bf16.mxu0 0
    %1829 = vmatpush1.bf16.msra.mxu0 0
    %1830 = vmatprep.subr.bf16.mxu0 0
    %1831 = vmatpush1.bf16.msra.mxu0 0
    %1832 = vmatprep.subr.bf16.mxu0 0
    %1833 = vmatpush1.bf16.msra.mxu0 0
    %1834 = vmatprep.subr.bf16.mxu0 0
    %1835 = vmatpush1.bf16.msra.mxu0 0
    %1836 = vmatprep.subr.bf16.mxu0 0
    %1837 = vmatpush1.bf16.msra.mxu0 0
    %1838 = vmatprep.subr.bf16.mxu0 0
    %1839 = vmatpush1.bf16.msra.mxu0 0
    %1840 = vmatprep.subr.bf16.mxu0 0
    %1841 = vmatpush1.bf16.msra.mxu0 0
    %1842 = vmatprep.mubr.bf16.mxu0 0
    %1843 = vmatmul.mubr.bf16.gmra.mrb[0].mxu0 %v383
    %v1844 = vpop.f32.mrb[0].mxu0
    %v1845 = vadd.f32 0.0, %v1844
    %v1846 = vpop.f32.mrb[0].mxu0
    %v1847 = vpop.f32.mrb[0].mxu0
    %v1848 = vpop.f32.mrb[0].mxu0
    %1849 = vdwg.mxu0
    %v1850 = vadd.f32 %v1778, %v1845
    %v1851 = vxor.u32 %v1850, 2147483648
    %v1852 = vmul.f32 %v1851, 1.442695
    %v1853 = vpow.pop %v1852
    %v1854 = vadd.f32 %v1853, 1.0
    %v1855 = vrcp.pop %v1854
    %v1856 = vmul.f32 1.0, %v1855
    %v1857 = vtanh.pop %v1850
    %v1858 = vmul.f32 %v1856, 0.0
    %1860 = vrot.lane.b32.xlu0 %v1857, 32
    %v1861 = vpop.permute.xlu0 %1860
    %v1863 = vmul.f32 %v1856, %v1861
    %1865 = vrot.lane.b32.xlu0 %v1863, 32
    %v1866 = vpop.permute.xlu0 %1865
    %v1868 = vadd.f32 %v1858, %v1866
    %v1869 = vtanh.pop %v1868
    %1871 = vrot.lane.b32.xlu0 %v1869, 32
    %v1872 = vpop.permute.xlu0 %1871
    %v1874 = vmul.f32 %v1856, %v1872
    %v1875 = vpack.c.bf16 %v1874, %v1874
    %1877 = vrot.lane.b32.xlu0 %v1875, 64
    %v1878 = vpop.permute.xlu0 %1877
    %v1880 = vsel %vm147, %v1878, 0
    %1882 = vmatprep.subr.bf16.mxu0 0
    %1883 = vmatpush1.bf16.msra.mxu0 %v1806
    %1884 = vmatprep.subr.bf16.mxu0 0
    %1885 = vmatpush1.bf16.msra.mxu0 %v1807
    %1886 = vmatprep.subr.bf16.mxu0 0
    %1887 = vmatpush1.bf16.msra.mxu0 0
    %1888 = vmatprep.subr.bf16.mxu0 0
    %1889 = vmatpush1.bf16.msra.mxu0 0
    %1890 = vmatprep.subr.bf16.mxu0 0
    %1891 = vmatpush1.bf16.msra.mxu0 0
    %1892 = vmatprep.subr.bf16.mxu0 0
    %1893 = vmatpush1.bf16.msra.mxu0 0
    %1894 = vmatprep.subr.bf16.mxu0 0
    %1895 = vmatpush1.bf16.msra.mxu0 0
    %1896 = vmatprep.subr.bf16.mxu0 0
    %1897 = vmatpush1.bf16.msra.mxu0 0
    %1898 = vmatprep.subr.bf16.mxu0 0
    %1899 = vmatpush1.bf16.msra.mxu0 0
    %1900 = vmatprep.subr.bf16.mxu0 0
    %1901 = vmatpush1.bf16.msra.mxu0 0
    %1902 = vmatprep.subr.bf16.mxu0 0
    %1903 = vmatpush1.bf16.msra.mxu0 0
    %1904 = vmatprep.subr.bf16.mxu0 0
    %1905 = vmatpush1.bf16.msra.mxu0 0
    %1906 = vmatprep.subr.bf16.mxu0 0
    %1907 = vmatpush1.bf16.msra.mxu0 0
    %1908 = vmatprep.subr.bf16.mxu0 0
    %1909 = vmatpush1.bf16.msra.mxu0 0
    %1910 = vmatprep.subr.bf16.mxu0 0
    %1911 = vmatpush1.bf16.msra.mxu0 0
    %1912 = vmatprep.subr.bf16.mxu0 0
    %1913 = vmatpush1.bf16.msra.mxu0 0
    %1914 = vmatprep.mubr.bf16.mxu0 0
    %1915 = vmatmul.mubr.bf16.gmra.mrb[0].mxu0 %v1880
    %v1916 = vpop.f32.mrb[0].mxu0
    %v1917 = vadd.f32 0.0, %v1916
    %v1918 = vpop.f32.mrb[0].mxu0
    %v1919 = vpop.f32.mrb[0].mxu0
    %v1920 = vpop.f32.mrb[0].mxu0
    %1921 = vdwg.mxu0
    %v1922 = vadd.f32 %v1780, %v1917
    %v1923 = vxor.u32 %v1922, 2147483648
    %v1924 = vmul.f32 %v1923, 1.442695
    %v1925 = vpow.pop %v1924
    %v1926 = vadd.f32 %v1925, 1.0
    %v1927 = vrcp.pop %v1926
    %v1928 = vmul.f32 1.0, %v1927
    %v1929 = vtanh.pop %v1922
    %v1930 = vmul.f32 %v1928, %v1868
    %1932 = vrot.lane.b32.xlu0 %v1929, 32
    %v1933 = vpop.permute.xlu0 %1932
    %v1935 = vmul.f32 %v1928, %v1933
    %1937 = vrot.lane.b32.xlu0 %v1935, 32
    %v1938 = vpop.permute.xlu0 %1937
    %v1940 = vadd.f32 %v1930, %v1938
    %v1941 = vtanh.pop %v1940
    %1943 = vrot.lane.b32.xlu0 %v1941, 32
    %v1944 = vpop.permute.xlu0 %1943
    %v1946 = vmul.f32 %v1928, %v1944
    %v1947 = vpack.c.bf16 %v1946, %v1946
    %1949 = vrot.lane.b32.xlu0 %v1947, 64
    %v1950 = vpop.permute.xlu0 %1949
    %v1952 = vsel %vm147, %v1950, 0
    %1954 = vmatprep.subr.bf16.mxu0 0
    %1955 = vmatpush1.bf16.msra.mxu0 %v1806
    %1956 = vmatprep.subr.bf16.mxu0 0
    %1957 = vmatpush1.bf16.msra.mxu0 %v1807
    %1958 = vmatprep.subr.bf16.mxu0 0
    %1959 = vmatpush1.bf16.msra.mxu0 0
    %1960 = vmatprep.subr.bf16.mxu0 0
    %1961 = vmatpush1.bf16.msra.mxu0 0
    %1962 = vmatprep.subr.bf16.mxu0 0
    %1963 = vmatpush1.bf16.msra.mxu0 0
    %1964 = vmatprep.subr.bf16.mxu0 0
    %1965 = vmatpush1.bf16.msra.mxu0 0
    %1966 = vmatprep.subr.bf16.mxu0 0
    %1967 = vmatpush1.bf16.msra.mxu0 0
    %1968 = vmatprep.subr.bf16.mxu0 0
    %1969 = vmatpush1.bf16.msra.mxu0 0
    %1970 = vmatprep.subr.bf16.mxu0 0
    %1971 = vmatpush1.bf16.msra.mxu0 0
    %1972 = vmatprep.subr.bf16.mxu0 0
    %1973 = vmatpush1.bf16.msra.mxu0 0
    %1974 = vmatprep.subr.bf16.mxu0 0
    %1975 = vmatpush1.bf16.msra.mxu0 0
    %1976 = vmatprep.subr.bf16.mxu0 0
    %1977 = vmatpush1.bf16.msra.mxu0 0
    %1978 = vmatprep.subr.bf16.mxu0 0
    %1979 = vmatpush1.bf16.msra.mxu0 0
    %1980 = vmatprep.subr.bf16.mxu0 0
    %1981 = vmatpush1.bf16.msra.mxu0 0
    %1982 = vmatprep.subr.bf16.mxu0 0
    %1983 = vmatpush1.bf16.msra.mxu0 0
    %1984 = vmatprep.subr.bf16.mxu0 0
    %1985 = vmatpush1.bf16.msra.mxu0 0
    %1986 = vmatprep.mubr.bf16.mxu0 0
    %1987 = vmatmul.mubr.bf16.gmra.mrb[0].mxu0 %v1952
    %v1988 = vpop.f32.mrb[0].mxu0
    %v1989 = vadd.f32 0.0, %v1988
    %v1990 = vpop.f32.mrb[0].mxu0
    %v1991 = vpop.f32.mrb[0].mxu0
    %v1992 = vpop.f32.mrb[0].mxu0
    %1993 = vdwg.mxu0
    %v1994 = vadd.f32 %v1782, %v1989
    %v1995 = vxor.u32 %v1994, 2147483648
    %v1996 = vmul.f32 %v1995, 1.442695
    %v1997 = vpow.pop %v1996
    %v1998 = vadd.f32 %v1997, 1.0
    %v1999 = vrcp.pop %v1998
    %v2000 = vmul.f32 1.0, %v1999
    %v2001 = vtanh.pop %v1994
    %v2002 = vmul.f32 %v2000, %v1940
    %2004 = vrot.lane.b32.xlu0 %v2001, 32
    %v2005 = vpop.permute.xlu0 %2004
    %v2007 = vmul.f32 %v2000, %v2005
    %2009 = vrot.lane.b32.xlu0 %v2007, 32
    %v2010 = vpop.permute.xlu0 %2009
    %v2012 = vadd.f32 %v2002, %v2010
    %v2013 = vtanh.pop %v2012
    %2015 = vrot.lane.b32.xlu0 %v2013, 32
    %v2016 = vpop.permute.xlu0 %2015
    %v2018 = vmul.f32 %v2000, %v2016
    %v2019 = vpack.c.bf16 %v2018, %v2018
    %2021 = vrot.lane.b32.xlu0 %v2019, 64
    %v2022 = vpop.permute.xlu0 %2021
    %v2024 = vsel %vm147, %v2022, 0
    %2026 = vmatprep.subr.bf16.mxu0 0
    %2027 = vmatpush1.bf16.msra.mxu0 %v1806
    %2028 = vmatprep.subr.bf16.mxu0 0
    %2029 = vmatpush1.bf16.msra.mxu0 %v1807
    %2030 = vmatprep.subr.bf16.mxu0 0
    %2031 = vmatpush1.bf16.msra.mxu0 0
    %2032 = vmatprep.subr.bf16.mxu0 0
    %2033 = vmatpush1.bf16.msra.mxu0 0
    %2034 = vmatprep.subr.bf16.mxu0 0
    %2035 = vmatpush1.bf16.msra.mxu0 0
    %2036 = vmatprep.subr.bf16.mxu0 0
    %2037 = vmatpush1.bf16.msra.mxu0 0
    %2038 = vmatprep.subr.bf16.mxu0 0
    %2039 = vmatpush1.bf16.msra.mxu0 0
    %2040 = vmatprep.subr.bf16.mxu0 0
    %2041 = vmatpush1.bf16.msra.mxu0 0
    %2042 = vmatprep.subr.bf16.mxu0 0
    %2043 = vmatpush1.bf16.msra.mxu0 0
    %2044 = vmatprep.subr.bf16.mxu0 0
    %2045 = vmatpush1.bf16.msra.mxu0 0
    %2046 = vmatprep.subr.bf16.mxu0 0
    %2047 = vmatpush1.bf16.msra.mxu0 0
    %2048 = vmatprep.subr.bf16.mxu0 0
    %2049 = vmatpush1.bf16.msra.mxu0 0
    %2050 = vmatprep.subr.bf16.mxu0 0
    %2051 = vmatpush1.bf16.msra.mxu0 0
    %2052 = vmatprep.subr.bf16.mxu0 0
    %2053 = vmatpush1.bf16.msra.mxu0 0
    %2054 = vmatprep.subr.bf16.mxu0 0
    %2055 = vmatpush1.bf16.msra.mxu0 0
    %2056 = vmatprep.subr.bf16.mxu0 0
    %2057 = vmatpush1.bf16.msra.mxu0 0
    %2058 = vmatprep.mubr.bf16.mxu0 0
    %2059 = vmatmul.mubr.bf16.gmra.mrb[0].mxu0 %v2024
    %v2060 = vpop.f32.mrb[0].mxu0
    %v2061 = vadd.f32 0.0, %v2060
    %v2062 = vpop.f32.mrb[0].mxu0
    %v2063 = vpop.f32.mrb[0].mxu0
    %v2064 = vpop.f32.mrb[0].mxu0
    %2065 = vdwg.mxu0
    %v2066 = vadd.f32 %v1784, %v2061
    %v2067 = vxor.u32 %v2066, 2147483648
    %v2068 = vmul.f32 %v2067, 1.442695
    %v2069 = vpow.pop %v2068
    %v2070 = vadd.f32 %v2069, 1.0
    %v2071 = vrcp.pop %v2070
    %v2072 = vmul.f32 1.0, %v2071
    %v2073 = vtanh.pop %v2066
    %v2074 = vmul.f32 %v2072, %v2012
    %2076 = vrot.lane.b32.xlu0 %v2073, 32
    %v2077 = vpop.permute.xlu0 %2076
    %v2079 = vmul.f32 %v2072, %v2077
    %2081 = vrot.lane.b32.xlu0 %v2079, 32
    %v2082 = vpop.permute.xlu0 %2081
    %v2084 = vadd.f32 %v2074, %v2082
    %v2085 = vtanh.pop %v2084
    %2087 = vrot.lane.b32.xlu0 %v2085, 32
    %v2088 = vpop.permute.xlu0 %2087
    %v2090 = vmul.f32 %v2072, %v2088
    %v2091 = vpack.c.bf16 %v2090, %v2090
    %2093 = vrot.lane.b32.xlu0 %v2091, 64
    %v2094 = vpop.permute.xlu0 %2093
    %v2096 = vsel %vm147, %v2094, 0
    %2098 = vmatprep.subr.bf16.mxu0 0
    %2099 = vmatpush1.bf16.msra.mxu0 %v1806
    %2100 = vmatprep.subr.bf16.mxu0 0
    %2101 = vmatpush1.bf16.msra.mxu0 %v1807
    %2102 = vmatprep.subr.bf16.mxu0 0
    %2103 = vmatpush1.bf16.msra.mxu0 0
    %2104 = vmatprep.subr.bf16.mxu0 0
    %2105 = vmatpush1.bf16.msra.mxu0 0
    %2106 = vmatprep.subr.bf16.mxu0 0
    %2107 = vmatpush1.bf16.msra.mxu0 0
    %2108 = vmatprep.subr.bf16.mxu0 0
    %2109 = vmatpush1.bf16.msra.mxu0 0
    %2110 = vmatprep.subr.bf16.mxu0 0
    %2111 = vmatpush1.bf16.msra.mxu0 0
    %2112 = vmatprep.subr.bf16.mxu0 0
    %2113 = vmatpush1.bf16.msra.mxu0 0
    %2114 = vmatprep.subr.bf16.mxu0 0
    %2115 = vmatpush1.bf16.msra.mxu0 0
    %2116 = vmatprep.subr.bf16.mxu0 0
    %2117 = vmatpush1.bf16.msra.mxu0 0
    %2118 = vmatprep.subr.bf16.mxu0 0
    %2119 = vmatpush1.bf16.msra.mxu0 0
    %2120 = vmatprep.subr.bf16.mxu0 0
    %2121 = vmatpush1.bf16.msra.mxu0 0
    %2122 = vmatprep.subr.bf16.mxu0 0
    %2123 = vmatpush1.bf16.msra.mxu0 0
    %2124 = vmatprep.subr.bf16.mxu0 0
    %2125 = vmatpush1.bf16.msra.mxu0 0
    %2126 = vmatprep.subr.bf16.mxu0 0
    %2127 = vmatpush1.bf16.msra.mxu0 0
    %2128 = vmatprep.subr.bf16.mxu0 0
    %2129 = vmatpush1.bf16.msra.mxu0 0
    %2130 = vmatprep.mubr.bf16.mxu0 0
    %2131 = vmatmul.mubr.bf16.gmra.mrb[0].mxu0 %v2096
    %v2132 = vpop.f32.mrb[0].mxu0
    %v2133 = vadd.f32 0.0, %v2132
    %v2134 = vpop.f32.mrb[0].mxu0
    %v2135 = vpop.f32.mrb[0].mxu0
    %v2136 = vpop.f32.mrb[0].mxu0
    %2137 = vdwg.mxu0
    %v2138 = vadd.f32 %v1786, %v2133
    %v2139 = vxor.u32 %v2138, 2147483648
    %v2140 = vmul.f32 %v2139, 1.442695
    %v2141 = vpow.pop %v2140
    %v2142 = vadd.f32 %v2141, 1.0
    %v2143 = vrcp.pop %v2142
    %v2144 = vmul.f32 1.0, %v2143
    %v2145 = vtanh.pop %v2138
    %v2146 = vmul.f32 %v2144, %v2084
    %2148 = vrot.lane.b32.xlu0 %v2145, 32
    %v2149 = vpop.permute.xlu0 %2148
    %v2151 = vmul.f32 %v2144, %v2149
    %2153 = vrot.lane.b32.xlu0 %v2151, 32
    %v2154 = vpop.permute.xlu0 %2153
    %v2156 = vadd.f32 %v2146, %v2154
    %v2157 = vtanh.pop %v2156
    %2159 = vrot.lane.b32.xlu0 %v2157, 32
    %v2160 = vpop.permute.xlu0 %2159
    %v2162 = vmul.f32 %v2144, %v2160
    %v2163 = vpack.c.bf16 %v2162, %v2162
    %2165 = vrot.lane.b32.xlu0 %v2163, 64
    %v2166 = vpop.permute.xlu0 %2165
    %v2168 = vsel %vm147, %v2166, 0
    %2170 = vmatprep.subr.bf16.mxu0 0
    %2171 = vmatpush1.bf16.msra.mxu0 %v1806
    %2172 = vmatprep.subr.bf16.mxu0 0
    %2173 = vmatpush1.bf16.msra.mxu0 %v1807
    %2174 = vmatprep.subr.bf16.mxu0 0
    %2175 = vmatpush1.bf16.msra.mxu0 0
    %2176 = vmatprep.subr.bf16.mxu0 0
    %2177 = vmatpush1.bf16.msra.mxu0 0
    %2178 = vmatprep.subr.bf16.mxu0 0
    %2179 = vmatpush1.bf16.msra.mxu0 0
    %2180 = vmatprep.subr.bf16.mxu0 0
    %2181 = vmatpush1.bf16.msra.mxu0 0
    %2182 = vmatprep.subr.bf16.mxu0 0
    %2183 = vmatpush1.bf16.msra.mxu0 0
    %2184 = vmatprep.subr.bf16.mxu0 0
    %2185 = vmatpush1.bf16.msra.mxu0 0
    %2186 = vmatprep.subr.bf16.mxu0 0
    %2187 = vmatpush1.bf16.msra.mxu0 0
    %2188 = vmatprep.subr.bf16.mxu0 0
    %2189 = vmatpush1.bf16.msra.mxu0 0
    %2190 = vmatprep.subr.bf16.mxu0 0
    %2191 = vmatpush1.bf16.msra.mxu0 0
    %2192 = vmatprep.subr.bf16.mxu0 0
    %2193 = vmatpush1.bf16.msra.mxu0 0
    %2194 = vmatprep.subr.bf16.mxu0 0
    %2195 = vmatpush1.bf16.msra.mxu0 0
    %2196 = vmatprep.subr.bf16.mxu0 0
    %2197 = vmatpush1.bf16.msra.mxu0 0
    %2198 = vmatprep.subr.bf16.mxu0 0
    %2199 = vmatpush1.bf16.msra.mxu0 0
    %2200 = vmatprep.subr.bf16.mxu0 0
    %2201 = vmatpush1.bf16.msra.mxu0 0
    %2202 = vmatprep.mubr.bf16.mxu0 0
    %2203 = vmatmul.mubr.bf16.gmra.mrb[0].mxu0 %v2168
    %v2204 = vpop.f32.mrb[0].mxu0
    %v2205 = vadd.f32 0.0, %v2204
    %v2206 = vpop.f32.mrb[0].mxu0
    %v2207 = vpop.f32.mrb[0].mxu0
    %v2208 = vpop.f32.mrb[0].mxu0
    %2209 = vdwg.mxu0
    %v2210 = vadd.f32 %v1788, %v2205
    %v2211 = vxor.u32 %v2210, 2147483648
    %v2212 = vmul.f32 %v2211, 1.442695
    %v2213 = vpow.pop %v2212
    %v2214 = vadd.f32 %v2213, 1.0
    %v2215 = vrcp.pop %v2214
    %v2216 = vmul.f32 1.0, %v2215
    %v2217 = vtanh.pop %v2210
    %v2218 = vmul.f32 %v2216, %v2156
    %2220 = vrot.lane.b32.xlu0 %v2217, 32
    %v2221 = vpop.permute.xlu0 %2220
    %v2223 = vmul.f32 %v2216, %v2221
    %2225 = vrot.lane.b32.xlu0 %v2223, 32
    %v2226 = vpop.permute.xlu0 %2225
    %v2228 = vadd.f32 %v2218, %v2226
    %v2229 = vtanh.pop %v2228
    %2231 = vrot.lane.b32.xlu0 %v2229, 32
    %v2232 = vpop.permute.xlu0 %2231
    %v2234 = vmul.f32 %v2216, %v2232
    %v2235 = vpack.c.bf16 %v2234, %v2234
    %2237 = vrot.lane.b32.xlu0 %v2235, 64
    %v2238 = vpop.permute.xlu0 %2237
    %v2240 = vsel %vm147, %v2238, 0
    %2242 = vmatprep.subr.bf16.mxu0 0
    %2243 = vmatpush1.bf16.msra.mxu0 %v1806
    %2244 = vmatprep.subr.bf16.mxu0 0
    %2245 = vmatpush1.bf16.msra.mxu0 %v1807
    %2246 = vmatprep.subr.bf16.mxu0 0
    %2247 = vmatpush1.bf16.msra.mxu0 0
    %2248 = vmatprep.subr.bf16.mxu0 0
    %2249 = vmatpush1.bf16.msra.mxu0 0
    %2250 = vmatprep.subr.bf16.mxu0 0
    %2251 = vmatpush1.bf16.msra.mxu0 0
    %2252 = vmatprep.subr.bf16.mxu0 0
    %2253 = vmatpush1.bf16.msra.mxu0 0
    %2254 = vmatprep.subr.bf16.mxu0 0
    %2255 = vmatpush1.bf16.msra.mxu0 0
    %2256 = vmatprep.subr.bf16.mxu0 0
    %2257 = vmatpush1.bf16.msra.mxu0 0
    %2258 = vmatprep.subr.bf16.mxu0 0
    %2259 = vmatpush1.bf16.msra.mxu0 0
    %2260 = vmatprep.subr.bf16.mxu0 0
    %2261 = vmatpush1.bf16.msra.mxu0 0
    %2262 = vmatprep.subr.bf16.mxu0 0
    %2263 = vmatpush1.bf16.msra.mxu0 0
    %2264 = vmatprep.subr.bf16.mxu0 0
    %2265 = vmatpush1.bf16.msra.mxu0 0
    %2266 = vmatprep.subr.bf16.mxu0 0
    %2267 = vmatpush1.bf16.msra.mxu0 0
    %2268 = vmatprep.subr.bf16.mxu0 0
    %2269 = vmatpush1.bf16.msra.mxu0 0
    %2270 = vmatprep.subr.bf16.mxu0 0
    %2271 = vmatpush1.bf16.msra.mxu0 0
    %2272 = vmatprep.subr.bf16.mxu0 0
    %2273 = vmatpush1.bf16.msra.mxu0 0
    %2274 = vmatprep.mubr.bf16.mxu0 0
    %2275 = vmatmul.mubr.bf16.gmra.mrb[0].mxu0 %v2240
    %v2276 = vpop.f32.mrb[0].mxu0
    %v2277 = vadd.f32 0.0, %v2276
    %v2278 = vpop.f32.mrb[0].mxu0
    %v2279 = vpop.f32.mrb[0].mxu0
    %v2280 = vpop.f32.mrb[0].mxu0
    %2281 = vdwg.mxu0
    %v2282 = vadd.f32 %v1790, %v2277
    %v2283 = vxor.u32 %v2282, 2147483648
    %v2284 = vmul.f32 %v2283, 1.442695
    %v2285 = vpow.pop %v2284
    %v2286 = vadd.f32 %v2285, 1.0
    %v2287 = vrcp.pop %v2286
    %v2288 = vmul.f32 1.0, %v2287
    %v2289 = vtanh.pop %v2282
    %v2290 = vmul.f32 %v2288, %v2228
    %2292 = vrot.lane.b32.xlu0 %v2289, 32
    %v2293 = vpop.permute.xlu0 %2292
    %v2295 = vmul.f32 %v2288, %v2293
    %2297 = vrot.lane.b32.xlu0 %v2295, 32
    %v2298 = vpop.permute.xlu0 %2297
    %v2300 = vadd.f32 %v2290, %v2298
    %v2301 = vtanh.pop %v2300
    %2303 = vrot.lane.b32.xlu0 %v2301, 32
    %v2304 = vpop.permute.xlu0 %2303
    %v2306 = vmul.f32 %v2288, %v2304
    %v2307 = vpack.c.bf16 %v2306, %v2306
    %2309 = vrot.lane.b32.xlu0 %v2307, 64
    %v2310 = vpop.permute.xlu0 %2309
    %v2312 = vsel %vm147, %v2310, 0
    %2314 = vmatprep.subr.bf16.mxu0 0
    %2315 = vmatpush1.bf16.msra.mxu0 %v1806
    %2316 = vmatprep.subr.bf16.mxu0 0
    %2317 = vmatpush1.bf16.msra.mxu0 %v1807
    %2318 = vmatprep.subr.bf16.mxu0 0
    %2319 = vmatpush1.bf16.msra.mxu0 0
    %2320 = vmatprep.subr.bf16.mxu0 0
    %2321 = vmatpush1.bf16.msra.mxu0 0
    %2322 = vmatprep.subr.bf16.mxu0 0
    %2323 = vmatpush1.bf16.msra.mxu0 0
    %2324 = vmatprep.subr.bf16.mxu0 0
    %2325 = vmatpush1.bf16.msra.mxu0 0
    %2326 = vmatprep.subr.bf16.mxu0 0
    %2327 = vmatpush1.bf16.msra.mxu0 0
    %2328 = vmatprep.subr.bf16.mxu0 0
    %2329 = vmatpush1.bf16.msra.mxu0 0
    %2330 = vmatprep.subr.bf16.mxu0 0
    %2331 = vmatpush1.bf16.msra.mxu0 0
    %2332 = vmatprep.subr.bf16.mxu0 0
    %2333 = vmatpush1.bf16.msra.mxu0 0
    %2334 = vmatprep.subr.bf16.mxu0 0
    %2335 = vmatpush1.bf16.msra.mxu0 0
    %2336 = vmatprep.subr.bf16.mxu0 0
    %2337 = vmatpush1.bf16.msra.mxu0 0
    %2338 = vmatprep.subr.bf16.mxu0 0
    %2339 = vmatpush1.bf16.msra.mxu0 0
    %2340 = vmatprep.subr.bf16.mxu0 0
    %2341 = vmatpush1.bf16.msra.mxu0 0
    %2342 = vmatprep.subr.bf16.mxu0 0
    %2343 = vmatpush1.bf16.msra.mxu0 0
    %2344 = vmatprep.subr.bf16.mxu0 0
    %2345 = vmatpush1.bf16.msra.mxu0 0
    %2346 = vmatprep.mubr.bf16.mxu0 0
    %2347 = vmatmul.mubr.bf16.gmra.mrb[0].mxu0 %v2312
    %v2348 = vpop.f32.mrb[0].mxu0
    %v2349 = vadd.f32 0.0, %v2348
    %v2350 = vpop.f32.mrb[0].mxu0
    %v2351 = vpop.f32.mrb[0].mxu0
    %v2352 = vpop.f32.mrb[0].mxu0
    %2353 = vdwg.mxu0
    %v2354 = vadd.f32 %v1792, %v2349
    %v2355 = vxor.u32 %v2354, 2147483648
    %v2356 = vmul.f32 %v2355, 1.442695
    %v2357 = vpow.pop %v2356
    %v2358 = vadd.f32 %v2357, 1.0
    %v2359 = vrcp.pop %v2358
    %v2360 = vmul.f32 1.0, %v2359
    %v2361 = vtanh.pop %v2354
    %v2362 = vmul.f32 %v2360, %v2300
    %2364 = vrot.lane.b32.xlu0 %v2361, 32
    %v2365 = vpop.permute.xlu0 %2364
    %v2367 = vmul.f32 %v2360, %v2365
    %2369 = vrot.lane.b32.xlu0 %v2367, 32
    %v2370 = vpop.permute.xlu0 %2369
    %v2372 = vadd.f32 %v2362, %v2370
    %v2373 = vtanh.pop %v2372
    %2375 = vrot.lane.b32.xlu0 %v2373, 32
    %v2376 = vpop.permute.xlu0 %2375
    %v2378 = vmul.f32 %v2360, %v2376
    %v2379 = vld [vmem:[%s9] sm:$0xf]
    %v2380 = vld [vmem:[%s9 + $0x4] sm:$0xf]
    %v2381 = vld [vmem:[%s9 + $0x8] sm:$0xf]
    %v2382 = vld [vmem:[%s9 + $0xc] sm:$0xf]
    %v2387 = vunpack.c.l.b16 %v2379
    %v2388 = vunpack.c.l.b16 %v2380
    %v2389 = vunpack.c.l.b16 %v2381
    %v2390 = vunpack.c.l.b16 %v2382
    %v2391 = vpack.c.b16 %v2388, %v2387
    %v2392 = vpack.c.b16 %v2390, %v2389
    %2395 = vmatprep.subr.bf16.mxu0 0
    %2396 = vmatpush1.bf16.msra.mxu0 %v2391
    %2397 = vmatprep.subr.bf16.mxu0 0
    %2398 = vmatpush1.bf16.msra.mxu0 %v2392
    %2399 = vmatprep.subr.bf16.mxu0 0
    %2400 = vmatpush1.bf16.msra.mxu0 0
    %2401 = vmatprep.subr.bf16.mxu0 0
    %2402 = vmatpush1.bf16.msra.mxu0 0
    %2403 = vmatprep.subr.bf16.mxu0 0
    %2404 = vmatpush1.bf16.msra.mxu0 0
    %2405 = vmatprep.subr.bf16.mxu0 0
    %2406 = vmatpush1.bf16.msra.mxu0 0
    %2407 = vmatprep.subr.bf16.mxu0 0
    %2408 = vmatpush1.bf16.msra.mxu0 0
    %2409 = vmatprep.subr.bf16.mxu0 0
    %2410 = vmatpush1.bf16.msra.mxu0 0
    %2411 = vmatprep.subr.bf16.mxu0 0
    %2412 = vmatpush1.bf16.msra.mxu0 0
    %2413 = vmatprep.subr.bf16.mxu0 0
    %2414 = vmatpush1.bf16.msra.mxu0 0
    %2415 = vmatprep.subr.bf16.mxu0 0
    %2416 = vmatpush1.bf16.msra.mxu0 0
    %2417 = vmatprep.subr.bf16.mxu0 0
    %2418 = vmatpush1.bf16.msra.mxu0 0
    %2419 = vmatprep.subr.bf16.mxu0 0
    %2420 = vmatpush1.bf16.msra.mxu0 0
    %2421 = vmatprep.subr.bf16.mxu0 0
    %2422 = vmatpush1.bf16.msra.mxu0 0
    %2423 = vmatprep.subr.bf16.mxu0 0
    %2424 = vmatpush1.bf16.msra.mxu0 0
    %2425 = vmatprep.subr.bf16.mxu0 0
    %2426 = vmatpush1.bf16.msra.mxu0 0
    %2427 = vmatprep.mubr.bf16.mxu0 0
    %2428 = vmatmul.mubr.bf16.gmra.mrb[0].mxu0 %v383
    %v2429 = vpop.f32.mrb[0].mxu0
    %v2430 = vadd.f32 0.0, %v2429
    %v2431 = vpop.f32.mrb[0].mxu0
    %v2432 = vpop.f32.mrb[0].mxu0
    %v2433 = vpop.f32.mrb[0].mxu0
    %2434 = vdwg.mxu0
    %v2435 = vadd.f32 %v1793, %v2430
    %v2436 = vxor.u32 %v2435, 2147483648
    %v2437 = vmul.f32 %v2436, 1.442695
    %v2438 = vpow.pop %v2437
    %v2439 = vadd.f32 %v2438, 1.0
    %v2440 = vrcp.pop %v2439
    %v2441 = vmul.f32 1.0, %v2440
    %v2442 = vtanh.pop %v2435
    %v2443 = vmul.f32 %v2441, 0.0
    %2445 = vrot.lane.b32.xlu0 %v2442, 32
    %v2446 = vpop.permute.xlu0 %2445
    %v2448 = vmul.f32 %v2441, %v2446
    %2450 = vrot.lane.b32.xlu0 %v2448, 32
    %v2451 = vpop.permute.xlu0 %2450
    %v2453 = vadd.f32 %v2443, %v2451
    %v2454 = vtanh.pop %v2453
    %2456 = vrot.lane.b32.xlu0 %v2454, 32
    %v2457 = vpop.permute.xlu0 %2456
    %v2459 = vmul.f32 %v2441, %v2457
    %v2460 = vpack.c.bf16 %v2459, %v2459
    %2462 = vrot.lane.b32.xlu0 %v2460, 64
    %v2463 = vpop.permute.xlu0 %2462
    %v2465 = vsel %vm147, %v2463, 0
    %2467 = vmatprep.subr.bf16.mxu0 0
    %2468 = vmatpush1.bf16.msra.mxu0 %v2391
    %2469 = vmatprep.subr.bf16.mxu0 0
    %2470 = vmatpush1.bf16.msra.mxu0 %v2392
    %2471 = vmatprep.subr.bf16.mxu0 0
    %2472 = vmatpush1.bf16.msra.mxu0 0
    %2473 = vmatprep.subr.bf16.mxu0 0
    %2474 = vmatpush1.bf16.msra.mxu0 0
    %2475 = vmatprep.subr.bf16.mxu0 0
    %2476 = vmatpush1.bf16.msra.mxu0 0
    %2477 = vmatprep.subr.bf16.mxu0 0
    %2478 = vmatpush1.bf16.msra.mxu0 0
    %2479 = vmatprep.subr.bf16.mxu0 0
    %2480 = vmatpush1.bf16.msra.mxu0 0
    %2481 = vmatprep.subr.bf16.mxu0 0
    %2482 = vmatpush1.bf16.msra.mxu0 0
    %2483 = vmatprep.subr.bf16.mxu0 0
    %2484 = vmatpush1.bf16.msra.mxu0 0
    %2485 = vmatprep.subr.bf16.mxu0 0
    %2486 = vmatpush1.bf16.msra.mxu0 0
    %2487 = vmatprep.subr.bf16.mxu0 0
    %2488 = vmatpush1.bf16.msra.mxu0 0
    %2489 = vmatprep.subr.bf16.mxu0 0
    %2490 = vmatpush1.bf16.msra.mxu0 0
    %2491 = vmatprep.subr.bf16.mxu0 0
    %2492 = vmatpush1.bf16.msra.mxu0 0
    %2493 = vmatprep.subr.bf16.mxu0 0
    %2494 = vmatpush1.bf16.msra.mxu0 0
    %2495 = vmatprep.subr.bf16.mxu0 0
    %2496 = vmatpush1.bf16.msra.mxu0 0
    %2497 = vmatprep.subr.bf16.mxu0 0
    %2498 = vmatpush1.bf16.msra.mxu0 0
    %2499 = vmatprep.mubr.bf16.mxu0 0
    %2500 = vmatmul.mubr.bf16.gmra.mrb[0].mxu0 %v2465
    %v2501 = vpop.f32.mrb[0].mxu0
    %v2502 = vadd.f32 0.0, %v2501
    %v2503 = vpop.f32.mrb[0].mxu0
    %v2504 = vpop.f32.mrb[0].mxu0
    %v2505 = vpop.f32.mrb[0].mxu0
    %2506 = vdwg.mxu0
    %v2507 = vadd.f32 %v1791, %v2502
    %v2508 = vxor.u32 %v2507, 2147483648
    %v2509 = vmul.f32 %v2508, 1.442695
    %v2510 = vpow.pop %v2509
    %v2511 = vadd.f32 %v2510, 1.0
    %v2512 = vrcp.pop %v2511
    %v2513 = vmul.f32 1.0, %v2512
    %v2514 = vtanh.pop %v2507
    %v2515 = vmul.f32 %v2513, %v2453
    %2517 = vrot.lane.b32.xlu0 %v2514, 32
    %v2518 = vpop.permute.xlu0 %2517
    %v2520 = vmul.f32 %v2513, %v2518
    %2522 = vrot.lane.b32.xlu0 %v2520, 32
    %v2523 = vpop.permute.xlu0 %2522
    %v2525 = vadd.f32 %v2515, %v2523
    %v2526 = vtanh.pop %v2525
    %2528 = vrot.lane.b32.xlu0 %v2526, 32
    %v2529 = vpop.permute.xlu0 %2528
    %v2531 = vmul.f32 %v2513, %v2529
    %v2532 = vpack.c.bf16 %v2531, %v2531
    %2534 = vrot.lane.b32.xlu0 %v2532, 64
    %v2535 = vpop.permute.xlu0 %2534
    %v2537 = vsel %vm147, %v2535, 0
    %2539 = vmatprep.subr.bf16.mxu0 0
    %2540 = vmatpush1.bf16.msra.mxu0 %v2391
    %2541 = vmatprep.subr.bf16.mxu0 0
    %2542 = vmatpush1.bf16.msra.mxu0 %v2392
    %2543 = vmatprep.subr.bf16.mxu0 0
    %2544 = vmatpush1.bf16.msra.mxu0 0
    %2545 = vmatprep.subr.bf16.mxu0 0
    %2546 = vmatpush1.bf16.msra.mxu0 0
    %2547 = vmatprep.subr.bf16.mxu0 0
    %2548 = vmatpush1.bf16.msra.mxu0 0
    %2549 = vmatprep.subr.bf16.mxu0 0
    %2550 = vmatpush1.bf16.msra.mxu0 0
    %2551 = vmatprep.subr.bf16.mxu0 0
    %2552 = vmatpush1.bf16.msra.mxu0 0
    %2553 = vmatprep.subr.bf16.mxu0 0
    %2554 = vmatpush1.bf16.msra.mxu0 0
    %2555 = vmatprep.subr.bf16.mxu0 0
    %2556 = vmatpush1.bf16.msra.mxu0 0
    %2557 = vmatprep.subr.bf16.mxu0 0
    %2558 = vmatpush1.bf16.msra.mxu0 0
    %2559 = vmatprep.subr.bf16.mxu0 0
    %2560 = vmatpush1.bf16.msra.mxu0 0
    %2561 = vmatprep.subr.bf16.mxu0 0
    %2562 = vmatpush1.bf16.msra.mxu0 0
    %2563 = vmatprep.subr.bf16.mxu0 0
    %2564 = vmatpush1.bf16.msra.mxu0 0
    %2565 = vmatprep.subr.bf16.mxu0 0
    %2566 = vmatpush1.bf16.msra.mxu0 0
    %2567 = vmatprep.subr.bf16.mxu0 0
    %2568 = vmatpush1.bf16.msra.mxu0 0
    %2569 = vmatprep.subr.bf16.mxu0 0
    %2570 = vmatpush1.bf16.msra.mxu0 0
    %2571 = vmatprep.mubr.bf16.mxu0 0
    %2572 = vmatmul.mubr.bf16.gmra.mrb[0].mxu0 %v2537
    %v2573 = vpop.f32.mrb[0].mxu0
    %v2574 = vadd.f32 0.0, %v2573
    %v2575 = vpop.f32.mrb[0].mxu0
    %v2576 = vpop.f32.mrb[0].mxu0
    %v2577 = vpop.f32.mrb[0].mxu0
    %2578 = vdwg.mxu0
    %v2579 = vadd.f32 %v1789, %v2574
    %v2580 = vxor.u32 %v2579, 2147483648
    %v2581 = vmul.f32 %v2580, 1.442695
    %v2582 = vpow.pop %v2581
    %v2583 = vadd.f32 %v2582, 1.0
    %v2584 = vrcp.pop %v2583
    %v2585 = vmul.f32 1.0, %v2584
    %v2586 = vtanh.pop %v2579
    %v2587 = vmul.f32 %v2585, %v2525
    %2589 = vrot.lane.b32.xlu0 %v2586, 32
    %v2590 = vpop.permute.xlu0 %2589
    %v2592 = vmul.f32 %v2585, %v2590
    %2594 = vrot.lane.b32.xlu0 %v2592, 32
    %v2595 = vpop.permute.xlu0 %2594
    %v2597 = vadd.f32 %v2587, %v2595
    %v2598 = vtanh.pop %v2597
    %2600 = vrot.lane.b32.xlu0 %v2598, 32
    %v2601 = vpop.permute.xlu0 %2600
    %v2603 = vmul.f32 %v2585, %v2601
    %v2604 = vpack.c.bf16 %v2603, %v2603
    %2606 = vrot.lane.b32.xlu0 %v2604, 64
    %v2607 = vpop.permute.xlu0 %2606
    %v2609 = vsel %vm147, %v2607, 0
    %2611 = vmatprep.subr.bf16.mxu0 0
    %2612 = vmatpush1.bf16.msra.mxu0 %v2391
    %2613 = vmatprep.subr.bf16.mxu0 0
    %2614 = vmatpush1.bf16.msra.mxu0 %v2392
    %2615 = vmatprep.subr.bf16.mxu0 0
    %2616 = vmatpush1.bf16.msra.mxu0 0
    %2617 = vmatprep.subr.bf16.mxu0 0
    %2618 = vmatpush1.bf16.msra.mxu0 0
    %2619 = vmatprep.subr.bf16.mxu0 0
    %2620 = vmatpush1.bf16.msra.mxu0 0
    %2621 = vmatprep.subr.bf16.mxu0 0
    %2622 = vmatpush1.bf16.msra.mxu0 0
    %2623 = vmatprep.subr.bf16.mxu0 0
    %2624 = vmatpush1.bf16.msra.mxu0 0
    %2625 = vmatprep.subr.bf16.mxu0 0
    %2626 = vmatpush1.bf16.msra.mxu0 0
    %2627 = vmatprep.subr.bf16.mxu0 0
    %2628 = vmatpush1.bf16.msra.mxu0 0
    %2629 = vmatprep.subr.bf16.mxu0 0
    %2630 = vmatpush1.bf16.msra.mxu0 0
    %2631 = vmatprep.subr.bf16.mxu0 0
    %2632 = vmatpush1.bf16.msra.mxu0 0
    %2633 = vmatprep.subr.bf16.mxu0 0
    %2634 = vmatpush1.bf16.msra.mxu0 0
    %2635 = vmatprep.subr.bf16.mxu0 0
    %2636 = vmatpush1.bf16.msra.mxu0 0
    %2637 = vmatprep.subr.bf16.mxu0 0
    %2638 = vmatpush1.bf16.msra.mxu0 0
    %2639 = vmatprep.subr.bf16.mxu0 0
    %2640 = vmatpush1.bf16.msra.mxu0 0
    %2641 = vmatprep.subr.bf16.mxu0 0
    %2642 = vmatpush1.bf16.msra.mxu0 0
    %2643 = vmatprep.mubr.bf16.mxu0 0
    %2644 = vmatmul.mubr.bf16.gmra.mrb[0].mxu0 %v2609
    %v2645 = vpop.f32.mrb[0].mxu0
    %v2646 = vadd.f32 0.0, %v2645
    %v2647 = vpop.f32.mrb[0].mxu0
    %v2648 = vpop.f32.mrb[0].mxu0
    %v2649 = vpop.f32.mrb[0].mxu0
    %2650 = vdwg.mxu0
    %v2651 = vadd.f32 %v1787, %v2646
    %v2652 = vxor.u32 %v2651, 2147483648
    %v2653 = vmul.f32 %v2652, 1.442695
    %v2654 = vpow.pop %v2653
    %v2655 = vadd.f32 %v2654, 1.0
    %v2656 = vrcp.pop %v2655
    %v2657 = vmul.f32 1.0, %v2656
    %v2658 = vtanh.pop %v2651
    %v2659 = vmul.f32 %v2657, %v2597
    %2661 = vrot.lane.b32.xlu0 %v2658, 32
    %v2662 = vpop.permute.xlu0 %2661
    %v2664 = vmul.f32 %v2657, %v2662
    %2666 = vrot.lane.b32.xlu0 %v2664, 32
    %v2667 = vpop.permute.xlu0 %2666
    %v2669 = vadd.f32 %v2659, %v2667
    %v2670 = vtanh.pop %v2669
    %2672 = vrot.lane.b32.xlu0 %v2670, 32
    %v2673 = vpop.permute.xlu0 %2672
    %v2675 = vmul.f32 %v2657, %v2673
    %v2676 = vpack.c.bf16 %v2675, %v2675
    %2678 = vrot.lane.b32.xlu0 %v2676, 64
    %v2679 = vpop.permute.xlu0 %2678
    %v2681 = vsel %vm147, %v2679, 0
    %2683 = vmatprep.subr.bf16.mxu0 0
    %2684 = vmatpush1.bf16.msra.mxu0 %v2391
    %2685 = vmatprep.subr.bf16.mxu0 0
    %2686 = vmatpush1.bf16.msra.mxu0 %v2392
    %2687 = vmatprep.subr.bf16.mxu0 0
    %2688 = vmatpush1.bf16.msra.mxu0 0
    %2689 = vmatprep.subr.bf16.mxu0 0
    %2690 = vmatpush1.bf16.msra.mxu0 0
    %2691 = vmatprep.subr.bf16.mxu0 0
    %2692 = vmatpush1.bf16.msra.mxu0 0
    %2693 = vmatprep.subr.bf16.mxu0 0
    %2694 = vmatpush1.bf16.msra.mxu0 0
    %2695 = vmatprep.subr.bf16.mxu0 0
    %2696 = vmatpush1.bf16.msra.mxu0 0
    %2697 = vmatprep.subr.bf16.mxu0 0
    %2698 = vmatpush1.bf16.msra.mxu0 0
    %2699 = vmatprep.subr.bf16.mxu0 0
    %2700 = vmatpush1.bf16.msra.mxu0 0
    %2701 = vmatprep.subr.bf16.mxu0 0
    %2702 = vmatpush1.bf16.msra.mxu0 0
    %2703 = vmatprep.subr.bf16.mxu0 0
    %2704 = vmatpush1.bf16.msra.mxu0 0
    %2705 = vmatprep.subr.bf16.mxu0 0
    %2706 = vmatpush1.bf16.msra.mxu0 0
    %2707 = vmatprep.subr.bf16.mxu0 0
    %2708 = vmatpush1.bf16.msra.mxu0 0
    %2709 = vmatprep.subr.bf16.mxu0 0
    %2710 = vmatpush1.bf16.msra.mxu0 0
    %2711 = vmatprep.subr.bf16.mxu0 0
    %2712 = vmatpush1.bf16.msra.mxu0 0
    %2713 = vmatprep.subr.bf16.mxu0 0
    %2714 = vmatpush1.bf16.msra.mxu0 0
    %2715 = vmatprep.mubr.bf16.mxu0 0
    %2716 = vmatmul.mubr.bf16.gmra.mrb[0].mxu0 %v2681
    %v2717 = vpop.f32.mrb[0].mxu0
    %v2718 = vadd.f32 0.0, %v2717
    %v2719 = vpop.f32.mrb[0].mxu0
    %v2720 = vpop.f32.mrb[0].mxu0
    %v2721 = vpop.f32.mrb[0].mxu0
    %2722 = vdwg.mxu0
    %v2723 = vadd.f32 %v1785, %v2718
    %v2724 = vxor.u32 %v2723, 2147483648
    %v2725 = vmul.f32 %v2724, 1.442695
    %v2726 = vpow.pop %v2725
    %v2727 = vadd.f32 %v2726, 1.0
    %v2728 = vrcp.pop %v2727
    %v2729 = vmul.f32 1.0, %v2728
    %v2730 = vtanh.pop %v2723
    %v2731 = vmul.f32 %v2729, %v2669
    %2733 = vrot.lane.b32.xlu0 %v2730, 32
    %v2734 = vpop.permute.xlu0 %2733
    %v2736 = vmul.f32 %v2729, %v2734
    %2738 = vrot.lane.b32.xlu0 %v2736, 32
    %v2739 = vpop.permute.xlu0 %2738
    %v2741 = vadd.f32 %v2731, %v2739
    %v2742 = vtanh.pop %v2741
    %2744 = vrot.lane.b32.xlu0 %v2742, 32
    %v2745 = vpop.permute.xlu0 %2744
    %v2747 = vmul.f32 %v2729, %v2745
    %v2748 = vpack.c.bf16 %v2747, %v2747
    %2750 = vrot.lane.b32.xlu0 %v2748, 64
    %v2751 = vpop.permute.xlu0 %2750
    %v2753 = vsel %vm147, %v2751, 0
    %2755 = vmatprep.subr.bf16.mxu0 0
    %2756 = vmatpush1.bf16.msra.mxu0 %v2391
    %2757 = vmatprep.subr.bf16.mxu0 0
    %2758 = vmatpush1.bf16.msra.mxu0 %v2392
    %2759 = vmatprep.subr.bf16.mxu0 0
    %2760 = vmatpush1.bf16.msra.mxu0 0
    %2761 = vmatprep.subr.bf16.mxu0 0
    %2762 = vmatpush1.bf16.msra.mxu0 0
    %2763 = vmatprep.subr.bf16.mxu0 0
    %2764 = vmatpush1.bf16.msra.mxu0 0
    %2765 = vmatprep.subr.bf16.mxu0 0
    %2766 = vmatpush1.bf16.msra.mxu0 0
    %2767 = vmatprep.subr.bf16.mxu0 0
    %2768 = vmatpush1.bf16.msra.mxu0 0
    %2769 = vmatprep.subr.bf16.mxu0 0
    %2770 = vmatpush1.bf16.msra.mxu0 0
    %2771 = vmatprep.subr.bf16.mxu0 0
    %2772 = vmatpush1.bf16.msra.mxu0 0
    %2773 = vmatprep.subr.bf16.mxu0 0
    %2774 = vmatpush1.bf16.msra.mxu0 0
    %2775 = vmatprep.subr.bf16.mxu0 0
    %2776 = vmatpush1.bf16.msra.mxu0 0
    %2777 = vmatprep.subr.bf16.mxu0 0
    %2778 = vmatpush1.bf16.msra.mxu0 0
    %2779 = vmatprep.subr.bf16.mxu0 0
    %2780 = vmatpush1.bf16.msra.mxu0 0
    %2781 = vmatprep.subr.bf16.mxu0 0
    %2782 = vmatpush1.bf16.msra.mxu0 0
    %2783 = vmatprep.subr.bf16.mxu0 0
    %2784 = vmatpush1.bf16.msra.mxu0 0
    %2785 = vmatprep.subr.bf16.mxu0 0
    %2786 = vmatpush1.bf16.msra.mxu0 0
    %2787 = vmatprep.mubr.bf16.mxu0 0
    %2788 = vmatmul.mubr.bf16.gmra.mrb[0].mxu0 %v2753
    %v2789 = vpop.f32.mrb[0].mxu0
    %v2790 = vadd.f32 0.0, %v2789
    %v2791 = vpop.f32.mrb[0].mxu0
    %v2792 = vpop.f32.mrb[0].mxu0
    %v2793 = vpop.f32.mrb[0].mxu0
    %2794 = vdwg.mxu0
    %v2795 = vadd.f32 %v1783, %v2790
    %v2796 = vxor.u32 %v2795, 2147483648
    %v2797 = vmul.f32 %v2796, 1.442695
    %v2798 = vpow.pop %v2797
    %v2799 = vadd.f32 %v2798, 1.0
    %v2800 = vrcp.pop %v2799
    %v2801 = vmul.f32 1.0, %v2800
    %v2802 = vtanh.pop %v2795
    %v2803 = vmul.f32 %v2801, %v2741
    %2805 = vrot.lane.b32.xlu0 %v2802, 32
    %v2806 = vpop.permute.xlu0 %2805
    %v2808 = vmul.f32 %v2801, %v2806
    %2810 = vrot.lane.b32.xlu0 %v2808, 32
    %v2811 = vpop.permute.xlu0 %2810
    %v2813 = vadd.f32 %v2803, %v2811
    %v2814 = vtanh.pop %v2813
    %2816 = vrot.lane.b32.xlu0 %v2814, 32
    %v2817 = vpop.permute.xlu0 %2816
    %v2819 = vmul.f32 %v2801, %v2817
    %v2820 = vpack.c.bf16 %v2819, %v2819
    %2822 = vrot.lane.b32.xlu0 %v2820, 64
    %v2823 = vpop.permute.xlu0 %2822
    %v2825 = vsel %vm147, %v2823, 0
    %2827 = vmatprep.subr.bf16.mxu0 0
    %2828 = vmatpush1.bf16.msra.mxu0 %v2391
    %2829 = vmatprep.subr.bf16.mxu0 0
    %2830 = vmatpush1.bf16.msra.mxu0 %v2392
    %2831 = vmatprep.subr.bf16.mxu0 0
    %2832 = vmatpush1.bf16.msra.mxu0 0
    %2833 = vmatprep.subr.bf16.mxu0 0
    %2834 = vmatpush1.bf16.msra.mxu0 0
    %2835 = vmatprep.subr.bf16.mxu0 0
    %2836 = vmatpush1.bf16.msra.mxu0 0
    %2837 = vmatprep.subr.bf16.mxu0 0
    %2838 = vmatpush1.bf16.msra.mxu0 0
    %2839 = vmatprep.subr.bf16.mxu0 0
    %2840 = vmatpush1.bf16.msra.mxu0 0
    %2841 = vmatprep.subr.bf16.mxu0 0
    %2842 = vmatpush1.bf16.msra.mxu0 0
    %2843 = vmatprep.subr.bf16.mxu0 0
    %2844 = vmatpush1.bf16.msra.mxu0 0
    %2845 = vmatprep.subr.bf16.mxu0 0
    %2846 = vmatpush1.bf16.msra.mxu0 0
    %2847 = vmatprep.subr.bf16.mxu0 0
    %2848 = vmatpush1.bf16.msra.mxu0 0
    %2849 = vmatprep.subr.bf16.mxu0 0
    %2850 = vmatpush1.bf16.msra.mxu0 0
    %2851 = vmatprep.subr.bf16.mxu0 0
    %2852 = vmatpush1.bf16.msra.mxu0 0
    %2853 = vmatprep.subr.bf16.mxu0 0
    %2854 = vmatpush1.bf16.msra.mxu0 0
    %2855 = vmatprep.subr.bf16.mxu0 0
    %2856 = vmatpush1.bf16.msra.mxu0 0
    %2857 = vmatprep.subr.bf16.mxu0 0
    %2858 = vmatpush1.bf16.msra.mxu0 0
    %2859 = vmatprep.mubr.bf16.mxu0 0
    %2860 = vmatmul.mubr.bf16.gmra.mrb[0].mxu0 %v2825
    %v2861 = vpop.f32.mrb[0].mxu0
    %v2862 = vadd.f32 0.0, %v2861
    %v2863 = vpop.f32.mrb[0].mxu0
    %v2864 = vpop.f32.mrb[0].mxu0
    %v2865 = vpop.f32.mrb[0].mxu0
    %2866 = vdwg.mxu0
    %v2867 = vadd.f32 %v1781, %v2862
    %v2868 = vxor.u32 %v2867, 2147483648
    %v2869 = vmul.f32 %v2868, 1.442695
    %v2870 = vpow.pop %v2869
    %v2871 = vadd.f32 %v2870, 1.0
    %v2872 = vrcp.pop %v2871
    %v2873 = vmul.f32 1.0, %v2872
    %v2874 = vtanh.pop %v2867
    %v2875 = vmul.f32 %v2873, %v2813
    %2877 = vrot.lane.b32.xlu0 %v2874, 32
    %v2878 = vpop.permute.xlu0 %2877
    %v2880 = vmul.f32 %v2873, %v2878
    %2882 = vrot.lane.b32.xlu0 %v2880, 32
    %v2883 = vpop.permute.xlu0 %2882
    %v2885 = vadd.f32 %v2875, %v2883
    %v2886 = vtanh.pop %v2885
    %2888 = vrot.lane.b32.xlu0 %v2886, 32
    %v2889 = vpop.permute.xlu0 %2888
    %v2891 = vmul.f32 %v2873, %v2889
    %v2892 = vpack.c.bf16 %v2891, %v2891
    %2894 = vrot.lane.b32.xlu0 %v2892, 64
    %v2895 = vpop.permute.xlu0 %2894
    %v2897 = vsel %vm147, %v2895, 0
    %2899 = vmatprep.subr.bf16.mxu0 0
    %2900 = vmatpush1.bf16.msra.mxu0 %v2391
    %2901 = vmatprep.subr.bf16.mxu0 0
    %2902 = vmatpush1.bf16.msra.mxu0 %v2392
    %2903 = vmatprep.subr.bf16.mxu0 0
    %2904 = vmatpush1.bf16.msra.mxu0 0
    %2905 = vmatprep.subr.bf16.mxu0 0
    %2906 = vmatpush1.bf16.msra.mxu0 0
    %2907 = vmatprep.subr.bf16.mxu0 0
    %2908 = vmatpush1.bf16.msra.mxu0 0
    %2909 = vmatprep.subr.bf16.mxu0 0
    %2910 = vmatpush1.bf16.msra.mxu0 0
    %2911 = vmatprep.subr.bf16.mxu0 0
    %2912 = vmatpush1.bf16.msra.mxu0 0
    %2913 = vmatprep.subr.bf16.mxu0 0
    %2914 = vmatpush1.bf16.msra.mxu0 0
    %2915 = vmatprep.subr.bf16.mxu0 0
    %2916 = vmatpush1.bf16.msra.mxu0 0
    %2917 = vmatprep.subr.bf16.mxu0 0
    %2918 = vmatpush1.bf16.msra.mxu0 0
    %2919 = vmatprep.subr.bf16.mxu0 0
    %2920 = vmatpush1.bf16.msra.mxu0 0
    %2921 = vmatprep.subr.bf16.mxu0 0
    %2922 = vmatpush1.bf16.msra.mxu0 0
    %2923 = vmatprep.subr.bf16.mxu0 0
    %2924 = vmatpush1.bf16.msra.mxu0 0
    %2925 = vmatprep.subr.bf16.mxu0 0
    %2926 = vmatpush1.bf16.msra.mxu0 0
    %2927 = vmatprep.subr.bf16.mxu0 0
    %2928 = vmatpush1.bf16.msra.mxu0 0
    %2929 = vmatprep.subr.bf16.mxu0 0
    %2930 = vmatpush1.bf16.msra.mxu0 0
    %2931 = vmatprep.mubr.bf16.mxu0 0
    %2932 = vmatmul.mubr.bf16.gmra.mrb[0].mxu0 %v2897
    %v2933 = vpop.f32.mrb[0].mxu0
    %v2934 = vadd.f32 0.0, %v2933
    %v2935 = vpop.f32.mrb[0].mxu0
    %v2936 = vpop.f32.mrb[0].mxu0
    %v2937 = vpop.f32.mrb[0].mxu0
    %2938 = vdwg.mxu0
    %v2939 = vadd.f32 %v1779, %v2934
    %v2940 = vxor.u32 %v2939, 2147483648
    %v2941 = vmul.f32 %v2940, 1.442695
    %v2942 = vpow.pop %v2941
    %v2943 = vadd.f32 %v2942, 1.0
    %v2944 = vrcp.pop %v2943
    %v2945 = vmul.f32 1.0, %v2944
    %v2946 = vtanh.pop %v2939
    %v2947 = vmul.f32 %v2945, %v2885
    %2949 = vrot.lane.b32.xlu0 %v2946, 32
    %v2950 = vpop.permute.xlu0 %2949
    %v2952 = vmul.f32 %v2945, %v2950
    %2954 = vrot.lane.b32.xlu0 %v2952, 32
    %v2955 = vpop.permute.xlu0 %2954
    %v2957 = vadd.f32 %v2947, %v2955
    %v2958 = vtanh.pop %v2957
    %2960 = vrot.lane.b32.xlu0 %v2958, 32
    %v2961 = vpop.permute.xlu0 %2960
    %v2963 = vmul.f32 %v2945, %v2961
    %2965 = vrot.lane.b32.xlu0 %v2378, 64
    %v2966 = vpop.permute.xlu0 %2965
    %2969 = vrot.lane.b32.xlu0 %v2963, 96
    %v2970 = vpop.permute.xlu0 %2969
    %v2972 = vsel %vm147, %v2966, %v2970
    %v2973 = vpack.c.bf16 %v2972, %v2972
    %v2974 = vld [vmem:[#allocation7] sm:$0x1]
    %v2975 = vld [vmem:[%s10] sm:$0xf]
    %v2976 = vld [vmem:[%s10 + $0x4] sm:$0xf]
    %v2977 = vld [vmem:[%s10 + $0x8] sm:$0xf]
    %v2978 = vld [vmem:[%s10 + $0xc] sm:$0xf]
    %v2979 = vld [vmem:[%s10 + $0x10] sm:$0xf]
    %v2980 = vld [vmem:[%s10 + $0x14] sm:$0xf]
    %v2981 = vld [vmem:[%s10 + $0x18] sm:$0xf]
    %v2982 = vld [vmem:[%s10 + $0x1c] sm:$0xf]
    %v2991 = vunpack.c.l.b16 %v2975
    %v2992 = vunpack.c.l.b16 %v2976
    %v2993 = vunpack.c.l.b16 %v2977
    %v2994 = vunpack.c.l.b16 %v2978
    %v2995 = vunpack.c.l.b16 %v2979
    %v2996 = vunpack.c.l.b16 %v2980
    %v2997 = vunpack.c.l.b16 %v2981
    %v2998 = vunpack.c.l.b16 %v2982
    %v2999 = vpack.c.b16 %v2992, %v2991
    %v3000 = vpack.c.b16 %v2994, %v2993
    %v3001 = vpack.c.b16 %v2996, %v2995
    %v3002 = vpack.c.b16 %v2998, %v2997
    %v3008 = vsel %vm1681, %v2973, 0
    %3010 = vmatprep.subr.bf16.mxu0 0
    %3011 = vmatpush1.bf16.msra.mxu0 %v2999
    %3012 = vmatprep.subr.bf16.mxu0 0
    %3013 = vmatpush1.bf16.msra.mxu0 %v3000
    %3014 = vmatprep.subr.bf16.mxu0 0
    %3015 = vmatpush1.bf16.msra.mxu0 %v3001
    %3016 = vmatprep.subr.bf16.mxu0 0
    %3017 = vmatpush1.bf16.msra.mxu0 %v3002
    %3018 = vmatprep.subr.bf16.mxu0 0
    %3019 = vmatpush1.bf16.msra.mxu0 0
    %3020 = vmatprep.subr.bf16.mxu0 0
    %3021 = vmatpush1.bf16.msra.mxu0 0
    %3022 = vmatprep.subr.bf16.mxu0 0
    %3023 = vmatpush1.bf16.msra.mxu0 0
    %3024 = vmatprep.subr.bf16.mxu0 0
    %3025 = vmatpush1.bf16.msra.mxu0 0
    %3026 = vmatprep.subr.bf16.mxu0 0
    %3027 = vmatpush1.bf16.msra.mxu0 0
    %3028 = vmatprep.subr.bf16.mxu0 0
    %3029 = vmatpush1.bf16.msra.mxu0 0
    %3030 = vmatprep.subr.bf16.mxu0 0
    %3031 = vmatpush1.bf16.msra.mxu0 0
    %3032 = vmatprep.subr.bf16.mxu0 0
    %3033 = vmatpush1.bf16.msra.mxu0 0
    %3034 = vmatprep.subr.bf16.mxu0 0
    %3035 = vmatpush1.bf16.msra.mxu0 0
    %3036 = vmatprep.subr.bf16.mxu0 0
    %3037 = vmatpush1.bf16.msra.mxu0 0
    %3038 = vmatprep.subr.bf16.mxu0 0
    %3039 = vmatpush1.bf16.msra.mxu0 0
    %3040 = vmatprep.subr.bf16.mxu0 0
    %3041 = vmatpush1.bf16.msra.mxu0 0
    %3042 = vmatprep.mubr.bf16.mxu0 0
    %3043 = vmatmul.mubr.bf16.gmra.mrb[0].mxu0 %v3008
    %v3044 = vpop.f32.mrb[0].mxu0
    %v3045 = vadd.f32 0.0, %v3044
    %v3046 = vpop.f32.mrb[0].mxu0
    %v3047 = vpop.f32.mrb[0].mxu0
    %v3048 = vpop.f32.mrb[0].mxu0
    %3049 = vdwg.mxu0
    %v3051 = vlaneseq
    %v3052 = vshrl.u32 %v3051, 7
    %v3053 = vsub.s32 0, %v3052
    %v3054 = vrot.slane %v2974, %v3053
    %v3056 = vadd.f32 %v3054, %v3045
    %vm3057 = vcmask 64512
    %3058 = vst.msk [vmem:[%s12] sm:$0xff] %vm3057, %v3056
    // Predicated region
    $region62: #{seq_classifier_forward.1} parent=1 // pred_check
      _
    $region63: #{seq_classifier_forward.1} parent=1 // pred_check_branch
      %3060 = sbr.rel (0) target = $region65
    $region64: #{seq_classifier_forward.1} parent=1 // pred_region
      _
    $region65: #{seq_classifier_forward.1} parent=1 // pred_fallthru
      _
    // Predicated region
    $region66: #{seq_classifier_forward.1} parent=1 // pred_check
      _
    $region67: #{seq_classifier_forward.1} parent=1 // pred_check_branch
      %3062 = sbr.rel (0) target = $region69
    $region68: #{seq_classifier_forward.1} parent=1 // pred_region
      _
    $region69: #{seq_classifier_forward.1} parent=1 // pred_fallthru
      _
    %3063 = vsyncpa [#allocation4], 1
    %3064 = vsyncpa [#allocation6], 1

</llo_original>
